<compile_context>
chip_gen: v6e
topology: v6e:2x2x1
jax: 0.10.0
libtpu: 0.0.40
codegen_flags: <defaults>
</compile_context>

<pallas_src>
import math
import functools

import jax
import jax.numpy as jnp
from jax import lax
from jax.experimental import pallas as pl
from jax.experimental.pallas import tpu as pltpu

HEAD_SIZE = 64
LN_EPS = 1e-5

# packed bias / LayerNorm row layout (f32, shape (7, OC))
_R_LN1_G, _R_LN1_B, _R_LN2_G, _R_LN2_B, _R_BO1, _R_BE, _R_BO2 = range(7)


def _silu(x):
    return x * jax.nn.sigmoid(x)


def _layernorm(x, g, b):
    mu = jnp.mean(x, axis=-1, keepdims=True)
    var = jnp.mean(jnp.square(x - mu), axis=-1, keepdims=True)
    return (x - mu) * lax.rsqrt(var + LN_EPS) * g + b


def _mhsa(h2, wqkv_ref, bqkv_ref, wo_ref, bo, qkv_scr, ctx_scr, *, n_heads, nb, seq):
    """Multi-head self-attention on a flattened (NB*S, C) slab.

    h2:       (NB*S, C)     f32 activations
    wqkv_ref: (C, 3*OC)     bf16 (Q columns pre-scaled by 1/sqrt(HEAD_SIZE))
    bqkv_ref: (1, 3*OC)     f32  (Q part pre-scaled)
    wo_ref:   (OC, OC)      bf16
    bo:       (1, OC)       f32
    qkv_scr:  (NB*S, 3*OC)  bf16 VMEM scratch
    ctx_scr:  (NB*S, OC)    bf16 VMEM scratch
    """
    oc = wo_ref.shape[0]
    # fused QKV projection over all NB*S rows (one big MXU op), bias in f32
    qkv = jnp.dot(h2.astype(jnp.bfloat16), wqkv_ref[...],
                  preferred_element_type=jnp.float32) + bqkv_ref[...]
    qkv_scr[...] = qkv.astype(jnp.bfloat16)          # single bf16 cast, lives in VMEM scratch

    # per-(batch, head) attention; small static counts at these shapes.
    # TODO(synk): for large NB*n_heads switch this to lax.fori_loop(unroll=True).
    for b in range(nb):
        r0 = b * seq
        for hd in range(n_heads):
            lo = hd * HEAD_SIZE
            q = qkv_scr[r0:r0 + seq, lo:lo + HEAD_SIZE]                     # (S, 64) bf16, scaled
            k = qkv_scr[r0:r0 + seq, oc + lo:oc + lo + HEAD_SIZE]           # (S, 64) bf16
            v = qkv_scr[r0:r0 + seq, 2 * oc + lo:2 * oc + lo + HEAD_SIZE]   # (S, 64) bf16
            # contract last dims of both operands -> no materialized K transpose
            s = lax.dot_general(q, k, (((1,), (1,)), ((), ())),
                                preferred_element_type=jnp.float32)         # (S, S) f32
            s = s - jnp.max(s, axis=-1, keepdims=True)
            p = jnp.exp(s)
            p = p * pl.reciprocal(jnp.sum(p, axis=-1, keepdims=True), approx=True)
            ctx = jnp.dot(p.astype(jnp.bfloat16), v,
                          preferred_element_type=jnp.float32)               # (S, 64) f32
            ctx_scr[r0:r0 + seq, lo:lo + HEAD_SIZE] = ctx.astype(jnp.bfloat16)

    # one full-depth output projection over all rows (contraction depth = OC, not 64)
    return jnp.dot(ctx_scr[...], wo_ref[...], preferred_element_type=jnp.float32) + bo


def _block_kernel(x_ref, emb_ref,
                  wqkv1_ref, bqkv1_ref, wo1_ref,
                  we_ref,
                  wqkv2_ref, bqkv2_ref, wo2_ref,
                  rows_ref,
                  out_ref,
                  qkv_scr, ctx_scr,
                  *, n_heads, nb, seq):
    c = x_ref.shape[-1]
    oc = wo1_ref.shape[0]
    x = x_ref[...]                                  # (NB, S, C) f32
    x2 = x.reshape(nb * seq, c)                     # flatten batch block for dense MXU rows
    rows = rows_ref[...]                            # (7, OC) f32

    # ---- in_layers: LayerNorm -> SiLU -> trans_nd (MHSA) ----
    h = _silu(_layernorm(x2, rows[_R_LN1_G:_R_LN1_G + 1, :], rows[_R_LN1_B:_R_LN1_B + 1, :]))
    h = _mhsa(h, wqkv1_ref, bqkv1_ref, wo1_ref, rows[_R_BO1:_R_BO1 + 1, :],
              qkv_scr, ctx_scr, n_heads=n_heads, nb=nb, seq=seq)            # (NB*S, OC) f32

    # ---- emb_layers: SiLU -> Linear, broadcast over the sequence dim ----
    e = _silu(emb_ref[...].reshape(nb, -1))                                 # (NB, E) f32
    emb_out = jnp.dot(e.astype(jnp.bfloat16), we_ref[...],
                      preferred_element_type=jnp.float32) + rows[_R_BE:_R_BE + 1, :]  # (NB, OC)
    h = (h.reshape(nb, seq, oc) + emb_out.reshape(nb, 1, oc)).reshape(nb * seq, oc)

    # ---- out_layers: LayerNorm -> SiLU -> Dropout(eval: identity) -> trans_nd ----
    h = _silu(_layernorm(h, rows[_R_LN2_G:_R_LN2_G + 1, :], rows[_R_LN2_B:_R_LN2_B + 1, :]))
    h = _mhsa(h, wqkv2_ref, bqkv2_ref, wo2_ref, rows[_R_BO2:_R_BO2 + 1, :],
              qkv_scr, ctx_scr, n_heads=n_heads, nb=nb, seq=seq)            # (NB*S, OC) f32

    # ---- skip connection (Identity: out_channels == channels) ----
    out_ref[...] = x + h.reshape(nb, seq, oc)


def _pack_params(params):
    """Fuse/relayout the 22 granular parameters into 8 kernel inputs (MXU operands -> bf16)."""
    scale = 1.0 / math.sqrt(HEAD_SIZE)
    # fold the attention scale into the Q projection (exact, done once at trace time in f32)
    wqkv1 = jnp.concatenate([params["wq1"] * scale, params["wk1"], params["wv1"]], axis=1)
    bqkv1 = jnp.concatenate([params["bq1"] * scale, params["bk1"], params["bv1"]], axis=1)
    wqkv2 = jnp.concatenate([params["wq2"] * scale, params["wk2"], params["wv2"]], axis=1)
    bqkv2 = jnp.concatenate([params["bq2"] * scale, params["bk2"], params["bv2"]], axis=1)
    rows = jnp.concatenate([params["ln1_g"], params["ln1_b"],
                            params["ln2_g"], params["ln2_b"],
                            params["bo1"], params["be"], params["bo2"]], axis=0)   # (7, OC)
    bf16, f32 = jnp.bfloat16, jnp.float32
    return [wqkv1.astype(bf16), bqkv1.astype(f32), params["wo1"].astype(bf16),
            params["we"].astype(bf16),
            wqkv2.astype(bf16), bqkv2.astype(f32), params["wo2"].astype(bf16),
            rows.astype(f32)]


def _pick_nb(N, S):
    """Pick a batch-block size NB (divisor of N): enough rows (NB*S) to fill the MXU sublane
    depth, bounded so activation/scratch footprint stays a few MiB."""
    divisors = [d for d in range(1, N + 1) if N % d == 0]
    ok = [d for d in divisors if d * S <= 1024] or divisors[:1]
    for d in ok:
        if d * S >= 256:
            return d
    return ok[-1]


def trans_simple_block(x, emb, params):
    N, S, C = x.shape
    E = emb.shape[1]
    OC = params["wo1"].shape[1]
    assert OC % HEAD_SIZE == 0, "out_channels must be a multiple of the 64-wide head size"
    assert C == OC, "only the Identity skip-connection path is implemented"
    # TODO(synk): use_conv / Linear+LayerNorm skip paths and use_scale_shift_norm=True
    # branch are not implemented (not exercised by the default constructor args).
    n_heads = OC // HEAD_SIZE
    NB = _pick_nb(N, S)

    weight_args = _pack_params(params)
    emb3 = emb.reshape(N, 1, E)                     # per-batch (NB, 1, E) lane-dense blocks

    in_specs = ([pl.BlockSpec((NB, S, C), lambda i: (i, 0, 0)),      # batch-blocked sequence tile
                 pl.BlockSpec((NB, 1, E), lambda i: (i, 0, 0))]      # batch-blocked emb rows
                + [pl.BlockSpec(a.shape, lambda i: (0, 0)) for a in weight_args])

    # ---- VMEM budget: accurate need + headroom, capped per-generation at 80% of capacity ----
    rows_total = NB * S
    act_bytes = 2 * (NB * S * C * 4)                       # x + out blocks (f32)
    emb_bytes = NB * E * 4
    w_bytes = sum(int(a.size) * a.dtype.itemsize for a in weight_args)
    scratch_bytes = rows_total * 3 * OC * 2 + rows_total * OC * 2        # bf16 scratches
    live_bytes = (rows_total * 3 * OC * 4                  # f32 qkv before cast
                  + 3 * rows_total * OC * 4                # h / LN / residual temporaries
                  + 2 * S * S * 4)                         # score + prob tiles
    need = 2 * (act_bytes + emb_bytes) + 2 * w_bytes + scratch_bytes + live_bytes
    try:
        vmem_cap = int(getattr(pltpu.get_tpu_info(), "vmem_capacity_bytes", 64 * 1024 * 1024))
    except Exception:
        vmem_cap = 64 * 1024 * 1024                        # v7x per-TC VMEM (smallest generation)
    vmem_limit = int(min(int(0.8 * vmem_cap), max(16 * 1024 * 1024, int(1.3 * need))))

    return pl.pallas_call(
        functools.partial(_block_kernel, n_heads=n_heads, nb=NB, seq=S),
        out_shape=jax.ShapeDtypeStruct((N, S, C), x.dtype),
        grid_spec=pltpu.PrefetchScalarGridSpec(
            num_scalar_prefetch=0,
            grid=(N // NB,),
            in_specs=in_specs,
            out_specs=pl.BlockSpec((NB, S, C), lambda i: (i, 0, 0)),
            scratch_shapes=[pltpu.VMEM((NB * S, 3 * OC), jnp.bfloat16),   # fused QKV (bf16)
                            pltpu.VMEM((NB * S, OC), jnp.bfloat16)],      # per-head contexts
        ),
        compiler_params=pltpu.CompilerParams(
            dimension_semantics=("parallel",),
            vmem_limit_bytes=vmem_limit,
        ),
    )(x, emb3, *weight_args)


def init_params(key, channels, emb_channels, out_channels):
    # NOTE: PyTorch zero_module() zero-inits the final trans_nd; we use small random
    # values instead so the kernel's second attention path is actually exercised.
    ks = jax.random.split(key, 24)
    w = lambda k, shape, s=0.02: (s * jax.random.normal(k, shape)).astype(jnp.float32)
    p = {}
    p["ln1_g"] = 1.0 + w(ks[0], (1, channels), 0.1)
    p["ln1_b"] = w(ks[1], (1, channels), 0.05)
    p["wq1"], p["bq1"] = w(ks[2], (channels, out_channels)), w(ks[3], (1, out_channels))
    p["wk1"], p["bk1"] = w(ks[4], (channels, out_channels)), w(ks[5], (1, out_channels))
    p["wv1"], p["bv1"] = w(ks[6], (channels, out_channels)), w(ks[7], (1, out_channels))
    p["wo1"], p["bo1"] = w(ks[8], (out_channels, out_channels)), w(ks[9], (1, out_channels))
    p["we"], p["be"] = w(ks[10], (emb_channels, out_channels)), w(ks[11], (1, out_channels))
    p["ln2_g"] = 1.0 + w(ks[12], (1, out_channels), 0.1)
    p["ln2_b"] = w(ks[13], (1, out_channels), 0.05)
    p["wq2"], p["bq2"] = w(ks[14], (out_channels, out_channels)), w(ks[15], (1, out_channels))
    p["wk2"], p["bk2"] = w(ks[16], (out_channels, out_channels)), w(ks[17], (1, out_channels))
    p["wv2"], p["bv2"] = w(ks[18], (out_channels, out_channels)), w(ks[19], (1, out_channels))
    p["wo2"], p["bo2"] = w(ks[20], (out_channels, out_channels)), w(ks[21], (1, out_channels))
    return p


def reference(x, emb, p):
    n_heads = p["wo1"].shape[1] // HEAD_SIZE
    silu = lambda a: a * jax.nn.sigmoid(a)

    def ln(a, g, b):
        mu = jnp.mean(a, -1, keepdims=True)
        var = jnp.mean(jnp.square(a - mu), -1, keepdims=True)
        return (a - mu) / jnp.sqrt(var + LN_EPS) * g + b

    def mhsa(h, wq, bq, wk, bk, wv, bv, wo, bo):
        N, S, _ = h.shape
        q = (h @ wq + bq).reshape(N, S, n_heads, HEAD_SIZE)
        k = (h @ wk + bk).reshape(N, S, n_heads, HEAD_SIZE)
        v = (h @ wv + bv).reshape(N, S, n_heads, HEAD_SIZE)
        s = jnp.einsum("nshd,nthd->nhst", q, k) / math.sqrt(HEAD_SIZE)
        pr = jax.nn.softmax(s, axis=-1)
        ctx = jnp.einsum("nhst,nthd->nshd", pr, v).reshape(N, S, -1)
        return ctx @ wo + bo

    h = mhsa(silu(ln(x, p["ln1_g"], p["ln1_b"])),
             p["wq1"], p["bq1"], p["wk1"], p["bk1"], p["wv1"], p["bv1"], p["wo1"], p["bo1"])
    e = silu(emb) @ p["we"] + p["be"]
    h = h + e[:, None, :]
    h = mhsa(silu(ln(h, p["ln2_g"], p["ln2_b"])),
             p["wq2"], p["bq2"], p["wk2"], p["bk2"], p["wv2"], p["bv2"], p["wo2"], p["bo2"])
    return x + h


if __name__ == "__main__":
    # channels = out_channels = 128 -> 2 heads of size 64; C multiple of 128 keeps the output
    # lane dim dense (unmasked vst), S multiple of 8 keeps the sublane dim dense.
    N, S, C, E = 2, 16, 128, 64
    key = jax.random.PRNGKey(0)
    kx, ke, kp = jax.random.split(key, 3)
    x = jax.random.normal(kx, (N, S, C), dtype=jnp.float32)
    emb = jax.random.normal(ke, (N, E), dtype=jnp.float32)
    params = init_params(kp, C, E, C)

    out = trans_simple_block(x, emb, params)
    out = jax.block_until_ready(out)

    with jax.default_matmul_precision("highest"):      # f32 reference (kernel uses bf16 MXU ops)
        ref = reference(x, emb, params)
    assert out.shape == (N, S, C) and out.dtype == jnp.float32
    err = float(jnp.max(jnp.abs(out - ref)))
    assert jnp.allclose(out, ref, atol=2e-2, rtol=2e-2), f"max abs err = {err}"
    print("KERNEL_OK")
</pallas_src>

<mosaic_0001>
module attributes {stable_mosaic.version = 11 : i64} {
  func.func @_block_kernel(%arg0: i32, %arg1: memref<2x16x128xf32, #tpu.memory_space<vmem>>, %arg2: memref<2x1x64xf32, #tpu.memory_space<vmem>>, %arg3: memref<128x384xbf16, #tpu.memory_space<vmem>>, %arg4: memref<1x384xf32, #tpu.memory_space<vmem>>, %arg5: memref<128x128xbf16, #tpu.memory_space<vmem>>, %arg6: memref<64x128xbf16, #tpu.memory_space<vmem>>, %arg7: memref<128x384xbf16, #tpu.memory_space<vmem>>, %arg8: memref<1x384xf32, #tpu.memory_space<vmem>>, %arg9: memref<128x128xbf16, #tpu.memory_space<vmem>>, %arg10: memref<7x128xf32, #tpu.memory_space<vmem>>, %arg11: memref<2x16x128xf32, #tpu.memory_space<vmem>>, %arg12: memref<32x384xbf16, #tpu.memory_space<vmem>>, %arg13: memref<32x128xbf16, #tpu.memory_space<vmem>>) attributes {dimension_semantics = [#tpu.dimension_semantics<parallel>], iteration_bounds = array<i64: 1>, scalar_prefetch = 0 : i64, scratch_operands = 2 : i64, tpu.core_type = #tpu.core_type<tc>, window_params = [{transform_indices = @transform_0, window_bounds = array<i64: 2, 16, 128>}, {transform_indices = @transform_1, window_bounds = array<i64: 2, 1, 64>}, {pipeline_mode = #tpu.pipeline_mode<synchronous>, transform_indices = @transform_2, window_bounds = array<i64: 128, 384>}, {pipeline_mode = #tpu.pipeline_mode<synchronous>, transform_indices = @transform_3, window_bounds = array<i64: 1, 384>}, {pipeline_mode = #tpu.pipeline_mode<synchronous>, transform_indices = @transform_4, window_bounds = array<i64: 128, 128>}, {pipeline_mode = #tpu.pipeline_mode<synchronous>, transform_indices = @transform_5, window_bounds = array<i64: 64, 128>}, {pipeline_mode = #tpu.pipeline_mode<synchronous>, transform_indices = @transform_6, window_bounds = array<i64: 128, 384>}, {pipeline_mode = #tpu.pipeline_mode<synchronous>, transform_indices = @transform_7, window_bounds = array<i64: 1, 384>}, {pipeline_mode = #tpu.pipeline_mode<synchronous>, transform_indices = @transform_8, window_bounds = array<i64: 128, 128>}, {pipeline_mode = #tpu.pipeline_mode<synchronous>, transform_indices = @transform_9, window_bounds = array<i64: 7, 128>}, {transform_indices = @transform_10, window_bounds = array<i64: 2, 16, 128>}]} {
    %c0 = arith.constant 0 : index
    %c0_0 = arith.constant 0 : index
    %c0_1 = arith.constant 0 : index
    %0 = vector.load %arg1[%c0, %c0_0, %c0_1] : memref<2x16x128xf32, #tpu.memory_space<vmem>>, vector<2x16x128xf32>
    %1 = vector.shape_cast %0 : vector<2x16x128xf32> to vector<32x128xf32>
    %c0_2 = arith.constant 0 : index
    %c0_3 = arith.constant 0 : index
    %2 = vector.load %arg10[%c0_2, %c0_3] : memref<7x128xf32, #tpu.memory_space<vmem>>, vector<7x128xf32>
    %3 = vector.extract_strided_slice %2 {offsets = [0, 0], sizes = [1, 128], strides = [1, 1]} : vector<7x128xf32> to vector<1x128xf32>
    %4 = vector.extract_strided_slice %2 {offsets = [1, 0], sizes = [1, 128], strides = [1, 1]} : vector<7x128xf32> to vector<1x128xf32>
    %cst = arith.constant dense<0.000000e+00> : vector<32xf32>
    %5 = vector.multi_reduction <add>, %1, %cst [1] : vector<32x128xf32> to vector<32xf32>
    %6 = vector.shape_cast %5 : vector<32xf32> to vector<32x1xf32>
    %cst_4 = arith.constant 1.280000e+02 : f32
    %7 = vector.broadcast %cst_4 : f32 to vector<32x1xf32>
    %8 = arith.divf %6, %7 : vector<32x1xf32>
    %9 = vector.broadcast %8 : vector<32x1xf32> to vector<32x128xf32>
    %10 = arith.subf %1, %9 : vector<32x128xf32>
    %11 = arith.mulf %10, %10 : vector<32x128xf32>
    %cst_5 = arith.constant dense<0.000000e+00> : vector<32xf32>
    %12 = vector.multi_reduction <add>, %11, %cst_5 [1] : vector<32x128xf32> to vector<32xf32>
    %13 = vector.shape_cast %12 : vector<32xf32> to vector<32x1xf32>
    %cst_6 = arith.constant 1.280000e+02 : f32
    %14 = vector.broadcast %cst_6 : f32 to vector<32x1xf32>
    %15 = arith.divf %13, %14 : vector<32x1xf32>
    %16 = vector.broadcast %8 : vector<32x1xf32> to vector<32x128xf32>
    %17 = arith.subf %1, %16 : vector<32x128xf32>
    %cst_7 = arith.constant 9.99999974E-6 : f32
    %18 = vector.broadcast %cst_7 : f32 to vector<32x1xf32>
    %19 = arith.addf %15, %18 : vector<32x1xf32>
    %20 = math.rsqrt %19 : vector<32x1xf32>
    %21 = vector.broadcast %20 : vector<32x1xf32> to vector<32x128xf32>
    %22 = arith.mulf %17, %21 : vector<32x128xf32>
    %23 = vector.broadcast %3 : vector<1x128xf32> to vector<32x128xf32>
    %24 = arith.mulf %22, %23 : vector<32x128xf32>
    %25 = vector.broadcast %4 : vector<1x128xf32> to vector<32x128xf32>
    %26 = arith.addf %24, %25 : vector<32x128xf32>
    %27 = arith.negf %26 : vector<32x128xf32>
    %28 = math.exp %27 : vector<32x128xf32>
    %cst_8 = arith.constant 1.000000e+00 : f32
    %29 = vector.broadcast %cst_8 : f32 to vector<32x128xf32>
    %30 = arith.addf %29, %28 : vector<32x128xf32>
    %31 = arith.divf %29, %30 : vector<32x128xf32>
    %32 = arith.mulf %26, %31 : vector<32x128xf32>
    %33 = vector.extract_strided_slice %2 {offsets = [4, 0], sizes = [1, 128], strides = [1, 1]} : vector<7x128xf32> to vector<1x128xf32>
    %34 = arith.truncf %32 : vector<32x128xf32> to vector<32x128xbf16>
    %c0_9 = arith.constant 0 : index
    %c0_10 = arith.constant 0 : index
    %35 = vector.load %arg3[%c0_9, %c0_10] : memref<128x384xbf16, #tpu.memory_space<vmem>>, vector<128x384xbf16>
    %cst_11 = arith.constant dense<0.000000e+00> : vector<32x384xf32>
    %36 = tpu.matmul %34, %35, %cst_11 {dimension_numbers = #tpu.dot_dimension_numbers<[1], [0], [0], [1], [0, 0, 1, 1], [], []>} : vector<32x128xbf16>, vector<128x384xbf16>, vector<32x384xf32> -> vector<32x384xf32>
    %c0_12 = arith.constant 0 : index
    %c0_13 = arith.constant 0 : index
    %37 = vector.load %arg4[%c0_12, %c0_13] : memref<1x384xf32, #tpu.memory_space<vmem>>, vector<1x384xf32>
    %38 = vector.broadcast %37 : vector<1x384xf32> to vector<32x384xf32>
    %39 = arith.addf %36, %38 : vector<32x384xf32>
    %40 = arith.truncf %39 : vector<32x384xf32> to vector<32x384xbf16>
    %c0_14 = arith.constant 0 : index
    %c0_15 = arith.constant 0 : index
    %41 = vector.load %arg12[%c0_14, %c0_15] : memref<32x384xbf16, #tpu.memory_space<vmem>>, vector<32x384xbf16>
    tpu.vector_store %arg12[%c0_14, %c0_15], %40 {strides = array<i32>} : memref<32x384xbf16, #tpu.memory_space<vmem>>, vector<32x384xbf16>,
    %c0_16 = arith.constant 0 : index
    %c0_17 = arith.constant 0 : index
    %42 = vector.load %arg12[%c0_16, %c0_17] : memref<32x384xbf16, #tpu.memory_space<vmem>>, vector<16x64xbf16>
    %c0_18 = arith.constant 0 : index
    %c128 = arith.constant 128 : index
    %43 = vector.load %arg12[%c0_18, %c128] : memref<32x384xbf16, #tpu.memory_space<vmem>>, vector<16x64xbf16>
    %c0_19 = arith.constant 0 : index
    %c256 = arith.constant 256 : index
    %44 = vector.load %arg12[%c0_19, %c256] : memref<32x384xbf16, #tpu.memory_space<vmem>>, vector<16x64xbf16>
    %cst_20 = arith.constant dense<0.000000e+00> : vector<16x16xf32>
    %45 = tpu.matmul %42, %43, %cst_20 {dimension_numbers = #tpu.dot_dimension_numbers<[1], [1], [0], [0], [0, 0, 1, 0], [], []>} : vector<16x64xbf16>, vector<16x64xbf16>, vector<16x16xf32> -> vector<16x16xf32>
    %cst_21 = arith.constant dense<0xFF800000> : vector<16xf32>
    %46 = vector.multi_reduction <maximumf>, %45, %cst_21 [1] : vector<16x16xf32> to vector<16xf32>
    %47 = vector.shape_cast %46 : vector<16xf32> to vector<16x1xf32>
    %48 = vector.broadcast %47 : vector<16x1xf32> to vector<16x16xf32>
    %49 = arith.subf %45, %48 : vector<16x16xf32>
    %50 = math.exp %49 : vector<16x16xf32>
    %cst_22 = arith.constant dense<0.000000e+00> : vector<16xf32>
    %51 = vector.multi_reduction <add>, %50, %cst_22 [1] : vector<16x16xf32> to vector<16xf32>
    %52 = vector.shape_cast %51 : vector<16xf32> to vector<16x1xf32>
    %53 = tpu.reciprocal %52 {approx = true} : vector<16x1xf32> -> vector<16x1xf32>
    %54 = vector.broadcast %53 : vector<16x1xf32> to vector<16x16xf32>
    %55 = arith.mulf %50, %54 : vector<16x16xf32>
    %56 = arith.truncf %55 : vector<16x16xf32> to vector<16x16xbf16>
    %cst_23 = arith.constant dense<0.000000e+00> : vector<16x64xf32>
    %57 = tpu.matmul %56, %44, %cst_23 {dimension_numbers = #tpu.dot_dimension_numbers<[1], [0], [0], [1], [0, 0, 1, 1], [], []>} : vector<16x16xbf16>, vector<16x64xbf16>, vector<16x64xf32> -> vector<16x64xf32>
    %58 = arith.truncf %57 : vector<16x64xf32> to vector<16x64xbf16>
    %c0_24 = arith.constant 0 : index
    %c0_25 = arith.constant 0 : index
    %59 = vector.load %arg13[%c0_24, %c0_25] : memref<32x128xbf16, #tpu.memory_space<vmem>>, vector<16x64xbf16>
    tpu.vector_store %arg13[%c0_24, %c0_25], %58 {strides = array<i32>} : memref<32x128xbf16, #tpu.memory_space<vmem>>, vector<16x64xbf16>,
    %c0_26 = arith.constant 0 : index
    %c64 = arith.constant 64 : index
    %60 = vector.load %arg12[%c0_26, %c64] : memref<32x384xbf16, #tpu.memory_space<vmem>>, vector<16x64xbf16>
    %c0_27 = arith.constant 0 : index
    %c192 = arith.constant 192 : index
    %61 = vector.load %arg12[%c0_27, %c192] : memref<32x384xbf16, #tpu.memory_space<vmem>>, vector<16x64xbf16>
    %c0_28 = arith.constant 0 : index
    %c320 = arith.constant 320 : index
    %62 = vector.load %arg12[%c0_28, %c320] : memref<32x384xbf16, #tpu.memory_space<vmem>>, vector<16x64xbf16>
    %cst_29 = arith.constant dense<0.000000e+00> : vector<16x16xf32>
    %63 = tpu.matmul %60, %61, %cst_29 {dimension_numbers = #tpu.dot_dimension_numbers<[1], [1], [0], [0], [0, 0, 1, 0], [], []>} : vector<16x64xbf16>, vector<16x64xbf16>, vector<16x16xf32> -> vector<16x16xf32>
    %cst_30 = arith.constant dense<0xFF800000> : vector<16xf32>
    %64 = vector.multi_reduction <maximumf>, %63, %cst_30 [1] : vector<16x16xf32> to vector<16xf32>
    %65 = vector.shape_cast %64 : vector<16xf32> to vector<16x1xf32>
    %66 = vector.broadcast %65 : vector<16x1xf32> to vector<16x16xf32>
    %67 = arith.subf %63, %66 : vector<16x16xf32>
    %68 = math.exp %67 : vector<16x16xf32>
    %cst_31 = arith.constant dense<0.000000e+00> : vector<16xf32>
    %69 = vector.multi_reduction <add>, %68, %cst_31 [1] : vector<16x16xf32> to vector<16xf32>
    %70 = vector.shape_cast %69 : vector<16xf32> to vector<16x1xf32>
    %71 = tpu.reciprocal %70 {approx = true} : vector<16x1xf32> -> vector<16x1xf32>
    %72 = vector.broadcast %71 : vector<16x1xf32> to vector<16x16xf32>
    %73 = arith.mulf %68, %72 : vector<16x16xf32>
    %74 = arith.truncf %73 : vector<16x16xf32> to vector<16x16xbf16>
    %cst_32 = arith.constant dense<0.000000e+00> : vector<16x64xf32>
    %75 = tpu.matmul %74, %62, %cst_32 {dimension_numbers = #tpu.dot_dimension_numbers<[1], [0], [0], [1], [0, 0, 1, 1], [], []>} : vector<16x16xbf16>, vector<16x64xbf16>, vector<16x64xf32> -> vector<16x64xf32>
    %76 = arith.truncf %75 : vector<16x64xf32> to vector<16x64xbf16>
    %c0_33 = arith.constant 0 : index
    %c64_34 = arith.constant 64 : index
    %77 = vector.load %arg13[%c0_33, %c64_34] : memref<32x128xbf16, #tpu.memory_space<vmem>>, vector<16x64xbf16>
    tpu.vector_store %arg13[%c0_33, %c64_34], %76 {strides = array<i32>} : memref<32x128xbf16, #tpu.memory_space<vmem>>, vector<16x64xbf16>,
    %c16 = arith.constant 16 : index
    %c0_35 = arith.constant 0 : index
    %78 = vector.load %arg12[%c16, %c0_35] : memref<32x384xbf16, #tpu.memory_space<vmem>>, vector<16x64xbf16>
    %c16_36 = arith.constant 16 : index
    %c128_37 = arith.constant 128 : index
    %79 = vector.load %arg12[%c16_36, %c128_37] : memref<32x384xbf16, #tpu.memory_space<vmem>>, vector<16x64xbf16>
    %c16_38 = arith.constant 16 : index
    %c256_39 = arith.constant 256 : index
    %80 = vector.load %arg12[%c16_38, %c256_39] : memref<32x384xbf16, #tpu.memory_space<vmem>>, vector<16x64xbf16>
    %cst_40 = arith.constant dense<0.000000e+00> : vector<16x16xf32>
    %81 = tpu.matmul %78, %79, %cst_40 {dimension_numbers = #tpu.dot_dimension_numbers<[1], [1], [0], [0], [0, 0, 1, 0], [], []>} : vector<16x64xbf16>, vector<16x64xbf16>, vector<16x16xf32> -> vector<16x16xf32>
    %cst_41 = arith.constant dense<0xFF800000> : vector<16xf32>
    %82 = vector.multi_reduction <maximumf>, %81, %cst_41 [1] : vector<16x16xf32> to vector<16xf32>
    %83 = vector.shape_cast %82 : vector<16xf32> to vector<16x1xf32>
    %84 = vector.broadcast %83 : vector<16x1xf32> to vector<16x16xf32>
    %85 = arith.subf %81, %84 : vector<16x16xf32>
    %86 = math.exp %85 : vector<16x16xf32>
    %cst_42 = arith.constant dense<0.000000e+00> : vector<16xf32>
    %87 = vector.multi_reduction <add>, %86, %cst_42 [1] : vector<16x16xf32> to vector<16xf32>
    %88 = vector.shape_cast %87 : vector<16xf32> to vector<16x1xf32>
    %89 = tpu.reciprocal %88 {approx = true} : vector<16x1xf32> -> vector<16x1xf32>
    %90 = vector.broadcast %89 : vector<16x1xf32> to vector<16x16xf32>
    %91 = arith.mulf %86, %90 : vector<16x16xf32>
    %92 = arith.truncf %91 : vector<16x16xf32> to vector<16x16xbf16>
    %cst_43 = arith.constant dense<0.000000e+00> : vector<16x64xf32>
    %93 = tpu.matmul %92, %80, %cst_43 {dimension_numbers = #tpu.dot_dimension_numbers<[1], [0], [0], [1], [0, 0, 1, 1], [], []>} : vector<16x16xbf16>, vector<16x64xbf16>, vector<16x64xf32> -> vector<16x64xf32>
    %94 = arith.truncf %93 : vector<16x64xf32> to vector<16x64xbf16>
    %c16_44 = arith.constant 16 : index
    %c0_45 = arith.constant 0 : index
    %95 = vector.load %arg13[%c16_44, %c0_45] : memref<32x128xbf16, #tpu.memory_space<vmem>>, vector<16x64xbf16>
    tpu.vector_store %arg13[%c16_44, %c0_45], %94 {strides = array<i32>} : memref<32x128xbf16, #tpu.memory_space<vmem>>, vector<16x64xbf16>,
    %c16_46 = arith.constant 16 : index
    %c64_47 = arith.constant 64 : index
    %96 = vector.load %arg12[%c16_46, %c64_47] : memref<32x384xbf16, #tpu.memory_space<vmem>>, vector<16x64xbf16>
    %c16_48 = arith.constant 16 : index
    %c192_49 = arith.constant 192 : index
    %97 = vector.load %arg12[%c16_48, %c192_49] : memref<32x384xbf16, #tpu.memory_space<vmem>>, vector<16x64xbf16>
    %c16_50 = arith.constant 16 : index
    %c320_51 = arith.constant 320 : index
    %98 = vector.load %arg12[%c16_50, %c320_51] : memref<32x384xbf16, #tpu.memory_space<vmem>>, vector<16x64xbf16>
    %cst_52 = arith.constant dense<0.000000e+00> : vector<16x16xf32>
    %99 = tpu.matmul %96, %97, %cst_52 {dimension_numbers = #tpu.dot_dimension_numbers<[1], [1], [0], [0], [0, 0, 1, 0], [], []>} : vector<16x64xbf16>, vector<16x64xbf16>, vector<16x16xf32> -> vector<16x16xf32>
    %cst_53 = arith.constant dense<0xFF800000> : vector<16xf32>
    %100 = vector.multi_reduction <maximumf>, %99, %cst_53 [1] : vector<16x16xf32> to vector<16xf32>
    %101 = vector.shape_cast %100 : vector<16xf32> to vector<16x1xf32>
    %102 = vector.broadcast %101 : vector<16x1xf32> to vector<16x16xf32>
    %103 = arith.subf %99, %102 : vector<16x16xf32>
    %104 = math.exp %103 : vector<16x16xf32>
    %cst_54 = arith.constant dense<0.000000e+00> : vector<16xf32>
    %105 = vector.multi_reduction <add>, %104, %cst_54 [1] : vector<16x16xf32> to vector<16xf32>
    %106 = vector.shape_cast %105 : vector<16xf32> to vector<16x1xf32>
    %107 = tpu.reciprocal %106 {approx = true} : vector<16x1xf32> -> vector<16x1xf32>
    %108 = vector.broadcast %107 : vector<16x1xf32> to vector<16x16xf32>
    %109 = arith.mulf %104, %108 : vector<16x16xf32>
    %110 = arith.truncf %109 : vector<16x16xf32> to vector<16x16xbf16>
    %cst_55 = arith.constant dense<0.000000e+00> : vector<16x64xf32>
    %111 = tpu.matmul %110, %98, %cst_55 {dimension_numbers = #tpu.dot_dimension_numbers<[1], [0], [0], [1], [0, 0, 1, 1], [], []>} : vector<16x16xbf16>, vector<16x64xbf16>, vector<16x64xf32> -> vector<16x64xf32>
    %112 = arith.truncf %111 : vector<16x64xf32> to vector<16x64xbf16>
    %c16_56 = arith.constant 16 : index
    %c64_57 = arith.constant 64 : index
    %113 = vector.load %arg13[%c16_56, %c64_57] : memref<32x128xbf16, #tpu.memory_space<vmem>>, vector<16x64xbf16>
    tpu.vector_store %arg13[%c16_56, %c64_57], %112 {strides = array<i32>} : memref<32x128xbf16, #tpu.memory_space<vmem>>, vector<16x64xbf16>,
    %c0_58 = arith.constant 0 : index
    %c0_59 = arith.constant 0 : index
    %114 = vector.load %arg13[%c0_58, %c0_59] : memref<32x128xbf16, #tpu.memory_space<vmem>>, vector<32x128xbf16>
    %c0_60 = arith.constant 0 : index
    %c0_61 = arith.constant 0 : index
    %115 = vector.load %arg5[%c0_60, %c0_61] : memref<128x128xbf16, #tpu.memory_space<vmem>>, vector<128x128xbf16>
    %cst_62 = arith.constant dense<0.000000e+00> : vector<32x128xf32>
    %116 = tpu.matmul %114, %115, %cst_62 {dimension_numbers = #tpu.dot_dimension_numbers<[1], [0], [0], [1], [0, 0, 1, 1], [], []>} : vector<32x128xbf16>, vector<128x128xbf16>, vector<32x128xf32> -> vector<32x128xf32>
    %117 = vector.broadcast %33 : vector<1x128xf32> to vector<32x128xf32>
    %118 = arith.addf %116, %117 : vector<32x128xf32>
    %c0_63 = arith.constant 0 : index
    %c0_64 = arith.constant 0 : index
    %c0_65 = arith.constant 0 : index
    %119 = vector.load %arg2[%c0_63, %c0_64, %c0_65] : memref<2x1x64xf32, #tpu.memory_space<vmem>>, vector<2x1x64xf32>
    %120 = vector.shape_cast %119 : vector<2x1x64xf32> to vector<2x64xf32>
    %121 = arith.negf %120 : vector<2x64xf32>
    %122 = math.exp %121 : vector<2x64xf32>
    %cst_66 = arith.constant 1.000000e+00 : f32
    %123 = vector.broadcast %cst_66 : f32 to vector<2x64xf32>
    %124 = arith.addf %123, %122 : vector<2x64xf32>
    %125 = arith.divf %123, %124 : vector<2x64xf32>
    %126 = arith.mulf %120, %125 : vector<2x64xf32>
    %127 = arith.truncf %126 : vector<2x64xf32> to vector<2x64xbf16>
    %c0_67 = arith.constant 0 : index
    %c0_68 = arith.constant 0 : index
    %128 = vector.load %arg6[%c0_67, %c0_68] : memref<64x128xbf16, #tpu.memory_space<vmem>>, vector<64x128xbf16>
    %cst_69 = arith.constant dense<0.000000e+00> : vector<2x128xf32>
    %129 = tpu.matmul %127, %128, %cst_69 {dimension_numbers = #tpu.dot_dimension_numbers<[1], [0], [0], [1], [0, 0, 1, 1], [], []>} : vector<2x64xbf16>, vector<64x128xbf16>, vector<2x128xf32> -> vector<2x128xf32>
    %130 = vector.extract_strided_slice %2 {offsets = [5, 0], sizes = [1, 128], strides = [1, 1]} : vector<7x128xf32> to vector<1x128xf32>
    %131 = vector.broadcast %130 : vector<1x128xf32> to vector<2x128xf32>
    %132 = arith.addf %129, %131 : vector<2x128xf32>
    %133 = vector.shape_cast %118 : vector<32x128xf32> to vector<2x16x128xf32>
    %134 = vector.shape_cast %132 : vector<2x128xf32> to vector<2x1x128xf32>
    %135 = vector.broadcast %134 : vector<2x1x128xf32> to vector<2x16x128xf32>
    %136 = arith.addf %133, %135 : vector<2x16x128xf32>
    %137 = vector.shape_cast %136 : vector<2x16x128xf32> to vector<32x128xf32>
    %138 = vector.extract_strided_slice %2 {offsets = [2, 0], sizes = [1, 128], strides = [1, 1]} : vector<7x128xf32> to vector<1x128xf32>
    %139 = vector.extract_strided_slice %2 {offsets = [3, 0], sizes = [1, 128], strides = [1, 1]} : vector<7x128xf32> to vector<1x128xf32>
    %cst_70 = arith.constant dense<0.000000e+00> : vector<32xf32>
    %140 = vector.multi_reduction <add>, %137, %cst_70 [1] : vector<32x128xf32> to vector<32xf32>
    %141 = vector.shape_cast %140 : vector<32xf32> to vector<32x1xf32>
    %cst_71 = arith.constant 1.280000e+02 : f32
    %142 = vector.broadcast %cst_71 : f32 to vector<32x1xf32>
    %143 = arith.divf %141, %142 : vector<32x1xf32>
    %144 = vector.broadcast %143 : vector<32x1xf32> to vector<32x128xf32>
    %145 = arith.subf %137, %144 : vector<32x128xf32>
    %146 = arith.mulf %145, %145 : vector<32x128xf32>
    %cst_72 = arith.constant dense<0.000000e+00> : vector<32xf32>
    %147 = vector.multi_reduction <add>, %146, %cst_72 [1] : vector<32x128xf32> to vector<32xf32>
    %148 = vector.shape_cast %147 : vector<32xf32> to vector<32x1xf32>
    %cst_73 = arith.constant 1.280000e+02 : f32
    %149 = vector.broadcast %cst_73 : f32 to vector<32x1xf32>
    %150 = arith.divf %148, %149 : vector<32x1xf32>
    %151 = vector.broadcast %143 : vector<32x1xf32> to vector<32x128xf32>
    %152 = arith.subf %137, %151 : vector<32x128xf32>
    %cst_74 = arith.constant 9.99999974E-6 : f32
    %153 = vector.broadcast %cst_74 : f32 to vector<32x1xf32>
    %154 = arith.addf %150, %153 : vector<32x1xf32>
    %155 = math.rsqrt %154 : vector<32x1xf32>
    %156 = vector.broadcast %155 : vector<32x1xf32> to vector<32x128xf32>
    %157 = arith.mulf %152, %156 : vector<32x128xf32>
    %158 = vector.broadcast %138 : vector<1x128xf32> to vector<32x128xf32>
    %159 = arith.mulf %157, %158 : vector<32x128xf32>
    %160 = vector.broadcast %139 : vector<1x128xf32> to vector<32x128xf32>
    %161 = arith.addf %159, %160 : vector<32x128xf32>
    %162 = arith.negf %161 : vector<32x128xf32>
    %163 = math.exp %162 : vector<32x128xf32>
    %cst_75 = arith.constant 1.000000e+00 : f32
    %164 = vector.broadcast %cst_75 : f32 to vector<32x128xf32>
    %165 = arith.addf %164, %163 : vector<32x128xf32>
    %166 = arith.divf %164, %165 : vector<32x128xf32>
    %167 = arith.mulf %161, %166 : vector<32x128xf32>
    %168 = vector.extract_strided_slice %2 {offsets = [6, 0], sizes = [1, 128], strides = [1, 1]} : vector<7x128xf32> to vector<1x128xf32>
    %169 = arith.truncf %167 : vector<32x128xf32> to vector<32x128xbf16>
    %c0_76 = arith.constant 0 : index
    %c0_77 = arith.constant 0 : index
    %170 = vector.load %arg7[%c0_76, %c0_77] : memref<128x384xbf16, #tpu.memory_space<vmem>>, vector<128x384xbf16>
    %cst_78 = arith.constant dense<0.000000e+00> : vector<32x384xf32>
    %171 = tpu.matmul %169, %170, %cst_78 {dimension_numbers = #tpu.dot_dimension_numbers<[1], [0], [0], [1], [0, 0, 1, 1], [], []>} : vector<32x128xbf16>, vector<128x384xbf16>, vector<32x384xf32> -> vector<32x384xf32>
    %c0_79 = arith.constant 0 : index
    %c0_80 = arith.constant 0 : index
    %172 = vector.load %arg8[%c0_79, %c0_80] : memref<1x384xf32, #tpu.memory_space<vmem>>, vector<1x384xf32>
    %173 = vector.broadcast %172 : vector<1x384xf32> to vector<32x384xf32>
    %174 = arith.addf %171, %173 : vector<32x384xf32>
    %175 = arith.truncf %174 : vector<32x384xf32> to vector<32x384xbf16>
    %c0_81 = arith.constant 0 : index
    %c0_82 = arith.constant 0 : index
    %176 = vector.load %arg12[%c0_81, %c0_82] : memref<32x384xbf16, #tpu.memory_space<vmem>>, vector<32x384xbf16>
    tpu.vector_store %arg12[%c0_81, %c0_82], %175 {strides = array<i32>} : memref<32x384xbf16, #tpu.memory_space<vmem>>, vector<32x384xbf16>,
    %c0_83 = arith.constant 0 : index
    %c0_84 = arith.constant 0 : index
    %177 = vector.load %arg12[%c0_83, %c0_84] : memref<32x384xbf16, #tpu.memory_space<vmem>>, vector<16x64xbf16>
    %c0_85 = arith.constant 0 : index
    %c128_86 = arith.constant 128 : index
    %178 = vector.load %arg12[%c0_85, %c128_86] : memref<32x384xbf16, #tpu.memory_space<vmem>>, vector<16x64xbf16>
    %c0_87 = arith.constant 0 : index
    %c256_88 = arith.constant 256 : index
    %179 = vector.load %arg12[%c0_87, %c256_88] : memref<32x384xbf16, #tpu.memory_space<vmem>>, vector<16x64xbf16>
    %cst_89 = arith.constant dense<0.000000e+00> : vector<16x16xf32>
    %180 = tpu.matmul %177, %178, %cst_89 {dimension_numbers = #tpu.dot_dimension_numbers<[1], [1], [0], [0], [0, 0, 1, 0], [], []>} : vector<16x64xbf16>, vector<16x64xbf16>, vector<16x16xf32> -> vector<16x16xf32>
    %cst_90 = arith.constant dense<0xFF800000> : vector<16xf32>
    %181 = vector.multi_reduction <maximumf>, %180, %cst_90 [1] : vector<16x16xf32> to vector<16xf32>
    %182 = vector.shape_cast %181 : vector<16xf32> to vector<16x1xf32>
    %183 = vector.broadcast %182 : vector<16x1xf32> to vector<16x16xf32>
    %184 = arith.subf %180, %183 : vector<16x16xf32>
    %185 = math.exp %184 : vector<16x16xf32>
    %cst_91 = arith.constant dense<0.000000e+00> : vector<16xf32>
    %186 = vector.multi_reduction <add>, %185, %cst_91 [1] : vector<16x16xf32> to vector<16xf32>
    %187 = vector.shape_cast %186 : vector<16xf32> to vector<16x1xf32>
    %188 = tpu.reciprocal %187 {approx = true} : vector<16x1xf32> -> vector<16x1xf32>
    %189 = vector.broadcast %188 : vector<16x1xf32> to vector<16x16xf32>
    %190 = arith.mulf %185, %189 : vector<16x16xf32>
    %191 = arith.truncf %190 : vector<16x16xf32> to vector<16x16xbf16>
    %cst_92 = arith.constant dense<0.000000e+00> : vector<16x64xf32>
    %192 = tpu.matmul %191, %179, %cst_92 {dimension_numbers = #tpu.dot_dimension_numbers<[1], [0], [0], [1], [0, 0, 1, 1], [], []>} : vector<16x16xbf16>, vector<16x64xbf16>, vector<16x64xf32> -> vector<16x64xf32>
    %193 = arith.truncf %192 : vector<16x64xf32> to vector<16x64xbf16>
    %c0_93 = arith.constant 0 : index
    %c0_94 = arith.constant 0 : index
    %194 = vector.load %arg13[%c0_93, %c0_94] : memref<32x128xbf16, #tpu.memory_space<vmem>>, vector<16x64xbf16>
    tpu.vector_store %arg13[%c0_93, %c0_94], %193 {strides = array<i32>} : memref<32x128xbf16, #tpu.memory_space<vmem>>, vector<16x64xbf16>,
    %c0_95 = arith.constant 0 : index
    %c64_96 = arith.constant 64 : index
    %195 = vector.load %arg12[%c0_95, %c64_96] : memref<32x384xbf16, #tpu.memory_space<vmem>>, vector<16x64xbf16>
    %c0_97 = arith.constant 0 : index
    %c192_98 = arith.constant 192 : index
    %196 = vector.load %arg12[%c0_97, %c192_98] : memref<32x384xbf16, #tpu.memory_space<vmem>>, vector<16x64xbf16>
    %c0_99 = arith.constant 0 : index
    %c320_100 = arith.constant 320 : index
    %197 = vector.load %arg12[%c0_99, %c320_100] : memref<32x384xbf16, #tpu.memory_space<vmem>>, vector<16x64xbf16>
    %cst_101 = arith.constant dense<0.000000e+00> : vector<16x16xf32>
    %198 = tpu.matmul %195, %196, %cst_101 {dimension_numbers = #tpu.dot_dimension_numbers<[1], [1], [0], [0], [0, 0, 1, 0], [], []>} : vector<16x64xbf16>, vector<16x64xbf16>, vector<16x16xf32> -> vector<16x16xf32>
    %cst_102 = arith.constant dense<0xFF800000> : vector<16xf32>
    %199 = vector.multi_reduction <maximumf>, %198, %cst_102 [1] : vector<16x16xf32> to vector<16xf32>
    %200 = vector.shape_cast %199 : vector<16xf32> to vector<16x1xf32>
    %201 = vector.broadcast %200 : vector<16x1xf32> to vector<16x16xf32>
    %202 = arith.subf %198, %201 : vector<16x16xf32>
    %203 = math.exp %202 : vector<16x16xf32>
    %cst_103 = arith.constant dense<0.000000e+00> : vector<16xf32>
    %204 = vector.multi_reduction <add>, %203, %cst_103 [1] : vector<16x16xf32> to vector<16xf32>
    %205 = vector.shape_cast %204 : vector<16xf32> to vector<16x1xf32>
    %206 = tpu.reciprocal %205 {approx = true} : vector<16x1xf32> -> vector<16x1xf32>
    %207 = vector.broadcast %206 : vector<16x1xf32> to vector<16x16xf32>
    %208 = arith.mulf %203, %207 : vector<16x16xf32>
    %209 = arith.truncf %208 : vector<16x16xf32> to vector<16x16xbf16>
    %cst_104 = arith.constant dense<0.000000e+00> : vector<16x64xf32>
    %210 = tpu.matmul %209, %197, %cst_104 {dimension_numbers = #tpu.dot_dimension_numbers<[1], [0], [0], [1], [0, 0, 1, 1], [], []>} : vector<16x16xbf16>, vector<16x64xbf16>, vector<16x64xf32> -> vector<16x64xf32>
    %211 = arith.truncf %210 : vector<16x64xf32> to vector<16x64xbf16>
    %c0_105 = arith.constant 0 : index
    %c64_106 = arith.constant 64 : index
    %212 = vector.load %arg13[%c0_105, %c64_106] : memref<32x128xbf16, #tpu.memory_space<vmem>>, vector<16x64xbf16>
    tpu.vector_store %arg13[%c0_105, %c64_106], %211 {strides = array<i32>} : memref<32x128xbf16, #tpu.memory_space<vmem>>, vector<16x64xbf16>,
    %c16_107 = arith.constant 16 : index
    %c0_108 = arith.constant 0 : index
    %213 = vector.load %arg12[%c16_107, %c0_108] : memref<32x384xbf16, #tpu.memory_space<vmem>>, vector<16x64xbf16>
    %c16_109 = arith.constant 16 : index
    %c128_110 = arith.constant 128 : index
    %214 = vector.load %arg12[%c16_109, %c128_110] : memref<32x384xbf16, #tpu.memory_space<vmem>>, vector<16x64xbf16>
    %c16_111 = arith.constant 16 : index
    %c256_112 = arith.constant 256 : index
    %215 = vector.load %arg12[%c16_111, %c256_112] : memref<32x384xbf16, #tpu.memory_space<vmem>>, vector<16x64xbf16>
    %cst_113 = arith.constant dense<0.000000e+00> : vector<16x16xf32>
    %216 = tpu.matmul %213, %214, %cst_113 {dimension_numbers = #tpu.dot_dimension_numbers<[1], [1], [0], [0], [0, 0, 1, 0], [], []>} : vector<16x64xbf16>, vector<16x64xbf16>, vector<16x16xf32> -> vector<16x16xf32>
    %cst_114 = arith.constant dense<0xFF800000> : vector<16xf32>
    %217 = vector.multi_reduction <maximumf>, %216, %cst_114 [1] : vector<16x16xf32> to vector<16xf32>
    %218 = vector.shape_cast %217 : vector<16xf32> to vector<16x1xf32>
    %219 = vector.broadcast %218 : vector<16x1xf32> to vector<16x16xf32>
    %220 = arith.subf %216, %219 : vector<16x16xf32>
    %221 = math.exp %220 : vector<16x16xf32>
    %cst_115 = arith.constant dense<0.000000e+00> : vector<16xf32>
    %222 = vector.multi_reduction <add>, %221, %cst_115 [1] : vector<16x16xf32> to vector<16xf32>
    %223 = vector.shape_cast %222 : vector<16xf32> to vector<16x1xf32>
    %224 = tpu.reciprocal %223 {approx = true} : vector<16x1xf32> -> vector<16x1xf32>
    %225 = vector.broadcast %224 : vector<16x1xf32> to vector<16x16xf32>
    %226 = arith.mulf %221, %225 : vector<16x16xf32>
    %227 = arith.truncf %226 : vector<16x16xf32> to vector<16x16xbf16>
    %cst_116 = arith.constant dense<0.000000e+00> : vector<16x64xf32>
    %228 = tpu.matmul %227, %215, %cst_116 {dimension_numbers = #tpu.dot_dimension_numbers<[1], [0], [0], [1], [0, 0, 1, 1], [], []>} : vector<16x16xbf16>, vector<16x64xbf16>, vector<16x64xf32> -> vector<16x64xf32>
    %229 = arith.truncf %228 : vector<16x64xf32> to vector<16x64xbf16>
    %c16_117 = arith.constant 16 : index
    %c0_118 = arith.constant 0 : index
    %230 = vector.load %arg13[%c16_117, %c0_118] : memref<32x128xbf16, #tpu.memory_space<vmem>>, vector<16x64xbf16>
    tpu.vector_store %arg13[%c16_117, %c0_118], %229 {strides = array<i32>} : memref<32x128xbf16, #tpu.memory_space<vmem>>, vector<16x64xbf16>,
    %c16_119 = arith.constant 16 : index
    %c64_120 = arith.constant 64 : index
    %231 = vector.load %arg12[%c16_119, %c64_120] : memref<32x384xbf16, #tpu.memory_space<vmem>>, vector<16x64xbf16>
    %c16_121 = arith.constant 16 : index
    %c192_122 = arith.constant 192 : index
    %232 = vector.load %arg12[%c16_121, %c192_122] : memref<32x384xbf16, #tpu.memory_space<vmem>>, vector<16x64xbf16>
    %c16_123 = arith.constant 16 : index
    %c320_124 = arith.constant 320 : index
    %233 = vector.load %arg12[%c16_123, %c320_124] : memref<32x384xbf16, #tpu.memory_space<vmem>>, vector<16x64xbf16>
    %cst_125 = arith.constant dense<0.000000e+00> : vector<16x16xf32>
    %234 = tpu.matmul %231, %232, %cst_125 {dimension_numbers = #tpu.dot_dimension_numbers<[1], [1], [0], [0], [0, 0, 1, 0], [], []>} : vector<16x64xbf16>, vector<16x64xbf16>, vector<16x16xf32> -> vector<16x16xf32>
    %cst_126 = arith.constant dense<0xFF800000> : vector<16xf32>
    %235 = vector.multi_reduction <maximumf>, %234, %cst_126 [1] : vector<16x16xf32> to vector<16xf32>
    %236 = vector.shape_cast %235 : vector<16xf32> to vector<16x1xf32>
    %237 = vector.broadcast %236 : vector<16x1xf32> to vector<16x16xf32>
    %238 = arith.subf %234, %237 : vector<16x16xf32>
    %239 = math.exp %238 : vector<16x16xf32>
    %cst_127 = arith.constant dense<0.000000e+00> : vector<16xf32>
    %240 = vector.multi_reduction <add>, %239, %cst_127 [1] : vector<16x16xf32> to vector<16xf32>
    %241 = vector.shape_cast %240 : vector<16xf32> to vector<16x1xf32>
    %242 = tpu.reciprocal %241 {approx = true} : vector<16x1xf32> -> vector<16x1xf32>
    %243 = vector.broadcast %242 : vector<16x1xf32> to vector<16x16xf32>
    %244 = arith.mulf %239, %243 : vector<16x16xf32>
    %245 = arith.truncf %244 : vector<16x16xf32> to vector<16x16xbf16>
    %cst_128 = arith.constant dense<0.000000e+00> : vector<16x64xf32>
    %246 = tpu.matmul %245, %233, %cst_128 {dimension_numbers = #tpu.dot_dimension_numbers<[1], [0], [0], [1], [0, 0, 1, 1], [], []>} : vector<16x16xbf16>, vector<16x64xbf16>, vector<16x64xf32> -> vector<16x64xf32>
    %247 = arith.truncf %246 : vector<16x64xf32> to vector<16x64xbf16>
    %c16_129 = arith.constant 16 : index
    %c64_130 = arith.constant 64 : index
    %248 = vector.load %arg13[%c16_129, %c64_130] : memref<32x128xbf16, #tpu.memory_space<vmem>>, vector<16x64xbf16>
    tpu.vector_store %arg13[%c16_129, %c64_130], %247 {strides = array<i32>} : memref<32x128xbf16, #tpu.memory_space<vmem>>, vector<16x64xbf16>,
    %c0_131 = arith.constant 0 : index
    %c0_132 = arith.constant 0 : index
    %249 = vector.load %arg13[%c0_131, %c0_132] : memref<32x128xbf16, #tpu.memory_space<vmem>>, vector<32x128xbf16>
    %c0_133 = arith.constant 0 : index
    %c0_134 = arith.constant 0 : index
    %250 = vector.load %arg9[%c0_133, %c0_134] : memref<128x128xbf16, #tpu.memory_space<vmem>>, vector<128x128xbf16>
    %cst_135 = arith.constant dense<0.000000e+00> : vector<32x128xf32>
    %251 = tpu.matmul %249, %250, %cst_135 {dimension_numbers = #tpu.dot_dimension_numbers<[1], [0], [0], [1], [0, 0, 1, 1], [], []>} : vector<32x128xbf16>, vector<128x128xbf16>, vector<32x128xf32> -> vector<32x128xf32>
    %252 = vector.broadcast %168 : vector<1x128xf32> to vector<32x128xf32>
    %253 = arith.addf %251, %252 : vector<32x128xf32>
    %254 = vector.shape_cast %253 : vector<32x128xf32> to vector<2x16x128xf32>
    %255 = arith.addf %0, %254 : vector<2x16x128xf32>
    %c0_136 = arith.constant 0 : index
    %c0_137 = arith.constant 0 : index
    %c0_138 = arith.constant 0 : index
    %256 = vector.load %arg11[%c0_136, %c0_137, %c0_138] : memref<2x16x128xf32, #tpu.memory_space<vmem>>, vector<2x16x128xf32>
    tpu.vector_store %arg11[%c0_136, %c0_137, %c0_138], %255 {strides = array<i32>} : memref<2x16x128xf32, #tpu.memory_space<vmem>>, vector<2x16x128xf32>,
    return
  }
  func.func @transform_0(%arg0: i32) -> (i32, i32, i32) {
    %c0_i32 = arith.constant 0 : i32
    %c0_i32_0 = arith.constant 0 : i32
    %c0_i32_1 = arith.constant 0 : i32
    return %arg0, %c0_i32, %c0_i32_0 : i32, i32, i32
  }
  func.func @transform_1(%arg0: i32) -> (i32, i32, i32) {
    %c0_i32 = arith.constant 0 : i32
    %c0_i32_0 = arith.constant 0 : i32
    %c0_i32_1 = arith.constant 0 : i32
    return %arg0, %c0_i32, %c0_i32_0 : i32, i32, i32
  }
  func.func @transform_2(%arg0: i32) -> (i32, i32) {
    %c0_i32 = arith.constant 0 : i32
    %c0_i32_0 = arith.constant 0 : i32
    %c0_i32_1 = arith.constant 0 : i32
    return %c0_i32, %c0_i32_0 : i32, i32
  }
  func.func @transform_3(%arg0: i32) -> (i32, i32) {
    %c0_i32 = arith.constant 0 : i32
    %c0_i32_0 = arith.constant 0 : i32
    %c0_i32_1 = arith.constant 0 : i32
    return %c0_i32, %c0_i32_0 : i32, i32
  }
  func.func @transform_4(%arg0: i32) -> (i32, i32) {
    %c0_i32 = arith.constant 0 : i32
    %c0_i32_0 = arith.constant 0 : i32
    %c0_i32_1 = arith.constant 0 : i32
    return %c0_i32, %c0_i32_0 : i32, i32
  }
  func.func @transform_5(%arg0: i32) -> (i32, i32) {
    %c0_i32 = arith.constant 0 : i32
    %c0_i32_0 = arith.constant 0 : i32
    %c0_i32_1 = arith.constant 0 : i32
    return %c0_i32, %c0_i32_0 : i32, i32
  }
  func.func @transform_6(%arg0: i32) -> (i32, i32) {
    %c0_i32 = arith.constant 0 : i32
    %c0_i32_0 = arith.constant 0 : i32
    %c0_i32_1 = arith.constant 0 : i32
    return %c0_i32, %c0_i32_0 : i32, i32
  }
  func.func @transform_7(%arg0: i32) -> (i32, i32) {
    %c0_i32 = arith.constant 0 : i32
    %c0_i32_0 = arith.constant 0 : i32
    %c0_i32_1 = arith.constant 0 : i32
    return %c0_i32, %c0_i32_0 : i32, i32
  }
  func.func @transform_8(%arg0: i32) -> (i32, i32) {
    %c0_i32 = arith.constant 0 : i32
    %c0_i32_0 = arith.constant 0 : i32
    %c0_i32_1 = arith.constant 0 : i32
    return %c0_i32, %c0_i32_0 : i32, i32
  }
  func.func @transform_9(%arg0: i32) -> (i32, i32) {
    %c0_i32 = arith.constant 0 : i32
    %c0_i32_0 = arith.constant 0 : i32
    %c0_i32_1 = arith.constant 0 : i32
    return %c0_i32, %c0_i32_0 : i32, i32
  }
  func.func @transform_10(%arg0: i32) -> (i32, i32, i32) {
    %c0_i32 = arith.constant 0 : i32
    %c0_i32_0 = arith.constant 0 : i32
    %c0_i32_1 = arith.constant 0 : i32
    return %arg0, %c0_i32, %c0_i32_0 : i32, i32, i32
  }
}

</mosaic_0001>

<llo_original>
// kernel: tpu_custom_call.1
$region0: #{tpu_custom_call.1}
  #allocation0 [shape = 'u32[]', space=smem, size = 0x4, offset = 0x4, fixed_abs, tag = 'smem constant byte address 0x4 - core index']
  #allocation1 [shape = 'u32[144,128]{1,0:T(1,128)}', space=vmem, size = 0x12000, scoped, tag = 'internal scratch']
  #allocation2 [shape = 'bf16[32,384]{1,0:T(8,128)(2,1)}', space=vmem, size = 0x6000, scoped, tag = 'scratch operand']
  #allocation3 [shape = 'bf16[32,128]{1,0:T(8,128)(2,1)}', space=vmem, size = 0x2000, scoped, tag = 'scratch operand']
  %s0 = inlined_call_operand.hbm [shape: f32[2,16,128], index: 0, kind: input, shape index: {}]
  %s1 = inlined_call_operand.hbm [shape: f32[2,1,64], index: 1, kind: input, shape index: {}]
  %s2 = inlined_call_operand.hbm [shape: bf16[128,384], index: 2, kind: input, shape index: {}]
  %s3 = inlined_call_operand.vmem [shape: f32[1,384], index: 3, kind: input, shape index: {}]
  %s4 = inlined_call_operand.hbm [shape: bf16[128,128], index: 4, kind: input, shape index: {}]
  %s5 = inlined_call_operand.hbm [shape: bf16[64,128], index: 5, kind: input, shape index: {}]
  %s6 = inlined_call_operand.hbm [shape: bf16[128,384], index: 6, kind: input, shape index: {}]
  %s7 = inlined_call_operand.vmem [shape: f32[1,384], index: 7, kind: input, shape index: {}]
  %s8 = inlined_call_operand.hbm [shape: bf16[128,128], index: 8, kind: input, shape index: {}]
  %s9 = inlined_call_operand.vmem [shape: f32[7,128], index: 9, kind: input, shape index: {}]
  %s10 = inlined_call_operand.hbm [shape: f32[2,16,128], index: 10, kind: output, shape index: {}]
  %s11 = sld [smem:[#allocation0]]
  $region78: #{tpu_custom_call.1} parent=0
    _
  %s13 = ssub.s32 1, %s11
  %s14 = scalar_select 0, %s13, %s11
  $region1: #{tpu_custom_call.1} parent=0
    #allocation4 [shape = 'u8[16384]{0}', space=vmem, size = 0x4000, scoped, tag = 'input window, operand 0, single buffered']
    #allocation5 [shape = 's32[1]{0}', space=sflag, size = 0x4, scoped, tag = 'scoped memory for tpu_custom_call.1']
    #allocation6 [shape = 's32[1]{0}', space=sflag, size = 0x4, scoped, tag = 'scoped memory for tpu_custom_call.1']
    #allocation7 [shape = 'u8[1024]{0}', space=vmem, size = 0x400, scoped, tag = 'input window, operand 1, single buffered']
    #allocation8 [shape = 's32[1]{0}', space=sflag, size = 0x4, scoped, tag = 'scoped memory for tpu_custom_call.1']
    #allocation9 [shape = 'u8[98304]{0}', space=vmem, size = 0x18000, scoped, tag = 'input window, operand 2, single buffered']
    #allocation10 [shape = 'u8[32768]{0}', space=vmem, size = 0x8000, scoped, tag = 'input window, operand 4, single buffered']
    #allocation11 [shape = 's32[1]{0}', space=sflag, size = 0x4, scoped, tag = 'scoped memory for tpu_custom_call.1']
    #allocation12 [shape = 'u8[16384]{0}', space=vmem, size = 0x4000, scoped, tag = 'input window, operand 5, single buffered']
    #allocation13 [shape = 'u8[98304]{0}', space=vmem, size = 0x18000, scoped, tag = 'input window, operand 6, single buffered']
    #allocation14 [shape = 's32[1]{0}', space=sflag, size = 0x4, scoped, tag = 'scoped memory for tpu_custom_call.1']
    #allocation15 [shape = 'u8[32768]{0}', space=vmem, size = 0x8000, scoped, tag = 'input window, operand 8, single buffered']
    #allocation16 [shape = 'u8[16384]{0}', space=vmem, size = 0x4000, scoped, tag = 'output window, operand 0, single buffered']
    %15 = vsyncpa [#allocation5], 0
    %16 = vsyncpa [#allocation8], 0
    %17 = vsyncpa [#allocation11], 0
    %18 = vsyncpa [#allocation14], 0
    %19 = vsyncpa [#allocation6], 0
    // Predicated region
    $region2: #{tpu_custom_call.1} parent=1 // pred_check
      _
    $region3: #{tpu_custom_call.1} parent=1 // pred_check_branch
      %21 = sbr.rel (0) target = $region5
    $region4: #{tpu_custom_call.1} parent=1 // pred_region
      %s23 = ssub.s32 512, 512
      %24 = vsyncadd [#allocation5], %s23
      %s25 = sshll.u32 [#allocation4], 4
      %s26 = int_to_ptr.vmem [resolvable:$true] %s25
      %31 = dma.hbm_to_vmem [thread:$0]  %s0, 512, %s26, [#allocation5], 128, 128, 8
    $region5: #{tpu_custom_call.1} parent=1 // pred_fallthru
      _
    // Predicated region
    $region6: #{tpu_custom_call.1} parent=1 // pred_check
      _
    $region7: #{tpu_custom_call.1} parent=1 // pred_check_branch
      %33 = sbr.rel (0) target = $region9
    $region8: #{tpu_custom_call.1} parent=1 // pred_region
      %s35 = ssub.s32 32, 32
      %36 = vsyncadd [#allocation8], %s35
      %s37 = sshll.u32 [#allocation7], 4
      %s38 = int_to_ptr.vmem [resolvable:$true] %s37
      %43 = dma.hbm_to_vmem [thread:$0]  %s1, 32, %s38, [#allocation8], 16, 16, 1
    $region9: #{tpu_custom_call.1} parent=1 // pred_fallthru
      _
    // Predicated region
    $region10: #{tpu_custom_call.1} parent=1 // pred_check
      _
    $region11: #{tpu_custom_call.1} parent=1 // pred_check_branch
      %45 = sbr.rel (0) target = $region13
    $region12: #{tpu_custom_call.1} parent=1 // pred_region
      %s47 = ssub.s32 3072, 3072
      %48 = vsyncadd [#allocation8], %s47
      %s49 = sshll.u32 [#allocation9], 4
      %s50 = int_to_ptr.vmem [resolvable:$true] %s49
      %55 = dma.hbm_to_vmem [thread:$0]  %s2, 3072, %s50, [#allocation8], 192, 192, 12
    $region13: #{tpu_custom_call.1} parent=1 // pred_fallthru
      _
    // Predicated region
    $region14: #{tpu_custom_call.1} parent=1 // pred_check
      _
    $region15: #{tpu_custom_call.1} parent=1 // pred_check_branch
      %57 = sbr.rel (0) target = $region17
    $region16: #{tpu_custom_call.1} parent=1 // pred_region
      _
    $region17: #{tpu_custom_call.1} parent=1 // pred_fallthru
      _
    // Predicated region
    $region18: #{tpu_custom_call.1} parent=1 // pred_check
      _
    $region19: #{tpu_custom_call.1} parent=1 // pred_check_branch
      %59 = sbr.rel (0) target = $region21
    $region20: #{tpu_custom_call.1} parent=1 // pred_region
      %s61 = ssub.s32 1024, 1024
      %62 = vsyncadd [#allocation11], %s61
      %s63 = sshll.u32 [#allocation10], 4
      %s64 = int_to_ptr.vmem [resolvable:$true] %s63
      %69 = dma.hbm_to_vmem [thread:$0]  %s4, 1024, %s64, [#allocation11], 64, 64, 4
    $region21: #{tpu_custom_call.1} parent=1 // pred_fallthru
      _
    // Predicated region
    $region22: #{tpu_custom_call.1} parent=1 // pred_check
      _
    $region23: #{tpu_custom_call.1} parent=1 // pred_check_branch
      %71 = sbr.rel (0) target = $region25
    $region24: #{tpu_custom_call.1} parent=1 // pred_region
      %s73 = ssub.s32 512, 512
      %74 = vsyncadd [#allocation11], %s73
      %s75 = sshll.u32 [#allocation12], 4
      %s76 = int_to_ptr.vmem [resolvable:$true] %s75
      %81 = dma.hbm_to_vmem [thread:$0]  %s5, 512, %s76, [#allocation11], 64, 64, 4
    $region25: #{tpu_custom_call.1} parent=1 // pred_fallthru
      _
    // Predicated region
    $region26: #{tpu_custom_call.1} parent=1 // pred_check
      _
    $region27: #{tpu_custom_call.1} parent=1 // pred_check_branch
      %83 = sbr.rel (0) target = $region29
    $region28: #{tpu_custom_call.1} parent=1 // pred_region
      %s85 = ssub.s32 3072, 3072
      %86 = vsyncadd [#allocation14], %s85
      %s87 = sshll.u32 [#allocation13], 4
      %s88 = int_to_ptr.vmem [resolvable:$true] %s87
      %93 = dma.hbm_to_vmem [thread:$0]  %s6, 3072, %s88, [#allocation14], 192, 192, 12
    $region29: #{tpu_custom_call.1} parent=1 // pred_fallthru
      _
    // Predicated region
    $region30: #{tpu_custom_call.1} parent=1 // pred_check
      _
    $region31: #{tpu_custom_call.1} parent=1 // pred_check_branch
      %95 = sbr.rel (0) target = $region33
    $region32: #{tpu_custom_call.1} parent=1 // pred_region
      _
    $region33: #{tpu_custom_call.1} parent=1 // pred_fallthru
      _
    // Predicated region
    $region34: #{tpu_custom_call.1} parent=1 // pred_check
      _
    $region35: #{tpu_custom_call.1} parent=1 // pred_check_branch
      %97 = sbr.rel (0) target = $region37
    $region36: #{tpu_custom_call.1} parent=1 // pred_region
      %s99 = ssub.s32 1024, 1024
      %100 = vsyncadd [#allocation14], %s99
      %s101 = sshll.u32 [#allocation15], 4
      %s102 = int_to_ptr.vmem [resolvable:$true] %s101
      %107 = dma.hbm_to_vmem [thread:$0]  %s8, 1024, %s102, [#allocation14], 64, 64, 4
    $region37: #{tpu_custom_call.1} parent=1 // pred_fallthru
      _
    // Predicated region
    $region38: #{tpu_custom_call.1} parent=1 // pred_check
      _
    $region39: #{tpu_custom_call.1} parent=1 // pred_check_branch
      %109 = sbr.rel (0) target = $region41
    $region40: #{tpu_custom_call.1} parent=1 // pred_region
      _
    $region41: #{tpu_custom_call.1} parent=1 // pred_fallthru
      _
    // Predicated region
    $region42: #{tpu_custom_call.1} parent=1 // pred_check
      _
    $region43: #{tpu_custom_call.1} parent=1 // pred_check_branch
      %111 = sbr.rel (0) target = $region45
    $region44: #{tpu_custom_call.1} parent=1 // pred_region
      %112 = dma.done [#allocation5], 512
    $region45: #{tpu_custom_call.1} parent=1 // pred_fallthru
      _
    // Predicated region
    $region46: #{tpu_custom_call.1} parent=1 // pred_check
      _
    $region47: #{tpu_custom_call.1} parent=1 // pred_check_branch
      %114 = sbr.rel (0) target = $region49
    $region48: #{tpu_custom_call.1} parent=1 // pred_region
      %115 = dma.done [#allocation8], 32
    $region49: #{tpu_custom_call.1} parent=1 // pred_fallthru
      _
    // Predicated region
    $region50: #{tpu_custom_call.1} parent=1 // pred_check
      _
    $region51: #{tpu_custom_call.1} parent=1 // pred_check_branch
      %117 = sbr.rel (0) target = $region53
    $region52: #{tpu_custom_call.1} parent=1 // pred_region
      %118 = dma.done [#allocation8], 3072
    $region53: #{tpu_custom_call.1} parent=1 // pred_fallthru
      _
    // Predicated region
    $region54: #{tpu_custom_call.1} parent=1 // pred_check
      _
    $region55: #{tpu_custom_call.1} parent=1 // pred_check_branch
      %120 = sbr.rel (0) target = $region57
    $region56: #{tpu_custom_call.1} parent=1 // pred_region
      %121 = dma.done [#allocation11], 1024
    $region57: #{tpu_custom_call.1} parent=1 // pred_fallthru
      _
    // Predicated region
    $region58: #{tpu_custom_call.1} parent=1 // pred_check
      _
    $region59: #{tpu_custom_call.1} parent=1 // pred_check_branch
      %123 = sbr.rel (0) target = $region61
    $region60: #{tpu_custom_call.1} parent=1 // pred_region
      %124 = dma.done [#allocation11], 512
    $region61: #{tpu_custom_call.1} parent=1 // pred_fallthru
      _
    // Predicated region
    $region62: #{tpu_custom_call.1} parent=1 // pred_check
      _
    $region63: #{tpu_custom_call.1} parent=1 // pred_check_branch
      %126 = sbr.rel (0) target = $region65
    $region64: #{tpu_custom_call.1} parent=1 // pred_region
      %127 = dma.done [#allocation14], 3072
    $region65: #{tpu_custom_call.1} parent=1 // pred_fallthru
      _
    // Predicated region
    $region66: #{tpu_custom_call.1} parent=1 // pred_check
      _
    $region67: #{tpu_custom_call.1} parent=1 // pred_check_branch
      %129 = sbr.rel (0) target = $region69
    $region68: #{tpu_custom_call.1} parent=1 // pred_region
      %130 = dma.done [#allocation14], 1024
    $region69: #{tpu_custom_call.1} parent=1 // pred_fallthru
      _
    %v132 = vld [vmem:[#allocation4] sm:$0xff]
    %v133 = vld [vmem:[#allocation4 + $0x8] sm:$0xff]
    %v134 = vld [vmem:[#allocation4 + $0x10] sm:$0xff]
    %v135 = vld [vmem:[#allocation4 + $0x18] sm:$0xff]
    %v136 = vld [vmem:[%s9] sm:$0x7f]
    %137 = vadd.xlane.f32.xlu0 %v132
    %v138 = vpop.xlane.xlu0 %137
    %139 = vadd.xlane.f32.xlu0 %v133
    %v140 = vpop.xlane.xlu0 %139
    %141 = vadd.xlane.f32.xlu0 %v134
    %v142 = vpop.xlane.xlu0 %141
    %143 = vadd.xlane.f32.xlu0 %v135
    %v144 = vpop.xlane.xlu0 %143
    %v145 = vrcp.pop 128.0
    %v146 = vmul.f32 %v138, %v145
    %v147 = vmul.f32 %v140, %v145
    %v148 = vmul.f32 %v142, %v145
    %v149 = vmul.f32 %v144, %v145
    %v150 = vsub.f32 %v132, %v146
    %v151 = vsub.f32 %v133, %v147
    %v152 = vsub.f32 %v134, %v148
    %v153 = vsub.f32 %v135, %v149
    %v154 = vmul.f32 %v150, %v150
    %v155 = vmul.f32 %v151, %v151
    %v156 = vmul.f32 %v152, %v152
    %v157 = vmul.f32 %v153, %v153
    %158 = vadd.xlane.f32.xlu0 %v154
    %v159 = vpop.xlane.xlu0 %158
    %160 = vadd.xlane.f32.xlu0 %v155
    %v161 = vpop.xlane.xlu0 %160
    %162 = vadd.xlane.f32.xlu0 %v156
    %v163 = vpop.xlane.xlu0 %162
    %164 = vadd.xlane.f32.xlu0 %v157
    %v165 = vpop.xlane.xlu0 %164
    %v166 = vmul.f32 %v159, %v145
    %v167 = vmul.f32 %v161, %v145
    %v168 = vmul.f32 %v163, %v145
    %v169 = vmul.f32 %v165, %v145
    %v170 = vadd.f32 %v166, 1e-05
    %v171 = vadd.f32 %v167, 1e-05
    %v172 = vadd.f32 %v168, 1e-05
    %v173 = vadd.f32 %v169, 1e-05
    %v174 = vrsqrt.pop %v170
    %v175 = vrsqrt.pop %v171
    %v176 = vrsqrt.pop %v172
    %v177 = vrsqrt.pop %v173
    %v178 = vmul.f32 %v150, %v174
    %v179 = vmul.f32 %v151, %v175
    %v180 = vmul.f32 %v152, %v176
    %v181 = vmul.f32 %v153, %v177
    %v182 = vlaneseq
    %v183 = vshrl.u32 %v182, 7
    %v184 = vsub.s32 0, %v183
    %v185 = vrot.slane %v136, %v184
    %v186 = vmul.f32 %v178, %v185
    %v187 = vmul.f32 %v179, %v185
    %v188 = vmul.f32 %v180, %v185
    %v189 = vmul.f32 %v181, %v185
    %v190 = vlaneseq
    %v191 = vshrl.u32 %v190, 7
    %v192 = vsub.s32 1, %v191
    %v193 = vrot.slane %v136, %v192
    %v194 = vadd.f32 %v186, %v193
    %v195 = vadd.f32 %v187, %v193
    %v196 = vadd.f32 %v188, %v193
    %v197 = vadd.f32 %v189, %v193
    %v198 = vxor.u32 %v194, 2147483648
    %v199 = vxor.u32 %v195, 2147483648
    %v200 = vxor.u32 %v196, 2147483648
    %v201 = vxor.u32 %v197, 2147483648
    %v202 = vmul.f32 %v198, 1.442695
    %v203 = vpow.pop %v202
    %v204 = vmul.f32 %v199, 1.442695
    %v205 = vpow.pop %v204
    %v206 = vmul.f32 %v200, 1.442695
    %v207 = vpow.pop %v206
    %v208 = vmul.f32 %v201, 1.442695
    %v209 = vpow.pop %v208
    %v210 = vadd.f32 %v203, 1.0
    %v211 = vadd.f32 %v205, 1.0
    %v212 = vadd.f32 %v207, 1.0
    %v213 = vadd.f32 %v209, 1.0
    %v214 = vrcp.pop %v210
    %v215 = vmul.f32 1.0, %v214
    %v216 = vrcp.pop %v211
    %v217 = vmul.f32 1.0, %v216
    %v218 = vrcp.pop %v212
    %v219 = vmul.f32 1.0, %v218
    %v220 = vrcp.pop %v213
    %v221 = vmul.f32 1.0, %v220
    %v222 = vmul.f32 %v194, %v215
    %v223 = vmul.f32 %v195, %v217
    %v224 = vmul.f32 %v196, %v219
    %v225 = vmul.f32 %v197, %v221
    %v226 = vpack.c.bf16 %v223, %v222
    %v227 = vpack.c.bf16 %v225, %v224
    %v228 = vld [vmem:[#allocation9] sm:$0xff]
    %v229 = vld [vmem:[#allocation9 + $0x8] sm:$0xf]
    %v230 = vld [vmem:[#allocation9 + $0xc] sm:$0xff]
    %v231 = vld [vmem:[#allocation9 + $0x14] sm:$0xf]
    %v232 = vld [vmem:[#allocation9 + $0x18] sm:$0xff]
    %v233 = vld [vmem:[#allocation9 + $0x20] sm:$0xf]
    %v234 = vld [vmem:[#allocation9 + $0x24] sm:$0xff]
    %v235 = vld [vmem:[#allocation9 + $0x2c] sm:$0xf]
    %v236 = vld [vmem:[#allocation9 + $0x30] sm:$0xff]
    %v237 = vld [vmem:[#allocation9 + $0x38] sm:$0xf]
    %v238 = vld [vmem:[#allocation9 + $0x3c] sm:$0xff]
    %v239 = vld [vmem:[#allocation9 + $0x44] sm:$0xf]
    %v240 = vld [vmem:[#allocation9 + $0x48] sm:$0xff]
    %v241 = vld [vmem:[#allocation9 + $0x50] sm:$0xf]
    %v242 = vld [vmem:[#allocation9 + $0x54] sm:$0xff]
    %v243 = vld [vmem:[#allocation9 + $0x5c] sm:$0xf]
    %v244 = vld [vmem:[#allocation9 + $0x60] sm:$0xff]
    %v245 = vld [vmem:[#allocation9 + $0x68] sm:$0xf]
    %v246 = vld [vmem:[#allocation9 + $0x6c] sm:$0xff]
    %v247 = vld [vmem:[#allocation9 + $0x74] sm:$0xf]
    %v248 = vld [vmem:[#allocation9 + $0x78] sm:$0xff]
    %v249 = vld [vmem:[#allocation9 + $0x80] sm:$0xf]
    %v250 = vld [vmem:[#allocation9 + $0x84] sm:$0xff]
    %v251 = vld [vmem:[#allocation9 + $0x8c] sm:$0xf]
    %v252 = vld [vmem:[#allocation9 + $0x90] sm:$0xff]
    %v253 = vld [vmem:[#allocation9 + $0x98] sm:$0xf]
    %v254 = vld [vmem:[#allocation9 + $0x9c] sm:$0xff]
    %v255 = vld [vmem:[#allocation9 + $0xa4] sm:$0xf]
    %v256 = vld [vmem:[#allocation9 + $0xa8] sm:$0xff]
    %v257 = vld [vmem:[#allocation9 + $0xb0] sm:$0xf]
    %v258 = vld [vmem:[#allocation9 + $0xb4] sm:$0xff]
    %v259 = vld [vmem:[#allocation9 + $0xbc] sm:$0xf]
    %v260 = vld [vmem:[%s3] sm:$0x7]
    %v262 = vlaneseq
    %v263 = vshrl.u32 %v262, 7
    %v264 = vsub.s32 0, %v263
    %v265 = vrot.slane %v260, %v264
    %v266 = vlaneseq
    %v267 = vshrl.u32 %v266, 7
    %v268 = vsub.s32 1, %v267
    %v269 = vrot.slane %v260, %v268
    %v270 = vlaneseq
    %v271 = vshrl.u32 %v270, 7
    %v272 = vsub.s32 2, %v271
    %v273 = vrot.slane %v260, %v272
    %v309 = vunpack.c.l.b16 %v228
    %v310 = vunpack.c.h.b16 %v228
    %v311 = vunpack.c.l.b16 %v229
    %v312 = vunpack.c.l.b16 %v230
    %v313 = vunpack.c.h.b16 %v230
    %v314 = vunpack.c.l.b16 %v231
    %v315 = vunpack.c.l.b16 %v232
    %v316 = vunpack.c.h.b16 %v232
    %v317 = vunpack.c.l.b16 %v233
    %v318 = vunpack.c.l.b16 %v234
    %v319 = vunpack.c.h.b16 %v234
    %v320 = vunpack.c.l.b16 %v235
    %v321 = vunpack.c.l.b16 %v236
    %v322 = vunpack.c.h.b16 %v236
    %v323 = vunpack.c.l.b16 %v237
    %v324 = vunpack.c.l.b16 %v238
    %v325 = vunpack.c.h.b16 %v238
    %v326 = vunpack.c.l.b16 %v239
    %v327 = vunpack.c.l.b16 %v240
    %v328 = vunpack.c.h.b16 %v240
    %v329 = vunpack.c.l.b16 %v241
    %v330 = vunpack.c.l.b16 %v242
    %v331 = vunpack.c.h.b16 %v242
    %v332 = vunpack.c.l.b16 %v243
    %v333 = vunpack.c.l.b16 %v244
    %v334 = vunpack.c.h.b16 %v244
    %v335 = vunpack.c.l.b16 %v245
    %v336 = vunpack.c.l.b16 %v246
    %v337 = vunpack.c.h.b16 %v246
    %v338 = vunpack.c.l.b16 %v247
    %v339 = vunpack.c.l.b16 %v248
    %v340 = vunpack.c.h.b16 %v248
    %v341 = vunpack.c.l.b16 %v249
    %v342 = vunpack.c.l.b16 %v250
    %v343 = vunpack.c.h.b16 %v250
    %v344 = vunpack.c.l.b16 %v251
    %v345 = vunpack.c.l.b16 %v252
    %v346 = vunpack.c.h.b16 %v252
    %v347 = vunpack.c.l.b16 %v253
    %v348 = vunpack.c.l.b16 %v254
    %v349 = vunpack.c.h.b16 %v254
    %v350 = vunpack.c.l.b16 %v255
    %v351 = vunpack.c.l.b16 %v256
    %v352 = vunpack.c.h.b16 %v256
    %v353 = vunpack.c.l.b16 %v257
    %v354 = vunpack.c.l.b16 %v258
    %v355 = vunpack.c.h.b16 %v258
    %v356 = vunpack.c.l.b16 %v259
    %v357 = vpack.c.b16 %v312, %v309
    %v358 = vpack.c.b16 %v313, %v310
    %v359 = vpack.c.b16 %v314, %v311
    %v360 = vpack.c.b16 %v318, %v315
    %v361 = vpack.c.b16 %v319, %v316
    %v362 = vpack.c.b16 %v320, %v317
    %v363 = vpack.c.b16 %v324, %v321
    %v364 = vpack.c.b16 %v325, %v322
    %v365 = vpack.c.b16 %v326, %v323
    %v366 = vpack.c.b16 %v330, %v327
    %v367 = vpack.c.b16 %v331, %v328
    %v368 = vpack.c.b16 %v332, %v329
    %v369 = vpack.c.b16 %v336, %v333
    %v370 = vpack.c.b16 %v337, %v334
    %v371 = vpack.c.b16 %v338, %v335
    %v372 = vpack.c.b16 %v342, %v339
    %v373 = vpack.c.b16 %v343, %v340
    %v374 = vpack.c.b16 %v344, %v341
    %v375 = vpack.c.b16 %v348, %v345
    %v376 = vpack.c.b16 %v349, %v346
    %v377 = vpack.c.b16 %v350, %v347
    %v378 = vpack.c.b16 %v354, %v351
    %v379 = vpack.c.b16 %v355, %v352
    %v380 = vpack.c.b16 %v356, %v353
    %405 = vmatprep.subr.bf16.mxu0 %v379
    %406 = vmatpush1.bf16.msra.mxu0 %v378
    %407 = vmatprep.subr.bf16.mxu0 %v376
    %408 = vmatpush1.bf16.msra.mxu0 %v375
    %409 = vmatprep.subr.bf16.mxu0 %v373
    %410 = vmatpush1.bf16.msra.mxu0 %v372
    %411 = vmatprep.subr.bf16.mxu0 %v370
    %412 = vmatpush1.bf16.msra.mxu0 %v369
    %413 = vmatprep.subr.bf16.mxu0 %v367
    %414 = vmatpush1.bf16.msra.mxu0 %v366
    %415 = vmatprep.subr.bf16.mxu0 %v364
    %416 = vmatpush1.bf16.msra.mxu0 %v363
    %417 = vmatprep.subr.bf16.mxu0 %v361
    %418 = vmatpush1.bf16.msra.mxu0 %v360
    %419 = vmatprep.subr.bf16.mxu0 %v358
    %420 = vmatpush1.bf16.msra.mxu0 %v357
    %421 = vmatprep.subr.bf16.mxu0 0
    %422 = vmatpush2.bf16.msra.mxu0 0
    %423 = vmatprep.subr.bf16.mxu0 0
    %424 = vmatpush2.bf16.msra.mxu0 0
    %425 = vmatprep.subr.bf16.mxu0 0
    %426 = vmatpush2.bf16.msra.mxu0 0
    %427 = vmatprep.subr.bf16.mxu0 0
    %428 = vmatpush2.bf16.msra.mxu0 0
    %429 = vmatprep.subr.bf16.mxu0 0
    %430 = vmatpush2.bf16.msra.mxu0 0
    %431 = vmatprep.subr.bf16.mxu0 0
    %432 = vmatpush2.bf16.msra.mxu0 0
    %433 = vmatprep.subr.bf16.mxu0 0
    %434 = vmatpush2.bf16.msra.mxu0 0
    %435 = vmatprep.subr.bf16.mxu0 0
    %436 = vmatpush2.bf16.msra.mxu0 0
    %437 = vmatprep.mubr.bf16.mxu0 0
    %438 = vmatmul.mubr.bf16.gmra.mxu0 %v226
    %v439 = vpop.f32.mrf.mxu0
    %v440 = vadd.f32 %v265, %v439
    %v441 = vpop.f32.mrf.mxu0
    %v442 = vadd.f32 %v269, %v441
    %v443 = vpop.f32.mrf.mxu0
    %v444 = vadd.f32 %v265, %v443
    %v445 = vpop.f32.mrf.mxu0
    %v446 = vadd.f32 %v269, %v445
    %447 = vmatprep.mubr.bf16.mxu0 0
    %448 = vmatmul.mubr.bf16.gmra.mxu0 %v227
    %v449 = vpop.f32.mrf.mxu0
    %v450 = vadd.f32 %v265, %v449
    %v451 = vpop.f32.mrf.mxu0
    %v452 = vadd.f32 %v269, %v451
    %v453 = vpop.f32.mrf.mxu0
    %v454 = vadd.f32 %v265, %v453
    %v455 = vpop.f32.mrf.mxu0
    %v456 = vadd.f32 %v269, %v455
    %457 = vdwg.mxu0
    %458 = vmatprep.subr.bf16.mxu0 0
    %459 = vmatpush1.bf16.msra.mxu0 %v380
    %460 = vmatprep.subr.bf16.mxu0 0
    %461 = vmatpush1.bf16.msra.mxu0 %v377
    %462 = vmatprep.subr.bf16.mxu0 0
    %463 = vmatpush1.bf16.msra.mxu0 %v374
    %464 = vmatprep.subr.bf16.mxu0 0
    %465 = vmatpush1.bf16.msra.mxu0 %v371
    %466 = vmatprep.subr.bf16.mxu0 0
    %467 = vmatpush1.bf16.msra.mxu0 %v368
    %468 = vmatprep.subr.bf16.mxu0 0
    %469 = vmatpush1.bf16.msra.mxu0 %v365
    %470 = vmatprep.subr.bf16.mxu0 0
    %471 = vmatpush1.bf16.msra.mxu0 %v362
    %472 = vmatprep.subr.bf16.mxu0 0
    %473 = vmatpush1.bf16.msra.mxu0 %v359
    %474 = vmatprep.subr.bf16.mxu0 0
    %475 = vmatpush2.bf16.msra.mxu0 0
    %476 = vmatprep.subr.bf16.mxu0 0
    %477 = vmatpush2.bf16.msra.mxu0 0
    %478 = vmatprep.subr.bf16.mxu0 0
    %479 = vmatpush2.bf16.msra.mxu0 0
    %480 = vmatprep.subr.bf16.mxu0 0
    %481 = vmatpush2.bf16.msra.mxu0 0
    %482 = vmatprep.subr.bf16.mxu0 0
    %483 = vmatpush2.bf16.msra.mxu0 0
    %484 = vmatprep.subr.bf16.mxu0 0
    %485 = vmatpush2.bf16.msra.mxu0 0
    %486 = vmatprep.subr.bf16.mxu0 0
    %487 = vmatpush2.bf16.msra.mxu0 0
    %488 = vmatprep.subr.bf16.mxu0 0
    %489 = vmatpush2.bf16.msra.mxu0 0
    %490 = vmatprep.mubr.bf16.mxu0 0
    %491 = vmatmul.mubr.bf16.gmra.mxu0 %v226
    %v492 = vpop.f32.mrf.mxu0
    %v493 = vadd.f32 %v273, %v492
    %v494 = vpop.f32.mrf.mxu0
    %v495 = vpop.f32.mrf.mxu0
    %v496 = vadd.f32 %v273, %v495
    %v497 = vpop.f32.mrf.mxu0
    %498 = vmatprep.mubr.bf16.mxu0 0
    %499 = vmatmul.mubr.bf16.gmra.mxu0 %v227
    %v500 = vpop.f32.mrf.mxu0
    %v501 = vadd.f32 %v273, %v500
    %v502 = vpop.f32.mrf.mxu0
    %v503 = vpop.f32.mrf.mxu0
    %v504 = vadd.f32 %v273, %v503
    %v505 = vpop.f32.mrf.mxu0
    %506 = vdwg.mxu0
    %v507 = vpack.c.bf16 %v444, %v440
    %v508 = vpack.c.bf16 %v446, %v442
    %v509 = vpack.c.bf16 %v496, %v493
    %v510 = vpack.c.bf16 %v454, %v450
    %v511 = vpack.c.bf16 %v456, %v452
    %v512 = vpack.c.bf16 %v504, %v501
    %v519 = vunpack.c.l.b16 %v507
    %v520 = vunpack.c.l.b16 %v508
    %v521 = vunpack.c.l.b16 %v509
    %v522 = vunpack.c.h.b16 %v507
    %v523 = vunpack.c.h.b16 %v508
    %v524 = vunpack.c.h.b16 %v509
    %v525 = vunpack.c.l.b16 %v510
    %v526 = vunpack.c.l.b16 %v511
    %v527 = vunpack.c.l.b16 %v512
    %v528 = vunpack.c.h.b16 %v510
    %v529 = vunpack.c.h.b16 %v511
    %v530 = vunpack.c.h.b16 %v512
    %v531 = vpack.c.b16 %v520, %v519
    %v532 = vpack.c.b16 %v521, %v521
    %v533 = vpack.c.b16 %v523, %v522
    %v534 = vpack.c.b16 %v524, %v524
    %v535 = vpack.c.b16 %v526, %v525
    %v536 = vpack.c.b16 %v527, %v527
    %v537 = vpack.c.b16 %v529, %v528
    %v538 = vpack.c.b16 %v530, %v530
    %547 = vst [vmem:[#allocation2] sm:$0xff] %v531
    %548 = vst [vmem:[#allocation2 + $0x8] sm:$0xf] %v532
    %549 = vst [vmem:[#allocation2 + $0xc] sm:$0xff] %v533
    %550 = vst [vmem:[#allocation2 + $0x14] sm:$0xf] %v534
    %551 = vst [vmem:[#allocation2 + $0x18] sm:$0xff] %v535
    %552 = vst [vmem:[#allocation2 + $0x20] sm:$0xf] %v536
    %553 = vst [vmem:[#allocation2 + $0x24] sm:$0xff] %v537
    %554 = vst [vmem:[#allocation2 + $0x2c] sm:$0xf] %v538
    %v555 = vld [vmem:[#allocation2] sm:$0xf]
    %v556 = vld [vmem:[#allocation2 + $0xc] sm:$0xf]
    %v557 = vld [vmem:[#allocation2 + $0x4] sm:$0xf]
    %v558 = vld [vmem:[#allocation2 + $0x10] sm:$0xf]
    %v559 = vld [vmem:[#allocation2 + $0x8] sm:$0xf]
    %v560 = vld [vmem:[#allocation2 + $0x14] sm:$0xf]
    %v563 = vunpack.c.l.b16 %v555
    %v564 = vunpack.c.l.b16 %v556
    %v565 = vpack.c.b16 %v564, %v563
    %v568 = vunpack.c.l.b16 %v557
    %v569 = vunpack.c.l.b16 %v558
    %v570 = vpack.c.b16 %v569, %v568
    %vm571 = vcmask 523264
    %v573 = vsel %vm571, %v565, 0
    %v576 = vsel %vm571, %v570, 0
    %578 = vmatprep.subr.bf16.mxu0 0
    %579 = vmatpush1.bf16.xpose.msra.mxu0 0
    %580 = vmatprep.subr.bf16.mxu0 0
    %581 = vmatpush1.bf16.xpose.msra.mxu0 0
    %582 = vmatprep.subr.bf16.mxu0 0
    %583 = vmatpush1.bf16.xpose.msra.mxu0 0
    %584 = vmatprep.subr.bf16.mxu0 0
    %585 = vmatpush1.bf16.xpose.msra.mxu0 0
    %586 = vmatprep.subr.bf16.mxu0 0
    %587 = vmatpush1.bf16.xpose.msra.mxu0 0
    %588 = vmatprep.subr.bf16.mxu0 0
    %589 = vmatpush1.bf16.xpose.msra.mxu0 0
    %590 = vmatprep.subr.bf16.mxu0 0
    %591 = vmatpush1.bf16.xpose.msra.mxu0 0
    %592 = vmatprep.subr.bf16.mxu0 0
    %593 = vmatpush1.bf16.xpose.msra.mxu0 %v576
    %594 = vmatprep.subr.bf16.mxu0 0
    %595 = vmatpush2.bf16.xpose.msra.mxu0 0
    %596 = vmatprep.subr.bf16.mxu0 0
    %597 = vmatpush2.bf16.xpose.msra.mxu0 0
    %598 = vmatprep.subr.bf16.mxu0 0
    %599 = vmatpush2.bf16.xpose.msra.mxu0 0
    %600 = vmatprep.subr.bf16.mxu0 0
    %601 = vmatpush2.bf16.xpose.msra.mxu0 0
    %602 = vmatprep.subr.bf16.mxu0 0
    %603 = vmatpush2.bf16.xpose.msra.mxu0 0
    %604 = vmatprep.subr.bf16.mxu0 0
    %605 = vmatpush2.bf16.xpose.msra.mxu0 0
    %606 = vmatprep.subr.bf16.mxu0 0
    %607 = vmatpush2.bf16.xpose.msra.mxu0 0
    %608 = vmatprep.subr.bf16.mxu0 0
    %609 = vmatpush2.bf16.xpose.msra.mxu0 0
    %610 = vmatprep.mubr.bf16.mxu0 0
    %611 = vmatmul.mubr.bf16.gmra.mxu0 %v573
    %v612 = vpop.f32.mrf.mxu0
    %v613 = vadd.f32 0.0, %v612
    %v614 = vpop.f32.mrf.mxu0
    %v615 = vpop.f32.mrf.mxu0
    %v616 = vadd.f32 0.0, %v615
    %v617 = vpop.f32.mrf.mxu0
    %618 = vdwg.mxu0
    %vm619 = vcmask 130048
    %v620 = vsel %vm619, %v613, -inf
    %621 = vmax.xlane.f32.xlu0 %v620
    %v622 = vpop.xlane.xlu0 %621
    %v623 = vsel %vm619, %v616, -inf
    %624 = vmax.xlane.f32.xlu0 %v623
    %v625 = vpop.xlane.xlu0 %624
    %v626 = vsub.f32 %v613, %v622
    %v627 = vsub.f32 %v616, %v625
    %v628 = vmul.f32 %v626, 1.442695
    %v629 = vpow.pop %v628
    %v630 = vmul.f32 %v627, 1.442695
    %v631 = vpow.pop %v630
    %v632 = vsel %vm619, %v629, 0.0
    %633 = vadd.xlane.f32.xlu0 %v632
    %v634 = vpop.xlane.xlu0 %633
    %v635 = vsel %vm619, %v631, 0.0
    %636 = vadd.xlane.f32.xlu0 %v635
    %v637 = vpop.xlane.xlu0 %636
    %v638 = vrcp.pop %v634
    %v639 = vrcp.pop %v637
    %v640 = vmul.f32 %v629, %v638
    %v641 = vmul.f32 %v631, %v639
    %v642 = vpack.c.bf16 %v641, %v640
    %v645 = vunpack.c.l.b16 %v559
    %v646 = vunpack.c.l.b16 %v560
    %v647 = vpack.c.b16 %v646, %v645
    %v650 = vsel %vm619, %v642, 0
    %652 = vmatprep.subr.bf16.mxu0 0
    %653 = vmatpush1.bf16.msra.mxu0 0
    %654 = vmatprep.subr.bf16.mxu0 0
    %655 = vmatpush1.bf16.msra.mxu0 0
    %656 = vmatprep.subr.bf16.mxu0 0
    %657 = vmatpush1.bf16.msra.mxu0 0
    %658 = vmatprep.subr.bf16.mxu0 0
    %659 = vmatpush1.bf16.msra.mxu0 0
    %660 = vmatprep.subr.bf16.mxu0 0
    %661 = vmatpush1.bf16.msra.mxu0 0
    %662 = vmatprep.subr.bf16.mxu0 0
    %663 = vmatpush1.bf16.msra.mxu0 0
    %664 = vmatprep.subr.bf16.mxu0 0
    %665 = vmatpush1.bf16.msra.mxu0 0
    %666 = vmatprep.subr.bf16.mxu0 0
    %667 = vmatpush1.bf16.msra.mxu0 %v647
    %668 = vmatprep.subr.bf16.mxu0 0
    %669 = vmatpush2.bf16.msra.mxu0 0
    %670 = vmatprep.subr.bf16.mxu0 0
    %671 = vmatpush2.bf16.msra.mxu0 0
    %672 = vmatprep.subr.bf16.mxu0 0
    %673 = vmatpush2.bf16.msra.mxu0 0
    %674 = vmatprep.subr.bf16.mxu0 0
    %675 = vmatpush2.bf16.msra.mxu0 0
    %676 = vmatprep.subr.bf16.mxu0 0
    %677 = vmatpush2.bf16.msra.mxu0 0
    %678 = vmatprep.subr.bf16.mxu0 0
    %679 = vmatpush2.bf16.msra.mxu0 0
    %680 = vmatprep.subr.bf16.mxu0 0
    %681 = vmatpush2.bf16.msra.mxu0 0
    %682 = vmatprep.subr.bf16.mxu0 0
    %683 = vmatpush2.bf16.msra.mxu0 0
    %684 = vmatprep.mubr.bf16.mxu0 0
    %685 = vmatmul.mubr.bf16.gmra.mxu0 %v650
    %v686 = vpop.f32.mrf.mxu0
    %v687 = vadd.f32 0.0, %v686
    %v688 = vpop.f32.mrf.mxu0
    %v689 = vpop.f32.mrf.mxu0
    %v690 = vadd.f32 0.0, %v689
    %v691 = vpop.f32.mrf.mxu0
    %692 = vdwg.mxu0
    %v693 = vpack.c.bf16 %v690, %v687
    %v695 = vunpack.c.l.b16 %v693
    %v696 = vunpack.c.h.b16 %v693
    %v697 = vpack.c.b16 %v695, %v695
    %v698 = vpack.c.b16 %v696, %v696
    %vm701 = vcmask 519168
    %702 = vst.msk [vmem:[#allocation3] sm:$0xf] %vm701, %v697
    %703 = vst.msk [vmem:[#allocation3 + $0x4] sm:$0xf] %vm701, %v698
    %v704 = vld [vmem:[#allocation2] sm:$0xf]
    %v705 = vld [vmem:[#allocation2 + $0xc] sm:$0xf]
    %v706 = vld [vmem:[#allocation2 + $0x4] sm:$0xf]
    %v707 = vld [vmem:[#allocation2 + $0x10] sm:$0xf]
    %v708 = vld [vmem:[#allocation2 + $0x8] sm:$0xf]
    %v709 = vld [vmem:[#allocation2 + $0x14] sm:$0xf]
    %v712 = vunpack.c.l.b16 %v704
    %v713 = vunpack.c.l.b16 %v705
    %v714 = vpack.c.b16 %v713, %v712
    %715 = vrot.lane.b32.xlu0 %v714, 64
    %v716 = vpop.permute.xlu0 %715
    %v719 = vunpack.c.l.b16 %v706
    %v720 = vunpack.c.l.b16 %v707
    %v721 = vpack.c.b16 %v720, %v719
    %722 = vrot.lane.b32.xlu0 %v721, 64
    %v723 = vpop.permute.xlu0 %722
    %v725 = vsel %vm571, %v716, 0
    %v728 = vsel %vm571, %v723, 0
    %730 = vmatprep.subr.bf16.mxu0 0
    %731 = vmatpush1.bf16.xpose.msra.mxu0 0
    %732 = vmatprep.subr.bf16.mxu0 0
    %733 = vmatpush1.bf16.xpose.msra.mxu0 0
    %734 = vmatprep.subr.bf16.mxu0 0
    %735 = vmatpush1.bf16.xpose.msra.mxu0 0
    %736 = vmatprep.subr.bf16.mxu0 0
    %737 = vmatpush1.bf16.xpose.msra.mxu0 0
    %738 = vmatprep.subr.bf16.mxu0 0
    %739 = vmatpush1.bf16.xpose.msra.mxu0 0
    %740 = vmatprep.subr.bf16.mxu0 0
    %741 = vmatpush1.bf16.xpose.msra.mxu0 0
    %742 = vmatprep.subr.bf16.mxu0 0
    %743 = vmatpush1.bf16.xpose.msra.mxu0 0
    %744 = vmatprep.subr.bf16.mxu0 0
    %745 = vmatpush1.bf16.xpose.msra.mxu0 %v728
    %746 = vmatprep.subr.bf16.mxu0 0
    %747 = vmatpush2.bf16.xpose.msra.mxu0 0
    %748 = vmatprep.subr.bf16.mxu0 0
    %749 = vmatpush2.bf16.xpose.msra.mxu0 0
    %750 = vmatprep.subr.bf16.mxu0 0
    %751 = vmatpush2.bf16.xpose.msra.mxu0 0
    %752 = vmatprep.subr.bf16.mxu0 0
    %753 = vmatpush2.bf16.xpose.msra.mxu0 0
    %754 = vmatprep.subr.bf16.mxu0 0
    %755 = vmatpush2.bf16.xpose.msra.mxu0 0
    %756 = vmatprep.subr.bf16.mxu0 0
    %757 = vmatpush2.bf16.xpose.msra.mxu0 0
    %758 = vmatprep.subr.bf16.mxu0 0
    %759 = vmatpush2.bf16.xpose.msra.mxu0 0
    %760 = vmatprep.subr.bf16.mxu0 0
    %761 = vmatpush2.bf16.xpose.msra.mxu0 0
    %762 = vmatprep.mubr.bf16.mxu0 0
    %763 = vmatmul.mubr.bf16.gmra.mxu0 %v725
    %v764 = vpop.f32.mrf.mxu0
    %v765 = vadd.f32 0.0, %v764
    %v766 = vpop.f32.mrf.mxu0
    %v767 = vpop.f32.mrf.mxu0
    %v768 = vadd.f32 0.0, %v767
    %v769 = vpop.f32.mrf.mxu0
    %770 = vdwg.mxu0
    %v771 = vsel %vm619, %v765, -inf
    %772 = vmax.xlane.f32.xlu0 %v771
    %v773 = vpop.xlane.xlu0 %772
    %v774 = vsel %vm619, %v768, -inf
    %775 = vmax.xlane.f32.xlu0 %v774
    %v776 = vpop.xlane.xlu0 %775
    %v777 = vsub.f32 %v765, %v773
    %v778 = vsub.f32 %v768, %v776
    %v779 = vmul.f32 %v777, 1.442695
    %v780 = vpow.pop %v779
    %v781 = vmul.f32 %v778, 1.442695
    %v782 = vpow.pop %v781
    %v783 = vsel %vm619, %v780, 0.0
    %784 = vadd.xlane.f32.xlu0 %v783
    %v785 = vpop.xlane.xlu0 %784
    %v786 = vsel %vm619, %v782, 0.0
    %787 = vadd.xlane.f32.xlu0 %v786
    %v788 = vpop.xlane.xlu0 %787
    %v789 = vrcp.pop %v785
    %v790 = vrcp.pop %v788
    %v791 = vmul.f32 %v780, %v789
    %v792 = vmul.f32 %v782, %v790
    %v793 = vpack.c.bf16 %v792, %v791
    %v796 = vunpack.c.l.b16 %v708
    %v797 = vunpack.c.l.b16 %v709
    %v798 = vpack.c.b16 %v797, %v796
    %799 = vrot.lane.b32.xlu0 %v798, 64
    %v800 = vpop.permute.xlu0 %799
    %v803 = vsel %vm619, %v793, 0
    %805 = vmatprep.subr.bf16.mxu0 0
    %806 = vmatpush1.bf16.msra.mxu0 0
    %807 = vmatprep.subr.bf16.mxu0 0
    %808 = vmatpush1.bf16.msra.mxu0 0
    %809 = vmatprep.subr.bf16.mxu0 0
    %810 = vmatpush1.bf16.msra.mxu0 0
    %811 = vmatprep.subr.bf16.mxu0 0
    %812 = vmatpush1.bf16.msra.mxu0 0
    %813 = vmatprep.subr.bf16.mxu0 0
    %814 = vmatpush1.bf16.msra.mxu0 0
    %815 = vmatprep.subr.bf16.mxu0 0
    %816 = vmatpush1.bf16.msra.mxu0 0
    %817 = vmatprep.subr.bf16.mxu0 0
    %818 = vmatpush1.bf16.msra.mxu0 0
    %819 = vmatprep.subr.bf16.mxu0 0
    %820 = vmatpush1.bf16.msra.mxu0 %v800
    %821 = vmatprep.subr.bf16.mxu0 0
    %822 = vmatpush2.bf16.msra.mxu0 0
    %823 = vmatprep.subr.bf16.mxu0 0
    %824 = vmatpush2.bf16.msra.mxu0 0
    %825 = vmatprep.subr.bf16.mxu0 0
    %826 = vmatpush2.bf16.msra.mxu0 0
    %827 = vmatprep.subr.bf16.mxu0 0
    %828 = vmatpush2.bf16.msra.mxu0 0
    %829 = vmatprep.subr.bf16.mxu0 0
    %830 = vmatpush2.bf16.msra.mxu0 0
    %831 = vmatprep.subr.bf16.mxu0 0
    %832 = vmatpush2.bf16.msra.mxu0 0
    %833 = vmatprep.subr.bf16.mxu0 0
    %834 = vmatpush2.bf16.msra.mxu0 0
    %835 = vmatprep.subr.bf16.mxu0 0
    %836 = vmatpush2.bf16.msra.mxu0 0
    %837 = vmatprep.mubr.bf16.mxu0 0
    %838 = vmatmul.mubr.bf16.gmra.mxu0 %v803
    %v839 = vpop.f32.mrf.mxu0
    %v840 = vadd.f32 0.0, %v839
    %v841 = vpop.f32.mrf.mxu0
    %v842 = vpop.f32.mrf.mxu0
    %v843 = vadd.f32 0.0, %v842
    %v844 = vpop.f32.mrf.mxu0
    %845 = vdwg.mxu0
    %v846 = vpack.c.bf16 %v843, %v840
    %v848 = vunpack.c.l.b16 %v846
    %v849 = vunpack.c.h.b16 %v846
    %v850 = vpack.c.b16 %v848, %v848
    %v851 = vpack.c.b16 %v849, %v849
    %852 = vrot.lane.b32.xlu0 %v850, 64
    %v853 = vpop.permute.xlu0 %852
    %854 = vrot.lane.b32.xlu0 %v851, 64
    %v855 = vpop.permute.xlu0 %854
    %vm858 = vcmask 1043968
    %859 = vst.msk [vmem:[#allocation3] sm:$0xf] %vm858, %v853
    %860 = vst.msk [vmem:[#allocation3 + $0x4] sm:$0xf] %vm858, %v855
    %v861 = vld [vmem:[#allocation2 + $0x18] sm:$0xf]
    %v862 = vld [vmem:[#allocation2 + $0x24] sm:$0xf]
    %v863 = vld [vmem:[#allocation2 + $0x1c] sm:$0xf]
    %v864 = vld [vmem:[#allocation2 + $0x28] sm:$0xf]
    %v865 = vld [vmem:[#allocation2 + $0x20] sm:$0xf]
    %v866 = vld [vmem:[#allocation2 + $0x2c] sm:$0xf]
    %v869 = vunpack.c.l.b16 %v861
    %v870 = vunpack.c.l.b16 %v862
    %v871 = vpack.c.b16 %v870, %v869
    %v874 = vunpack.c.l.b16 %v863
    %v875 = vunpack.c.l.b16 %v864
    %v876 = vpack.c.b16 %v875, %v874
    %v878 = vsel %vm571, %v871, 0
    %v881 = vsel %vm571, %v876, 0
    %883 = vmatprep.subr.bf16.mxu0 0
    %884 = vmatpush1.bf16.xpose.msra.mxu0 0
    %885 = vmatprep.subr.bf16.mxu0 0
    %886 = vmatpush1.bf16.xpose.msra.mxu0 0
    %887 = vmatprep.subr.bf16.mxu0 0
    %888 = vmatpush1.bf16.xpose.msra.mxu0 0
    %889 = vmatprep.subr.bf16.mxu0 0
    %890 = vmatpush1.bf16.xpose.msra.mxu0 0
    %891 = vmatprep.subr.bf16.mxu0 0
    %892 = vmatpush1.bf16.xpose.msra.mxu0 0
    %893 = vmatprep.subr.bf16.mxu0 0
    %894 = vmatpush1.bf16.xpose.msra.mxu0 0
    %895 = vmatprep.subr.bf16.mxu0 0
    %896 = vmatpush1.bf16.xpose.msra.mxu0 0
    %897 = vmatprep.subr.bf16.mxu0 0
    %898 = vmatpush1.bf16.xpose.msra.mxu0 %v881
    %899 = vmatprep.subr.bf16.mxu0 0
    %900 = vmatpush2.bf16.xpose.msra.mxu0 0
    %901 = vmatprep.subr.bf16.mxu0 0
    %902 = vmatpush2.bf16.xpose.msra.mxu0 0
    %903 = vmatprep.subr.bf16.mxu0 0
    %904 = vmatpush2.bf16.xpose.msra.mxu0 0
    %905 = vmatprep.subr.bf16.mxu0 0
    %906 = vmatpush2.bf16.xpose.msra.mxu0 0
    %907 = vmatprep.subr.bf16.mxu0 0
    %908 = vmatpush2.bf16.xpose.msra.mxu0 0
    %909 = vmatprep.subr.bf16.mxu0 0
    %910 = vmatpush2.bf16.xpose.msra.mxu0 0
    %911 = vmatprep.subr.bf16.mxu0 0
    %912 = vmatpush2.bf16.xpose.msra.mxu0 0
    %913 = vmatprep.subr.bf16.mxu0 0
    %914 = vmatpush2.bf16.xpose.msra.mxu0 0
    %915 = vmatprep.mubr.bf16.mxu0 0
    %916 = vmatmul.mubr.bf16.gmra.mxu0 %v878
    %v917 = vpop.f32.mrf.mxu0
    %v918 = vadd.f32 0.0, %v917
    %v919 = vpop.f32.mrf.mxu0
    %v920 = vpop.f32.mrf.mxu0
    %v921 = vadd.f32 0.0, %v920
    %v922 = vpop.f32.mrf.mxu0
    %923 = vdwg.mxu0
    %v924 = vsel %vm619, %v918, -inf
    %925 = vmax.xlane.f32.xlu0 %v924
    %v926 = vpop.xlane.xlu0 %925
    %v927 = vsel %vm619, %v921, -inf
    %928 = vmax.xlane.f32.xlu0 %v927
    %v929 = vpop.xlane.xlu0 %928
    %v930 = vsub.f32 %v918, %v926
    %v931 = vsub.f32 %v921, %v929
    %v932 = vmul.f32 %v930, 1.442695
    %v933 = vpow.pop %v932
    %v934 = vmul.f32 %v931, 1.442695
    %v935 = vpow.pop %v934
    %v936 = vsel %vm619, %v933, 0.0
    %937 = vadd.xlane.f32.xlu0 %v936
    %v938 = vpop.xlane.xlu0 %937
    %v939 = vsel %vm619, %v935, 0.0
    %940 = vadd.xlane.f32.xlu0 %v939
    %v941 = vpop.xlane.xlu0 %940
    %v942 = vrcp.pop %v938
    %v943 = vrcp.pop %v941
    %v944 = vmul.f32 %v933, %v942
    %v945 = vmul.f32 %v935, %v943
    %v946 = vpack.c.bf16 %v945, %v944
    %v949 = vunpack.c.l.b16 %v865
    %v950 = vunpack.c.l.b16 %v866
    %v951 = vpack.c.b16 %v950, %v949
    %v954 = vsel %vm619, %v946, 0
    %956 = vmatprep.subr.bf16.mxu0 0
    %957 = vmatpush1.bf16.msra.mxu0 0
    %958 = vmatprep.subr.bf16.mxu0 0
    %959 = vmatpush1.bf16.msra.mxu0 0
    %960 = vmatprep.subr.bf16.mxu0 0
    %961 = vmatpush1.bf16.msra.mxu0 0
    %962 = vmatprep.subr.bf16.mxu0 0
    %963 = vmatpush1.bf16.msra.mxu0 0
    %964 = vmatprep.subr.bf16.mxu0 0
    %965 = vmatpush1.bf16.msra.mxu0 0
    %966 = vmatprep.subr.bf16.mxu0 0
    %967 = vmatpush1.bf16.msra.mxu0 0
    %968 = vmatprep.subr.bf16.mxu0 0
    %969 = vmatpush1.bf16.msra.mxu0 0
    %970 = vmatprep.subr.bf16.mxu0 0
    %971 = vmatpush1.bf16.msra.mxu0 %v951
    %972 = vmatprep.subr.bf16.mxu0 0
    %973 = vmatpush2.bf16.msra.mxu0 0
    %974 = vmatprep.subr.bf16.mxu0 0
    %975 = vmatpush2.bf16.msra.mxu0 0
    %976 = vmatprep.subr.bf16.mxu0 0
    %977 = vmatpush2.bf16.msra.mxu0 0
    %978 = vmatprep.subr.bf16.mxu0 0
    %979 = vmatpush2.bf16.msra.mxu0 0
    %980 = vmatprep.subr.bf16.mxu0 0
    %981 = vmatpush2.bf16.msra.mxu0 0
    %982 = vmatprep.subr.bf16.mxu0 0
    %983 = vmatpush2.bf16.msra.mxu0 0
    %984 = vmatprep.subr.bf16.mxu0 0
    %985 = vmatpush2.bf16.msra.mxu0 0
    %986 = vmatprep.subr.bf16.mxu0 0
    %987 = vmatpush2.bf16.msra.mxu0 0
    %988 = vmatprep.mubr.bf16.mxu0 0
    %989 = vmatmul.mubr.bf16.gmra.mxu0 %v954
    %v990 = vpop.f32.mrf.mxu0
    %v991 = vadd.f32 0.0, %v990
    %v992 = vpop.f32.mrf.mxu0
    %v993 = vpop.f32.mrf.mxu0
    %v994 = vadd.f32 0.0, %v993
    %v995 = vpop.f32.mrf.mxu0
    %996 = vdwg.mxu0
    %v997 = vpack.c.bf16 %v994, %v991
    %v999 = vunpack.c.l.b16 %v997
    %v1000 = vunpack.c.h.b16 %v997
    %v1001 = vpack.c.b16 %v999, %v999
    %v1002 = vpack.c.b16 %v1000, %v1000
    %1005 = vst.msk [vmem:[#allocation3 + $0x8] sm:$0xf] %vm701, %v1001
    %1006 = vst.msk [vmem:[#allocation3 + $0xc] sm:$0xf] %vm701, %v1002
    %v1007 = vld [vmem:[#allocation2 + $0x18] sm:$0xf]
    %v1008 = vld [vmem:[#allocation2 + $0x24] sm:$0xf]
    %v1009 = vld [vmem:[#allocation2 + $0x1c] sm:$0xf]
    %v1010 = vld [vmem:[#allocation2 + $0x28] sm:$0xf]
    %v1011 = vld [vmem:[#allocation2 + $0x20] sm:$0xf]
    %v1012 = vld [vmem:[#allocation2 + $0x2c] sm:$0xf]
    %v1015 = vunpack.c.l.b16 %v1007
    %v1016 = vunpack.c.l.b16 %v1008
    %v1017 = vpack.c.b16 %v1016, %v1015
    %1018 = vrot.lane.b32.xlu0 %v1017, 64
    %v1019 = vpop.permute.xlu0 %1018
    %v1022 = vunpack.c.l.b16 %v1009
    %v1023 = vunpack.c.l.b16 %v1010
    %v1024 = vpack.c.b16 %v1023, %v1022
    %1025 = vrot.lane.b32.xlu0 %v1024, 64
    %v1026 = vpop.permute.xlu0 %1025
    %v1028 = vsel %vm571, %v1019, 0
    %v1031 = vsel %vm571, %v1026, 0
    %1033 = vmatprep.subr.bf16.mxu0 0
    %1034 = vmatpush1.bf16.xpose.msra.mxu0 0
    %1035 = vmatprep.subr.bf16.mxu0 0
    %1036 = vmatpush1.bf16.xpose.msra.mxu0 0
    %1037 = vmatprep.subr.bf16.mxu0 0
    %1038 = vmatpush1.bf16.xpose.msra.mxu0 0
    %1039 = vmatprep.subr.bf16.mxu0 0
    %1040 = vmatpush1.bf16.xpose.msra.mxu0 0
    %1041 = vmatprep.subr.bf16.mxu0 0
    %1042 = vmatpush1.bf16.xpose.msra.mxu0 0
    %1043 = vmatprep.subr.bf16.mxu0 0
    %1044 = vmatpush1.bf16.xpose.msra.mxu0 0
    %1045 = vmatprep.subr.bf16.mxu0 0
    %1046 = vmatpush1.bf16.xpose.msra.mxu0 0
    %1047 = vmatprep.subr.bf16.mxu0 0
    %1048 = vmatpush1.bf16.xpose.msra.mxu0 %v1031
    %1049 = vmatprep.subr.bf16.mxu0 0
    %1050 = vmatpush2.bf16.xpose.msra.mxu0 0
    %1051 = vmatprep.subr.bf16.mxu0 0
    %1052 = vmatpush2.bf16.xpose.msra.mxu0 0
    %1053 = vmatprep.subr.bf16.mxu0 0
    %1054 = vmatpush2.bf16.xpose.msra.mxu0 0
    %1055 = vmatprep.subr.bf16.mxu0 0
    %1056 = vmatpush2.bf16.xpose.msra.mxu0 0
    %1057 = vmatprep.subr.bf16.mxu0 0
    %1058 = vmatpush2.bf16.xpose.msra.mxu0 0
    %1059 = vmatprep.subr.bf16.mxu0 0
    %1060 = vmatpush2.bf16.xpose.msra.mxu0 0
    %1061 = vmatprep.subr.bf16.mxu0 0
    %1062 = vmatpush2.bf16.xpose.msra.mxu0 0
    %1063 = vmatprep.subr.bf16.mxu0 0
    %1064 = vmatpush2.bf16.xpose.msra.mxu0 0
    %1065 = vmatprep.mubr.bf16.mxu0 0
    %1066 = vmatmul.mubr.bf16.gmra.mxu0 %v1028
    %v1067 = vpop.f32.mrf.mxu0
    %v1068 = vadd.f32 0.0, %v1067
    %v1069 = vpop.f32.mrf.mxu0
    %v1070 = vpop.f32.mrf.mxu0
    %v1071 = vadd.f32 0.0, %v1070
    %v1072 = vpop.f32.mrf.mxu0
    %1073 = vdwg.mxu0
    %v1074 = vsel %vm619, %v1068, -inf
    %1075 = vmax.xlane.f32.xlu0 %v1074
    %v1076 = vpop.xlane.xlu0 %1075
    %v1077 = vsel %vm619, %v1071, -inf
    %1078 = vmax.xlane.f32.xlu0 %v1077
    %v1079 = vpop.xlane.xlu0 %1078
    %v1080 = vsub.f32 %v1068, %v1076
    %v1081 = vsub.f32 %v1071, %v1079
    %v1082 = vmul.f32 %v1080, 1.442695
    %v1083 = vpow.pop %v1082
    %v1084 = vmul.f32 %v1081, 1.442695
    %v1085 = vpow.pop %v1084
    %v1086 = vsel %vm619, %v1083, 0.0
    %1087 = vadd.xlane.f32.xlu0 %v1086
    %v1088 = vpop.xlane.xlu0 %1087
    %v1089 = vsel %vm619, %v1085, 0.0
    %1090 = vadd.xlane.f32.xlu0 %v1089
    %v1091 = vpop.xlane.xlu0 %1090
    %v1092 = vrcp.pop %v1088
    %v1093 = vrcp.pop %v1091
    %v1094 = vmul.f32 %v1083, %v1092
    %v1095 = vmul.f32 %v1085, %v1093
    %v1096 = vpack.c.bf16 %v1095, %v1094
    %v1099 = vunpack.c.l.b16 %v1011
    %v1100 = vunpack.c.l.b16 %v1012
    %v1101 = vpack.c.b16 %v1100, %v1099
    %1102 = vrot.lane.b32.xlu0 %v1101, 64
    %v1103 = vpop.permute.xlu0 %1102
    %v1106 = vsel %vm619, %v1096, 0
    %1108 = vmatprep.subr.bf16.mxu0 0
    %1109 = vmatpush1.bf16.msra.mxu0 0
    %1110 = vmatprep.subr.bf16.mxu0 0
    %1111 = vmatpush1.bf16.msra.mxu0 0
    %1112 = vmatprep.subr.bf16.mxu0 0
    %1113 = vmatpush1.bf16.msra.mxu0 0
    %1114 = vmatprep.subr.bf16.mxu0 0
    %1115 = vmatpush1.bf16.msra.mxu0 0
    %1116 = vmatprep.subr.bf16.mxu0 0
    %1117 = vmatpush1.bf16.msra.mxu0 0
    %1118 = vmatprep.subr.bf16.mxu0 0
    %1119 = vmatpush1.bf16.msra.mxu0 0
    %1120 = vmatprep.subr.bf16.mxu0 0
    %1121 = vmatpush1.bf16.msra.mxu0 0
    %1122 = vmatprep.subr.bf16.mxu0 0
    %1123 = vmatpush1.bf16.msra.mxu0 %v1103
    %1124 = vmatprep.subr.bf16.mxu0 0
    %1125 = vmatpush2.bf16.msra.mxu0 0
    %1126 = vmatprep.subr.bf16.mxu0 0
    %1127 = vmatpush2.bf16.msra.mxu0 0
    %1128 = vmatprep.subr.bf16.mxu0 0
    %1129 = vmatpush2.bf16.msra.mxu0 0
    %1130 = vmatprep.subr.bf16.mxu0 0
    %1131 = vmatpush2.bf16.msra.mxu0 0
    %1132 = vmatprep.subr.bf16.mxu0 0
    %1133 = vmatpush2.bf16.msra.mxu0 0
    %1134 = vmatprep.subr.bf16.mxu0 0
    %1135 = vmatpush2.bf16.msra.mxu0 0
    %1136 = vmatprep.subr.bf16.mxu0 0
    %1137 = vmatpush2.bf16.msra.mxu0 0
    %1138 = vmatprep.subr.bf16.mxu0 0
    %1139 = vmatpush2.bf16.msra.mxu0 0
    %1140 = vmatprep.mubr.bf16.mxu0 0
    %1141 = vmatmul.mubr.bf16.gmra.mxu0 %v1106
    %v1142 = vpop.f32.mrf.mxu0
    %v1143 = vadd.f32 0.0, %v1142
    %v1144 = vpop.f32.mrf.mxu0
    %v1145 = vpop.f32.mrf.mxu0
    %v1146 = vadd.f32 0.0, %v1145
    %v1147 = vpop.f32.mrf.mxu0
    %1148 = vdwg.mxu0
    %v1149 = vpack.c.bf16 %v1146, %v1143
    %v1151 = vunpack.c.l.b16 %v1149
    %v1152 = vunpack.c.h.b16 %v1149
    %v1153 = vpack.c.b16 %v1151, %v1151
    %v1154 = vpack.c.b16 %v1152, %v1152
    %1155 = vrot.lane.b32.xlu0 %v1153, 64
    %v1156 = vpop.permute.xlu0 %1155
    %1157 = vrot.lane.b32.xlu0 %v1154, 64
    %v1158 = vpop.permute.xlu0 %1157
    %1161 = vst.msk [vmem:[#allocation3 + $0x8] sm:$0xf] %vm858, %v1156
    %1162 = vst.msk [vmem:[#allocation3 + $0xc] sm:$0xf] %vm858, %v1158
    %v1163 = vld [vmem:[#allocation3] sm:$0xf]
    %v1164 = vld [vmem:[#allocation3 + $0x4] sm:$0xf]
    %v1165 = vld [vmem:[#allocation3 + $0x8] sm:$0xf]
    %v1166 = vld [vmem:[#allocation3 + $0xc] sm:$0xf]
    %v1167 = vld [vmem:[#allocation10] sm:$0xf]
    %v1168 = vld [vmem:[#allocation10 + $0x4] sm:$0xf]
    %v1169 = vld [vmem:[#allocation10 + $0x8] sm:$0xf]
    %v1170 = vld [vmem:[#allocation10 + $0xc] sm:$0xf]
    %v1171 = vld [vmem:[#allocation10 + $0x10] sm:$0xf]
    %v1172 = vld [vmem:[#allocation10 + $0x14] sm:$0xf]
    %v1173 = vld [vmem:[#allocation10 + $0x18] sm:$0xf]
    %v1174 = vld [vmem:[#allocation10 + $0x1c] sm:$0xf]
    %v1175 = vld [vmem:[#allocation10 + $0x20] sm:$0xf]
    %v1176 = vld [vmem:[#allocation10 + $0x24] sm:$0xf]
    %v1177 = vld [vmem:[#allocation10 + $0x28] sm:$0xf]
    %v1178 = vld [vmem:[#allocation10 + $0x2c] sm:$0xf]
    %v1179 = vld [vmem:[#allocation10 + $0x30] sm:$0xf]
    %v1180 = vld [vmem:[#allocation10 + $0x34] sm:$0xf]
    %v1181 = vld [vmem:[#allocation10 + $0x38] sm:$0xf]
    %v1182 = vld [vmem:[#allocation10 + $0x3c] sm:$0xf]
    %v1183 = vlaneseq
    %v1184 = vshrl.u32 %v1183, 7
    %v1185 = vsub.s32 4, %v1184
    %v1186 = vrot.slane %v136, %v1185
    %v1191 = vunpack.c.l.b16 %v1163
    %v1192 = vunpack.c.l.b16 %v1164
    %v1193 = vunpack.c.l.b16 %v1165
    %v1194 = vunpack.c.l.b16 %v1166
    %v1195 = vpack.c.b16 %v1192, %v1191
    %v1196 = vpack.c.b16 %v1194, %v1193
    %v1215 = vunpack.c.l.b16 %v1167
    %v1216 = vunpack.c.l.b16 %v1168
    %v1217 = vunpack.c.l.b16 %v1169
    %v1218 = vunpack.c.l.b16 %v1170
    %v1219 = vunpack.c.l.b16 %v1171
    %v1220 = vunpack.c.l.b16 %v1172
    %v1221 = vunpack.c.l.b16 %v1173
    %v1222 = vunpack.c.l.b16 %v1174
    %v1223 = vunpack.c.l.b16 %v1175
    %v1224 = vunpack.c.l.b16 %v1176
    %v1225 = vunpack.c.l.b16 %v1177
    %v1226 = vunpack.c.l.b16 %v1178
    %v1227 = vunpack.c.l.b16 %v1179
    %v1228 = vunpack.c.l.b16 %v1180
    %v1229 = vunpack.c.l.b16 %v1181
    %v1230 = vunpack.c.l.b16 %v1182
    %v1231 = vpack.c.b16 %v1216, %v1215
    %v1232 = vpack.c.b16 %v1218, %v1217
    %v1233 = vpack.c.b16 %v1220, %v1219
    %v1234 = vpack.c.b16 %v1222, %v1221
    %v1235 = vpack.c.b16 %v1224, %v1223
    %v1236 = vpack.c.b16 %v1226, %v1225
    %v1237 = vpack.c.b16 %v1228, %v1227
    %v1238 = vpack.c.b16 %v1230, %v1229
    %1247 = vmatprep.subr.bf16.mxu0 0
    %1248 = vmatpush1.bf16.msra.mxu0 %v1238
    %1249 = vmatprep.subr.bf16.mxu0 0
    %1250 = vmatpush1.bf16.msra.mxu0 %v1237
    %1251 = vmatprep.subr.bf16.mxu0 0
    %1252 = vmatpush1.bf16.msra.mxu0 %v1236
    %1253 = vmatprep.subr.bf16.mxu0 0
    %1254 = vmatpush1.bf16.msra.mxu0 %v1235
    %1255 = vmatprep.subr.bf16.mxu0 0
    %1256 = vmatpush1.bf16.msra.mxu0 %v1234
    %1257 = vmatprep.subr.bf16.mxu0 0
    %1258 = vmatpush1.bf16.msra.mxu0 %v1233
    %1259 = vmatprep.subr.bf16.mxu0 0
    %1260 = vmatpush1.bf16.msra.mxu0 %v1232
    %1261 = vmatprep.subr.bf16.mxu0 0
    %1262 = vmatpush1.bf16.msra.mxu0 %v1231
    %1263 = vmatprep.subr.bf16.mxu0 0
    %1264 = vmatpush2.bf16.msra.mxu0 0
    %1265 = vmatprep.subr.bf16.mxu0 0
    %1266 = vmatpush2.bf16.msra.mxu0 0
    %1267 = vmatprep.subr.bf16.mxu0 0
    %1268 = vmatpush2.bf16.msra.mxu0 0
    %1269 = vmatprep.subr.bf16.mxu0 0
    %1270 = vmatpush2.bf16.msra.mxu0 0
    %1271 = vmatprep.subr.bf16.mxu0 0
    %1272 = vmatpush2.bf16.msra.mxu0 0
    %1273 = vmatprep.subr.bf16.mxu0 0
    %1274 = vmatpush2.bf16.msra.mxu0 0
    %1275 = vmatprep.subr.bf16.mxu0 0
    %1276 = vmatpush2.bf16.msra.mxu0 0
    %1277 = vmatprep.subr.bf16.mxu0 0
    %1278 = vmatpush2.bf16.msra.mxu0 0
    %1279 = vmatprep.mubr.bf16.mxu0 0
    %1280 = vmatmul.mubr.bf16.gmra.mxu0 %v1195
    %v1281 = vpop.f32.mrf.mxu0
    %v1282 = vadd.f32 %v1186, %v1281
    %v1283 = vpop.f32.mrf.mxu0
    %v1284 = vpop.f32.mrf.mxu0
    %v1285 = vadd.f32 %v1186, %v1284
    %v1286 = vpop.f32.mrf.mxu0
    %1287 = vmatprep.mubr.bf16.mxu0 0
    %1288 = vmatmul.mubr.bf16.gmra.mxu0 %v1196
    %v1289 = vpop.f32.mrf.mxu0
    %v1290 = vadd.f32 %v1186, %v1289
    %v1291 = vpop.f32.mrf.mxu0
    %v1292 = vpop.f32.mrf.mxu0
    %v1293 = vadd.f32 %v1186, %v1292
    %v1294 = vpop.f32.mrf.mxu0
    %1295 = vdwg.mxu0
    %v1296 = vld [vmem:[#allocation7] sm:$0x1]
    %v1297 = vld [vmem:[#allocation7 + $0x1] sm:$0x1]
    %v1298 = vxor.u32 %v1296, 2147483648
    %v1299 = vxor.u32 %v1297, 2147483648
    %v1300 = vmul.f32 %v1298, 1.442695
    %v1301 = vpow.pop %v1300
    %v1302 = vmul.f32 %v1299, 1.442695
    %v1303 = vpow.pop %v1302
    %v1304 = vadd.f32 %v1301, 1.0
    %v1305 = vadd.f32 %v1303, 1.0
    %v1306 = vrcp.pop %v1304
    %v1307 = vmul.f32 1.0, %v1306
    %v1308 = vrcp.pop %v1305
    %v1309 = vmul.f32 1.0, %v1308
    %v1310 = vmul.f32 %v1296, %v1307
    %v1311 = vmul.f32 %v1297, %v1309
    %v1312 = vpack.c.bf16 %v1310, %v1310
    %v1313 = vpack.c.bf16 %v1311, %v1311
    %v1314 = vld [vmem:[#allocation12] sm:$0xf]
    %v1315 = vld [vmem:[#allocation12 + $0x4] sm:$0xf]
    %v1316 = vld [vmem:[#allocation12 + $0x8] sm:$0xf]
    %v1317 = vld [vmem:[#allocation12 + $0xc] sm:$0xf]
    %v1318 = vld [vmem:[#allocation12 + $0x10] sm:$0xf]
    %v1319 = vld [vmem:[#allocation12 + $0x14] sm:$0xf]
    %v1320 = vld [vmem:[#allocation12 + $0x18] sm:$0xf]
    %v1321 = vld [vmem:[#allocation12 + $0x1c] sm:$0xf]
    %v1322 = vlaneseq
    %v1323 = vshrl.u32 %v1322, 7
    %v1324 = vsub.s32 5, %v1323
    %v1325 = vrot.slane %v136, %v1324
    %v1328 = vunpack.c.l.b16 %v1312
    %v1329 = vunpack.c.l.b16 %v1313
    %v1330 = vrot.slane %v1329, 7
    %vm1331 = vcmask 1041409
    %v1332 = vsel %vm1331, %v1330, %v1328
    %v1333 = vpack.c.b16 %v1332, %v1332
    %v1342 = vunpack.c.l.b16 %v1314
    %v1343 = vunpack.c.l.b16 %v1315
    %v1344 = vunpack.c.l.b16 %v1316
    %v1345 = vunpack.c.l.b16 %v1317
    %v1346 = vunpack.c.l.b16 %v1318
    %v1347 = vunpack.c.l.b16 %v1319
    %v1348 = vunpack.c.l.b16 %v1320
    %v1349 = vunpack.c.l.b16 %v1321
    %v1350 = vpack.c.b16 %v1343, %v1342
    %v1351 = vpack.c.b16 %v1345, %v1344
    %v1352 = vpack.c.b16 %v1347, %v1346
    %v1353 = vpack.c.b16 %v1349, %v1348
    %v1359 = vsel %vm571, %v1333, 0
    %1361 = vmatprep.subr.bf16.mxu0 0
    %1362 = vmatpush1.bf16.msra.mxu0 0
    %1363 = vmatprep.subr.bf16.mxu0 0
    %1364 = vmatpush1.bf16.msra.mxu0 0
    %1365 = vmatprep.subr.bf16.mxu0 0
    %1366 = vmatpush1.bf16.msra.mxu0 0
    %1367 = vmatprep.subr.bf16.mxu0 0
    %1368 = vmatpush1.bf16.msra.mxu0 0
    %1369 = vmatprep.subr.bf16.mxu0 0
    %1370 = vmatpush1.bf16.msra.mxu0 %v1353
    %1371 = vmatprep.subr.bf16.mxu0 0
    %1372 = vmatpush1.bf16.msra.mxu0 %v1352
    %1373 = vmatprep.subr.bf16.mxu0 0
    %1374 = vmatpush1.bf16.msra.mxu0 %v1351
    %1375 = vmatprep.subr.bf16.mxu0 0
    %1376 = vmatpush1.bf16.msra.mxu0 %v1350
    %1377 = vmatprep.subr.bf16.mxu0 0
    %1378 = vmatpush2.bf16.msra.mxu0 0
    %1379 = vmatprep.subr.bf16.mxu0 0
    %1380 = vmatpush2.bf16.msra.mxu0 0
    %1381 = vmatprep.subr.bf16.mxu0 0
    %1382 = vmatpush2.bf16.msra.mxu0 0
    %1383 = vmatprep.subr.bf16.mxu0 0
    %1384 = vmatpush2.bf16.msra.mxu0 0
    %1385 = vmatprep.subr.bf16.mxu0 0
    %1386 = vmatpush2.bf16.msra.mxu0 0
    %1387 = vmatprep.subr.bf16.mxu0 0
    %1388 = vmatpush2.bf16.msra.mxu0 0
    %1389 = vmatprep.subr.bf16.mxu0 0
    %1390 = vmatpush2.bf16.msra.mxu0 0
    %1391 = vmatprep.subr.bf16.mxu0 0
    %1392 = vmatpush2.bf16.msra.mxu0 0
    %1393 = vmatprep.mubr.bf16.mxu0 0
    %1394 = vmatmul.mubr.bf16.gmra.mxu0 %v1359
    %v1395 = vpop.f32.mrf.mxu0
    %v1396 = vadd.f32 %v1325, %v1395
    %v1397 = vpop.f32.mrf.mxu0
    %v1398 = vpop.f32.mrf.mxu0
    %v1399 = vpop.f32.mrf.mxu0
    %1400 = vdwg.mxu0
    %v1403 = vunpack.c.l.s4 1966171168
    %v1404 = vunpack.c.0.s8 %v1403
    %v1405 = vlaneseq
    %v1406 = vshrl.u32 %v1405, 7
    %v1407 = vsub.s32 %v1404, %v1406
    %v1408 = vrot.slane %v1396, %v1407
    %v1409 = vcombine.high %v1408, %v1408
    %v1411 = vunpack.c.l.s4 1966171168
    %v1412 = vunpack.c.0.s8 %v1411
    %v1413 = vlaneseq
    %v1414 = vshrl.u32 %v1413, 7
    %v1415 = vsub.s32 %v1412, %v1414
    %v1416 = vrot.slane %v1408, %v1415
    %v1418 = vunpack.c.l.s4 1966171168
    %v1419 = vunpack.c.0.s8 %v1418
    %v1420 = vlaneseq
    %v1421 = vshrl.u32 %v1420, 7
    %v1422 = vsub.s32 %v1419, %v1421
    %v1423 = vrot.slane %v1409, %v1422
    %v1424 = vlaneseq
    %v1425 = vshrl.u32 %v1424, 7
    %v1426 = vsub.s32 0, %v1425
    %v1427 = vrot.slane %v1416, %v1426
    %v1428 = vlaneseq
    %v1429 = vshrl.u32 %v1428, 7
    %v1430 = vsub.s32 0, %v1429
    %v1431 = vrot.slane %v1423, %v1430
    %v1434 = vadd.f32 %v1282, %v1427
    %v1435 = vadd.f32 %v1285, %v1427
    %v1436 = vadd.f32 %v1290, %v1431
    %v1437 = vadd.f32 %v1293, %v1431
    %1438 = vadd.xlane.f32.xlu0 %v1434
    %v1439 = vpop.xlane.xlu0 %1438
    %1440 = vadd.xlane.f32.xlu0 %v1435
    %v1441 = vpop.xlane.xlu0 %1440
    %1442 = vadd.xlane.f32.xlu0 %v1436
    %v1443 = vpop.xlane.xlu0 %1442
    %1444 = vadd.xlane.f32.xlu0 %v1437
    %v1445 = vpop.xlane.xlu0 %1444
    %v1446 = vmul.f32 %v1439, %v145
    %v1447 = vmul.f32 %v1441, %v145
    %v1448 = vmul.f32 %v1443, %v145
    %v1449 = vmul.f32 %v1445, %v145
    %v1450 = vsub.f32 %v1434, %v1446
    %v1451 = vsub.f32 %v1435, %v1447
    %v1452 = vsub.f32 %v1436, %v1448
    %v1453 = vsub.f32 %v1437, %v1449
    %v1454 = vmul.f32 %v1450, %v1450
    %v1455 = vmul.f32 %v1451, %v1451
    %v1456 = vmul.f32 %v1452, %v1452
    %v1457 = vmul.f32 %v1453, %v1453
    %1458 = vadd.xlane.f32.xlu0 %v1454
    %v1459 = vpop.xlane.xlu0 %1458
    %1460 = vadd.xlane.f32.xlu0 %v1455
    %v1461 = vpop.xlane.xlu0 %1460
    %1462 = vadd.xlane.f32.xlu0 %v1456
    %v1463 = vpop.xlane.xlu0 %1462
    %1464 = vadd.xlane.f32.xlu0 %v1457
    %v1465 = vpop.xlane.xlu0 %1464
    %v1466 = vmul.f32 %v1459, %v145
    %v1467 = vmul.f32 %v1461, %v145
    %v1468 = vmul.f32 %v1463, %v145
    %v1469 = vmul.f32 %v1465, %v145
    %v1470 = vadd.f32 %v1466, 1e-05
    %v1471 = vadd.f32 %v1467, 1e-05
    %v1472 = vadd.f32 %v1468, 1e-05
    %v1473 = vadd.f32 %v1469, 1e-05
    %v1474 = vrsqrt.pop %v1470
    %v1475 = vrsqrt.pop %v1471
    %v1476 = vrsqrt.pop %v1472
    %v1477 = vrsqrt.pop %v1473
    %v1478 = vmul.f32 %v1450, %v1474
    %v1479 = vmul.f32 %v1451, %v1475
    %v1480 = vmul.f32 %v1452, %v1476
    %v1481 = vmul.f32 %v1453, %v1477
    %v1482 = vlaneseq
    %v1483 = vshrl.u32 %v1482, 7
    %v1484 = vsub.s32 2, %v1483
    %v1485 = vrot.slane %v136, %v1484
    %v1486 = vmul.f32 %v1478, %v1485
    %v1487 = vmul.f32 %v1479, %v1485
    %v1488 = vmul.f32 %v1480, %v1485
    %v1489 = vmul.f32 %v1481, %v1485
    %v1490 = vlaneseq
    %v1491 = vshrl.u32 %v1490, 7
    %v1492 = vsub.s32 3, %v1491
    %v1493 = vrot.slane %v136, %v1492
    %v1494 = vadd.f32 %v1486, %v1493
    %v1495 = vadd.f32 %v1487, %v1493
    %v1496 = vadd.f32 %v1488, %v1493
    %v1497 = vadd.f32 %v1489, %v1493
    %v1498 = vxor.u32 %v1494, 2147483648
    %v1499 = vxor.u32 %v1495, 2147483648
    %v1500 = vxor.u32 %v1496, 2147483648
    %v1501 = vxor.u32 %v1497, 2147483648
    %v1502 = vmul.f32 %v1498, 1.442695
    %v1503 = vpow.pop %v1502
    %v1504 = vmul.f32 %v1499, 1.442695
    %v1505 = vpow.pop %v1504
    %v1506 = vmul.f32 %v1500, 1.442695
    %v1507 = vpow.pop %v1506
    %v1508 = vmul.f32 %v1501, 1.442695
    %v1509 = vpow.pop %v1508
    %v1510 = vadd.f32 %v1503, 1.0
    %v1511 = vadd.f32 %v1505, 1.0
    %v1512 = vadd.f32 %v1507, 1.0
    %v1513 = vadd.f32 %v1509, 1.0
    %v1514 = vrcp.pop %v1510
    %v1515 = vmul.f32 1.0, %v1514
    %v1516 = vrcp.pop %v1511
    %v1517 = vmul.f32 1.0, %v1516
    %v1518 = vrcp.pop %v1512
    %v1519 = vmul.f32 1.0, %v1518
    %v1520 = vrcp.pop %v1513
    %v1521 = vmul.f32 1.0, %v1520
    %v1522 = vmul.f32 %v1494, %v1515
    %v1523 = vmul.f32 %v1495, %v1517
    %v1524 = vmul.f32 %v1496, %v1519
    %v1525 = vmul.f32 %v1497, %v1521
    %v1526 = vpack.c.bf16 %v1523, %v1522
    %v1527 = vpack.c.bf16 %v1525, %v1524
    %v1528 = vld [vmem:[#allocation13] sm:$0xff]
    %v1529 = vld [vmem:[#allocation13 + $0x8] sm:$0xf]
    %v1530 = vld [vmem:[#allocation13 + $0xc] sm:$0xff]
    %v1531 = vld [vmem:[#allocation13 + $0x14] sm:$0xf]
    %v1532 = vld [vmem:[#allocation13 + $0x18] sm:$0xff]
    %v1533 = vld [vmem:[#allocation13 + $0x20] sm:$0xf]
    %v1534 = vld [vmem:[#allocation13 + $0x24] sm:$0xff]
    %v1535 = vld [vmem:[#allocation13 + $0x2c] sm:$0xf]
    %v1536 = vld [vmem:[#allocation13 + $0x30] sm:$0xff]
    %v1537 = vld [vmem:[#allocation13 + $0x38] sm:$0xf]
    %v1538 = vld [vmem:[#allocation13 + $0x3c] sm:$0xff]
    %v1539 = vld [vmem:[#allocation13 + $0x44] sm:$0xf]
    %v1540 = vld [vmem:[#allocation13 + $0x48] sm:$0xff]
    %v1541 = vld [vmem:[#allocation13 + $0x50] sm:$0xf]
    %v1542 = vld [vmem:[#allocation13 + $0x54] sm:$0xff]
    %v1543 = vld [vmem:[#allocation13 + $0x5c] sm:$0xf]
    %v1544 = vld [vmem:[#allocation13 + $0x60] sm:$0xff]
    %v1545 = vld [vmem:[#allocation13 + $0x68] sm:$0xf]
    %v1546 = vld [vmem:[#allocation13 + $0x6c] sm:$0xff]
    %v1547 = vld [vmem:[#allocation13 + $0x74] sm:$0xf]
    %v1548 = vld [vmem:[#allocation13 + $0x78] sm:$0xff]
    %v1549 = vld [vmem:[#allocation13 + $0x80] sm:$0xf]
    %v1550 = vld [vmem:[#allocation13 + $0x84] sm:$0xff]
    %v1551 = vld [vmem:[#allocation13 + $0x8c] sm:$0xf]
    %v1552 = vld [vmem:[#allocation13 + $0x90] sm:$0xff]
    %v1553 = vld [vmem:[#allocation13 + $0x98] sm:$0xf]
    %v1554 = vld [vmem:[#allocation13 + $0x9c] sm:$0xff]
    %v1555 = vld [vmem:[#allocation13 + $0xa4] sm:$0xf]
    %v1556 = vld [vmem:[#allocation13 + $0xa8] sm:$0xff]
    %v1557 = vld [vmem:[#allocation13 + $0xb0] sm:$0xf]
    %v1558 = vld [vmem:[#allocation13 + $0xb4] sm:$0xff]
    %v1559 = vld [vmem:[#allocation13 + $0xbc] sm:$0xf]
    %v1560 = vld [vmem:[%s7] sm:$0x7]
    %v1562 = vlaneseq
    %v1563 = vshrl.u32 %v1562, 7
    %v1564 = vsub.s32 0, %v1563
    %v1565 = vrot.slane %v1560, %v1564
    %v1566 = vlaneseq
    %v1567 = vshrl.u32 %v1566, 7
    %v1568 = vsub.s32 1, %v1567
    %v1569 = vrot.slane %v1560, %v1568
    %v1570 = vlaneseq
    %v1571 = vshrl.u32 %v1570, 7
    %v1572 = vsub.s32 2, %v1571
    %v1573 = vrot.slane %v1560, %v1572
    %v1609 = vunpack.c.l.b16 %v1528
    %v1610 = vunpack.c.h.b16 %v1528
    %v1611 = vunpack.c.l.b16 %v1529
    %v1612 = vunpack.c.l.b16 %v1530
    %v1613 = vunpack.c.h.b16 %v1530
    %v1614 = vunpack.c.l.b16 %v1531
    %v1615 = vunpack.c.l.b16 %v1532
    %v1616 = vunpack.c.h.b16 %v1532
    %v1617 = vunpack.c.l.b16 %v1533
    %v1618 = vunpack.c.l.b16 %v1534
    %v1619 = vunpack.c.h.b16 %v1534
    %v1620 = vunpack.c.l.b16 %v1535
    %v1621 = vunpack.c.l.b16 %v1536
    %v1622 = vunpack.c.h.b16 %v1536
    %v1623 = vunpack.c.l.b16 %v1537
    %v1624 = vunpack.c.l.b16 %v1538
    %v1625 = vunpack.c.h.b16 %v1538
    %v1626 = vunpack.c.l.b16 %v1539
    %v1627 = vunpack.c.l.b16 %v1540
    %v1628 = vunpack.c.h.b16 %v1540
    %v1629 = vunpack.c.l.b16 %v1541
    %v1630 = vunpack.c.l.b16 %v1542
    %v1631 = vunpack.c.h.b16 %v1542
    %v1632 = vunpack.c.l.b16 %v1543
    %v1633 = vunpack.c.l.b16 %v1544
    %v1634 = vunpack.c.h.b16 %v1544
    %v1635 = vunpack.c.l.b16 %v1545
    %v1636 = vunpack.c.l.b16 %v1546
    %v1637 = vunpack.c.h.b16 %v1546
    %v1638 = vunpack.c.l.b16 %v1547
    %v1639 = vunpack.c.l.b16 %v1548
    %v1640 = vunpack.c.h.b16 %v1548
    %v1641 = vunpack.c.l.b16 %v1549
    %v1642 = vunpack.c.l.b16 %v1550
    %v1643 = vunpack.c.h.b16 %v1550
    %v1644 = vunpack.c.l.b16 %v1551
    %v1645 = vunpack.c.l.b16 %v1552
    %v1646 = vunpack.c.h.b16 %v1552
    %v1647 = vunpack.c.l.b16 %v1553
    %v1648 = vunpack.c.l.b16 %v1554
    %v1649 = vunpack.c.h.b16 %v1554
    %v1650 = vunpack.c.l.b16 %v1555
    %v1651 = vunpack.c.l.b16 %v1556
    %v1652 = vunpack.c.h.b16 %v1556
    %v1653 = vunpack.c.l.b16 %v1557
    %v1654 = vunpack.c.l.b16 %v1558
    %v1655 = vunpack.c.h.b16 %v1558
    %v1656 = vunpack.c.l.b16 %v1559
    %v1657 = vpack.c.b16 %v1612, %v1609
    %v1658 = vpack.c.b16 %v1613, %v1610
    %v1659 = vpack.c.b16 %v1614, %v1611
    %v1660 = vpack.c.b16 %v1618, %v1615
    %v1661 = vpack.c.b16 %v1619, %v1616
    %v1662 = vpack.c.b16 %v1620, %v1617
    %v1663 = vpack.c.b16 %v1624, %v1621
    %v1664 = vpack.c.b16 %v1625, %v1622
    %v1665 = vpack.c.b16 %v1626, %v1623
    %v1666 = vpack.c.b16 %v1630, %v1627
    %v1667 = vpack.c.b16 %v1631, %v1628
    %v1668 = vpack.c.b16 %v1632, %v1629
    %v1669 = vpack.c.b16 %v1636, %v1633
    %v1670 = vpack.c.b16 %v1637, %v1634
    %v1671 = vpack.c.b16 %v1638, %v1635
    %v1672 = vpack.c.b16 %v1642, %v1639
    %v1673 = vpack.c.b16 %v1643, %v1640
    %v1674 = vpack.c.b16 %v1644, %v1641
    %v1675 = vpack.c.b16 %v1648, %v1645
    %v1676 = vpack.c.b16 %v1649, %v1646
    %v1677 = vpack.c.b16 %v1650, %v1647
    %v1678 = vpack.c.b16 %v1654, %v1651
    %v1679 = vpack.c.b16 %v1655, %v1652
    %v1680 = vpack.c.b16 %v1656, %v1653
    %1705 = vmatprep.subr.bf16.mxu0 %v1679
    %1706 = vmatpush1.bf16.msra.mxu0 %v1678
    %1707 = vmatprep.subr.bf16.mxu0 %v1676
    %1708 = vmatpush1.bf16.msra.mxu0 %v1675
    %1709 = vmatprep.subr.bf16.mxu0 %v1673
    %1710 = vmatpush1.bf16.msra.mxu0 %v1672
    %1711 = vmatprep.subr.bf16.mxu0 %v1670
    %1712 = vmatpush1.bf16.msra.mxu0 %v1669
    %1713 = vmatprep.subr.bf16.mxu0 %v1667
    %1714 = vmatpush1.bf16.msra.mxu0 %v1666
    %1715 = vmatprep.subr.bf16.mxu0 %v1664
    %1716 = vmatpush1.bf16.msra.mxu0 %v1663
    %1717 = vmatprep.subr.bf16.mxu0 %v1661
    %1718 = vmatpush1.bf16.msra.mxu0 %v1660
    %1719 = vmatprep.subr.bf16.mxu0 %v1658
    %1720 = vmatpush1.bf16.msra.mxu0 %v1657
    %1721 = vmatprep.subr.bf16.mxu0 0
    %1722 = vmatpush2.bf16.msra.mxu0 0
    %1723 = vmatprep.subr.bf16.mxu0 0
    %1724 = vmatpush2.bf16.msra.mxu0 0
    %1725 = vmatprep.subr.bf16.mxu0 0
    %1726 = vmatpush2.bf16.msra.mxu0 0
    %1727 = vmatprep.subr.bf16.mxu0 0
    %1728 = vmatpush2.bf16.msra.mxu0 0
    %1729 = vmatprep.subr.bf16.mxu0 0
    %1730 = vmatpush2.bf16.msra.mxu0 0
    %1731 = vmatprep.subr.bf16.mxu0 0
    %1732 = vmatpush2.bf16.msra.mxu0 0
    %1733 = vmatprep.subr.bf16.mxu0 0
    %1734 = vmatpush2.bf16.msra.mxu0 0
    %1735 = vmatprep.subr.bf16.mxu0 0
    %1736 = vmatpush2.bf16.msra.mxu0 0
    %1737 = vmatprep.mubr.bf16.mxu0 0
    %1738 = vmatmul.mubr.bf16.gmra.mxu0 %v1526
    %v1739 = vpop.f32.mrf.mxu0
    %v1740 = vadd.f32 %v1565, %v1739
    %v1741 = vpop.f32.mrf.mxu0
    %v1742 = vadd.f32 %v1569, %v1741
    %v1743 = vpop.f32.mrf.mxu0
    %v1744 = vadd.f32 %v1565, %v1743
    %v1745 = vpop.f32.mrf.mxu0
    %v1746 = vadd.f32 %v1569, %v1745
    %1747 = vmatprep.mubr.bf16.mxu0 0
    %1748 = vmatmul.mubr.bf16.gmra.mxu0 %v1527
    %v1749 = vpop.f32.mrf.mxu0
    %v1750 = vadd.f32 %v1565, %v1749
    %v1751 = vpop.f32.mrf.mxu0
    %v1752 = vadd.f32 %v1569, %v1751
    %v1753 = vpop.f32.mrf.mxu0
    %v1754 = vadd.f32 %v1565, %v1753
    %v1755 = vpop.f32.mrf.mxu0
    %v1756 = vadd.f32 %v1569, %v1755
    %1757 = vdwg.mxu0
    %1758 = vmatprep.subr.bf16.mxu0 0
    %1759 = vmatpush1.bf16.msra.mxu0 %v1680
    %1760 = vmatprep.subr.bf16.mxu0 0
    %1761 = vmatpush1.bf16.msra.mxu0 %v1677
    %1762 = vmatprep.subr.bf16.mxu0 0
    %1763 = vmatpush1.bf16.msra.mxu0 %v1674
    %1764 = vmatprep.subr.bf16.mxu0 0
    %1765 = vmatpush1.bf16.msra.mxu0 %v1671
    %1766 = vmatprep.subr.bf16.mxu0 0
    %1767 = vmatpush1.bf16.msra.mxu0 %v1668
    %1768 = vmatprep.subr.bf16.mxu0 0
    %1769 = vmatpush1.bf16.msra.mxu0 %v1665
    %1770 = vmatprep.subr.bf16.mxu0 0
    %1771 = vmatpush1.bf16.msra.mxu0 %v1662
    %1772 = vmatprep.subr.bf16.mxu0 0
    %1773 = vmatpush1.bf16.msra.mxu0 %v1659
    %1774 = vmatprep.subr.bf16.mxu0 0
    %1775 = vmatpush2.bf16.msra.mxu0 0
    %1776 = vmatprep.subr.bf16.mxu0 0
    %1777 = vmatpush2.bf16.msra.mxu0 0
    %1778 = vmatprep.subr.bf16.mxu0 0
    %1779 = vmatpush2.bf16.msra.mxu0 0
    %1780 = vmatprep.subr.bf16.mxu0 0
    %1781 = vmatpush2.bf16.msra.mxu0 0
    %1782 = vmatprep.subr.bf16.mxu0 0
    %1783 = vmatpush2.bf16.msra.mxu0 0
    %1784 = vmatprep.subr.bf16.mxu0 0
    %1785 = vmatpush2.bf16.msra.mxu0 0
    %1786 = vmatprep.subr.bf16.mxu0 0
    %1787 = vmatpush2.bf16.msra.mxu0 0
    %1788 = vmatprep.subr.bf16.mxu0 0
    %1789 = vmatpush2.bf16.msra.mxu0 0
    %1790 = vmatprep.mubr.bf16.mxu0 0
    %1791 = vmatmul.mubr.bf16.gmra.mxu0 %v1526
    %v1792 = vpop.f32.mrf.mxu0
    %v1793 = vadd.f32 %v1573, %v1792
    %v1794 = vpop.f32.mrf.mxu0
    %v1795 = vpop.f32.mrf.mxu0
    %v1796 = vadd.f32 %v1573, %v1795
    %v1797 = vpop.f32.mrf.mxu0
    %1798 = vmatprep.mubr.bf16.mxu0 0
    %1799 = vmatmul.mubr.bf16.gmra.mxu0 %v1527
    %v1800 = vpop.f32.mrf.mxu0
    %v1801 = vadd.f32 %v1573, %v1800
    %v1802 = vpop.f32.mrf.mxu0
    %v1803 = vpop.f32.mrf.mxu0
    %v1804 = vadd.f32 %v1573, %v1803
    %v1805 = vpop.f32.mrf.mxu0
    %1806 = vdwg.mxu0
    %v1807 = vpack.c.bf16 %v1744, %v1740
    %v1808 = vpack.c.bf16 %v1746, %v1742
    %v1809 = vpack.c.bf16 %v1796, %v1793
    %v1810 = vpack.c.bf16 %v1754, %v1750
    %v1811 = vpack.c.bf16 %v1756, %v1752
    %v1812 = vpack.c.bf16 %v1804, %v1801
    %v1819 = vunpack.c.l.b16 %v1807
    %v1820 = vunpack.c.l.b16 %v1808
    %v1821 = vunpack.c.l.b16 %v1809
    %v1822 = vunpack.c.h.b16 %v1807
    %v1823 = vunpack.c.h.b16 %v1808
    %v1824 = vunpack.c.h.b16 %v1809
    %v1825 = vunpack.c.l.b16 %v1810
    %v1826 = vunpack.c.l.b16 %v1811
    %v1827 = vunpack.c.l.b16 %v1812
    %v1828 = vunpack.c.h.b16 %v1810
    %v1829 = vunpack.c.h.b16 %v1811
    %v1830 = vunpack.c.h.b16 %v1812
    %v1831 = vpack.c.b16 %v1820, %v1819
    %v1832 = vpack.c.b16 %v1821, %v1821
    %v1833 = vpack.c.b16 %v1823, %v1822
    %v1834 = vpack.c.b16 %v1824, %v1824
    %v1835 = vpack.c.b16 %v1826, %v1825
    %v1836 = vpack.c.b16 %v1827, %v1827
    %v1837 = vpack.c.b16 %v1829, %v1828
    %v1838 = vpack.c.b16 %v1830, %v1830
    %1847 = vst [vmem:[#allocation2] sm:$0xff] %v1831
    %1848 = vst [vmem:[#allocation2 + $0x8] sm:$0xf] %v1832
    %1849 = vst [vmem:[#allocation2 + $0xc] sm:$0xff] %v1833
    %1850 = vst [vmem:[#allocation2 + $0x14] sm:$0xf] %v1834
    %1851 = vst [vmem:[#allocation2 + $0x18] sm:$0xff] %v1835
    %1852 = vst [vmem:[#allocation2 + $0x20] sm:$0xf] %v1836
    %1853 = vst [vmem:[#allocation2 + $0x24] sm:$0xff] %v1837
    %1854 = vst [vmem:[#allocation2 + $0x2c] sm:$0xf] %v1838
    %v1855 = vld [vmem:[#allocation2] sm:$0xf]
    %v1856 = vld [vmem:[#allocation2 + $0xc] sm:$0xf]
    %v1857 = vld [vmem:[#allocation2 + $0x4] sm:$0xf]
    %v1858 = vld [vmem:[#allocation2 + $0x10] sm:$0xf]
    %v1859 = vld [vmem:[#allocation2 + $0x8] sm:$0xf]
    %v1860 = vld [vmem:[#allocation2 + $0x14] sm:$0xf]
    %v1863 = vunpack.c.l.b16 %v1855
    %v1864 = vunpack.c.l.b16 %v1856
    %v1865 = vpack.c.b16 %v1864, %v1863
    %v1868 = vunpack.c.l.b16 %v1857
    %v1869 = vunpack.c.l.b16 %v1858
    %v1870 = vpack.c.b16 %v1869, %v1868
    %v1872 = vsel %vm571, %v1865, 0
    %v1875 = vsel %vm571, %v1870, 0
    %1877 = vmatprep.subr.bf16.mxu0 0
    %1878 = vmatpush1.bf16.xpose.msra.mxu0 0
    %1879 = vmatprep.subr.bf16.mxu0 0
    %1880 = vmatpush1.bf16.xpose.msra.mxu0 0
    %1881 = vmatprep.subr.bf16.mxu0 0
    %1882 = vmatpush1.bf16.xpose.msra.mxu0 0
    %1883 = vmatprep.subr.bf16.mxu0 0
    %1884 = vmatpush1.bf16.xpose.msra.mxu0 0
    %1885 = vmatprep.subr.bf16.mxu0 0
    %1886 = vmatpush1.bf16.xpose.msra.mxu0 0
    %1887 = vmatprep.subr.bf16.mxu0 0
    %1888 = vmatpush1.bf16.xpose.msra.mxu0 0
    %1889 = vmatprep.subr.bf16.mxu0 0
    %1890 = vmatpush1.bf16.xpose.msra.mxu0 0
    %1891 = vmatprep.subr.bf16.mxu0 0
    %1892 = vmatpush1.bf16.xpose.msra.mxu0 %v1875
    %1893 = vmatprep.subr.bf16.mxu0 0
    %1894 = vmatpush2.bf16.xpose.msra.mxu0 0
    %1895 = vmatprep.subr.bf16.mxu0 0
    %1896 = vmatpush2.bf16.xpose.msra.mxu0 0
    %1897 = vmatprep.subr.bf16.mxu0 0
    %1898 = vmatpush2.bf16.xpose.msra.mxu0 0
    %1899 = vmatprep.subr.bf16.mxu0 0
    %1900 = vmatpush2.bf16.xpose.msra.mxu0 0
    %1901 = vmatprep.subr.bf16.mxu0 0
    %1902 = vmatpush2.bf16.xpose.msra.mxu0 0
    %1903 = vmatprep.subr.bf16.mxu0 0
    %1904 = vmatpush2.bf16.xpose.msra.mxu0 0
    %1905 = vmatprep.subr.bf16.mxu0 0
    %1906 = vmatpush2.bf16.xpose.msra.mxu0 0
    %1907 = vmatprep.subr.bf16.mxu0 0
    %1908 = vmatpush2.bf16.xpose.msra.mxu0 0
    %1909 = vmatprep.mubr.bf16.mxu0 0
    %1910 = vmatmul.mubr.bf16.gmra.mxu0 %v1872
    %v1911 = vpop.f32.mrf.mxu0
    %v1912 = vadd.f32 0.0, %v1911
    %v1913 = vpop.f32.mrf.mxu0
    %v1914 = vpop.f32.mrf.mxu0
    %v1915 = vadd.f32 0.0, %v1914
    %v1916 = vpop.f32.mrf.mxu0
    %1917 = vdwg.mxu0
    %v1918 = vsel %vm619, %v1912, -inf
    %1919 = vmax.xlane.f32.xlu0 %v1918
    %v1920 = vpop.xlane.xlu0 %1919
    %v1921 = vsel %vm619, %v1915, -inf
    %1922 = vmax.xlane.f32.xlu0 %v1921
    %v1923 = vpop.xlane.xlu0 %1922
    %v1924 = vsub.f32 %v1912, %v1920
    %v1925 = vsub.f32 %v1915, %v1923
    %v1926 = vmul.f32 %v1924, 1.442695
    %v1927 = vpow.pop %v1926
    %v1928 = vmul.f32 %v1925, 1.442695
    %v1929 = vpow.pop %v1928
    %v1930 = vsel %vm619, %v1927, 0.0
    %1931 = vadd.xlane.f32.xlu0 %v1930
    %v1932 = vpop.xlane.xlu0 %1931
    %v1933 = vsel %vm619, %v1929, 0.0
    %1934 = vadd.xlane.f32.xlu0 %v1933
    %v1935 = vpop.xlane.xlu0 %1934
    %v1936 = vrcp.pop %v1932
    %v1937 = vrcp.pop %v1935
    %v1938 = vmul.f32 %v1927, %v1936
    %v1939 = vmul.f32 %v1929, %v1937
    %v1940 = vpack.c.bf16 %v1939, %v1938
    %v1943 = vunpack.c.l.b16 %v1859
    %v1944 = vunpack.c.l.b16 %v1860
    %v1945 = vpack.c.b16 %v1944, %v1943
    %v1948 = vsel %vm619, %v1940, 0
    %1950 = vmatprep.subr.bf16.mxu0 0
    %1951 = vmatpush1.bf16.msra.mxu0 0
    %1952 = vmatprep.subr.bf16.mxu0 0
    %1953 = vmatpush1.bf16.msra.mxu0 0
    %1954 = vmatprep.subr.bf16.mxu0 0
    %1955 = vmatpush1.bf16.msra.mxu0 0
    %1956 = vmatprep.subr.bf16.mxu0 0
    %1957 = vmatpush1.bf16.msra.mxu0 0
    %1958 = vmatprep.subr.bf16.mxu0 0
    %1959 = vmatpush1.bf16.msra.mxu0 0
    %1960 = vmatprep.subr.bf16.mxu0 0
    %1961 = vmatpush1.bf16.msra.mxu0 0
    %1962 = vmatprep.subr.bf16.mxu0 0
    %1963 = vmatpush1.bf16.msra.mxu0 0
    %1964 = vmatprep.subr.bf16.mxu0 0
    %1965 = vmatpush1.bf16.msra.mxu0 %v1945
    %1966 = vmatprep.subr.bf16.mxu0 0
    %1967 = vmatpush2.bf16.msra.mxu0 0
    %1968 = vmatprep.subr.bf16.mxu0 0
    %1969 = vmatpush2.bf16.msra.mxu0 0
    %1970 = vmatprep.subr.bf16.mxu0 0
    %1971 = vmatpush2.bf16.msra.mxu0 0
    %1972 = vmatprep.subr.bf16.mxu0 0
    %1973 = vmatpush2.bf16.msra.mxu0 0
    %1974 = vmatprep.subr.bf16.mxu0 0
    %1975 = vmatpush2.bf16.msra.mxu0 0
    %1976 = vmatprep.subr.bf16.mxu0 0
    %1977 = vmatpush2.bf16.msra.mxu0 0
    %1978 = vmatprep.subr.bf16.mxu0 0
    %1979 = vmatpush2.bf16.msra.mxu0 0
    %1980 = vmatprep.subr.bf16.mxu0 0
    %1981 = vmatpush2.bf16.msra.mxu0 0
    %1982 = vmatprep.mubr.bf16.mxu0 0
    %1983 = vmatmul.mubr.bf16.gmra.mxu0 %v1948
    %v1984 = vpop.f32.mrf.mxu0
    %v1985 = vadd.f32 0.0, %v1984
    %v1986 = vpop.f32.mrf.mxu0
    %v1987 = vpop.f32.mrf.mxu0
    %v1988 = vadd.f32 0.0, %v1987
    %v1989 = vpop.f32.mrf.mxu0
    %1990 = vdwg.mxu0
    %v1991 = vpack.c.bf16 %v1988, %v1985
    %v1993 = vunpack.c.l.b16 %v1991
    %v1994 = vunpack.c.h.b16 %v1991
    %v1995 = vpack.c.b16 %v1993, %v1993
    %v1996 = vpack.c.b16 %v1994, %v1994
    %1999 = vst.msk [vmem:[#allocation3] sm:$0xf] %vm701, %v1995
    %2000 = vst.msk [vmem:[#allocation3 + $0x4] sm:$0xf] %vm701, %v1996
    %v2001 = vld [vmem:[#allocation2] sm:$0xf]
    %v2002 = vld [vmem:[#allocation2 + $0xc] sm:$0xf]
    %v2003 = vld [vmem:[#allocation2 + $0x4] sm:$0xf]
    %v2004 = vld [vmem:[#allocation2 + $0x10] sm:$0xf]
    %v2005 = vld [vmem:[#allocation2 + $0x8] sm:$0xf]
    %v2006 = vld [vmem:[#allocation2 + $0x14] sm:$0xf]
    %v2009 = vunpack.c.l.b16 %v2001
    %v2010 = vunpack.c.l.b16 %v2002
    %v2011 = vpack.c.b16 %v2010, %v2009
    %2012 = vrot.lane.b32.xlu0 %v2011, 64
    %v2013 = vpop.permute.xlu0 %2012
    %v2016 = vunpack.c.l.b16 %v2003
    %v2017 = vunpack.c.l.b16 %v2004
    %v2018 = vpack.c.b16 %v2017, %v2016
    %2019 = vrot.lane.b32.xlu0 %v2018, 64
    %v2020 = vpop.permute.xlu0 %2019
    %v2022 = vsel %vm571, %v2013, 0
    %v2025 = vsel %vm571, %v2020, 0
    %2027 = vmatprep.subr.bf16.mxu0 0
    %2028 = vmatpush1.bf16.xpose.msra.mxu0 0
    %2029 = vmatprep.subr.bf16.mxu0 0
    %2030 = vmatpush1.bf16.xpose.msra.mxu0 0
    %2031 = vmatprep.subr.bf16.mxu0 0
    %2032 = vmatpush1.bf16.xpose.msra.mxu0 0
    %2033 = vmatprep.subr.bf16.mxu0 0
    %2034 = vmatpush1.bf16.xpose.msra.mxu0 0
    %2035 = vmatprep.subr.bf16.mxu0 0
    %2036 = vmatpush1.bf16.xpose.msra.mxu0 0
    %2037 = vmatprep.subr.bf16.mxu0 0
    %2038 = vmatpush1.bf16.xpose.msra.mxu0 0
    %2039 = vmatprep.subr.bf16.mxu0 0
    %2040 = vmatpush1.bf16.xpose.msra.mxu0 0
    %2041 = vmatprep.subr.bf16.mxu0 0
    %2042 = vmatpush1.bf16.xpose.msra.mxu0 %v2025
    %2043 = vmatprep.subr.bf16.mxu0 0
    %2044 = vmatpush2.bf16.xpose.msra.mxu0 0
    %2045 = vmatprep.subr.bf16.mxu0 0
    %2046 = vmatpush2.bf16.xpose.msra.mxu0 0
    %2047 = vmatprep.subr.bf16.mxu0 0
    %2048 = vmatpush2.bf16.xpose.msra.mxu0 0
    %2049 = vmatprep.subr.bf16.mxu0 0
    %2050 = vmatpush2.bf16.xpose.msra.mxu0 0
    %2051 = vmatprep.subr.bf16.mxu0 0
    %2052 = vmatpush2.bf16.xpose.msra.mxu0 0
    %2053 = vmatprep.subr.bf16.mxu0 0
    %2054 = vmatpush2.bf16.xpose.msra.mxu0 0
    %2055 = vmatprep.subr.bf16.mxu0 0
    %2056 = vmatpush2.bf16.xpose.msra.mxu0 0
    %2057 = vmatprep.subr.bf16.mxu0 0
    %2058 = vmatpush2.bf16.xpose.msra.mxu0 0
    %2059 = vmatprep.mubr.bf16.mxu0 0
    %2060 = vmatmul.mubr.bf16.gmra.mxu0 %v2022
    %v2061 = vpop.f32.mrf.mxu0
    %v2062 = vadd.f32 0.0, %v2061
    %v2063 = vpop.f32.mrf.mxu0
    %v2064 = vpop.f32.mrf.mxu0
    %v2065 = vadd.f32 0.0, %v2064
    %v2066 = vpop.f32.mrf.mxu0
    %2067 = vdwg.mxu0
    %v2068 = vsel %vm619, %v2062, -inf
    %2069 = vmax.xlane.f32.xlu0 %v2068
    %v2070 = vpop.xlane.xlu0 %2069
    %v2071 = vsel %vm619, %v2065, -inf
    %2072 = vmax.xlane.f32.xlu0 %v2071
    %v2073 = vpop.xlane.xlu0 %2072
    %v2074 = vsub.f32 %v2062, %v2070
    %v2075 = vsub.f32 %v2065, %v2073
    %v2076 = vmul.f32 %v2074, 1.442695
    %v2077 = vpow.pop %v2076
    %v2078 = vmul.f32 %v2075, 1.442695
    %v2079 = vpow.pop %v2078
    %v2080 = vsel %vm619, %v2077, 0.0
    %2081 = vadd.xlane.f32.xlu0 %v2080
    %v2082 = vpop.xlane.xlu0 %2081
    %v2083 = vsel %vm619, %v2079, 0.0
    %2084 = vadd.xlane.f32.xlu0 %v2083
    %v2085 = vpop.xlane.xlu0 %2084
    %v2086 = vrcp.pop %v2082
    %v2087 = vrcp.pop %v2085
    %v2088 = vmul.f32 %v2077, %v2086
    %v2089 = vmul.f32 %v2079, %v2087
    %v2090 = vpack.c.bf16 %v2089, %v2088
    %v2093 = vunpack.c.l.b16 %v2005
    %v2094 = vunpack.c.l.b16 %v2006
    %v2095 = vpack.c.b16 %v2094, %v2093
    %2096 = vrot.lane.b32.xlu0 %v2095, 64
    %v2097 = vpop.permute.xlu0 %2096
    %v2100 = vsel %vm619, %v2090, 0
    %2102 = vmatprep.subr.bf16.mxu0 0
    %2103 = vmatpush1.bf16.msra.mxu0 0
    %2104 = vmatprep.subr.bf16.mxu0 0
    %2105 = vmatpush1.bf16.msra.mxu0 0
    %2106 = vmatprep.subr.bf16.mxu0 0
    %2107 = vmatpush1.bf16.msra.mxu0 0
    %2108 = vmatprep.subr.bf16.mxu0 0
    %2109 = vmatpush1.bf16.msra.mxu0 0
    %2110 = vmatprep.subr.bf16.mxu0 0
    %2111 = vmatpush1.bf16.msra.mxu0 0
    %2112 = vmatprep.subr.bf16.mxu0 0
    %2113 = vmatpush1.bf16.msra.mxu0 0
    %2114 = vmatprep.subr.bf16.mxu0 0
    %2115 = vmatpush1.bf16.msra.mxu0 0
    %2116 = vmatprep.subr.bf16.mxu0 0
    %2117 = vmatpush1.bf16.msra.mxu0 %v2097
    %2118 = vmatprep.subr.bf16.mxu0 0
    %2119 = vmatpush2.bf16.msra.mxu0 0
    %2120 = vmatprep.subr.bf16.mxu0 0
    %2121 = vmatpush2.bf16.msra.mxu0 0
    %2122 = vmatprep.subr.bf16.mxu0 0
    %2123 = vmatpush2.bf16.msra.mxu0 0
    %2124 = vmatprep.subr.bf16.mxu0 0
    %2125 = vmatpush2.bf16.msra.mxu0 0
    %2126 = vmatprep.subr.bf16.mxu0 0
    %2127 = vmatpush2.bf16.msra.mxu0 0
    %2128 = vmatprep.subr.bf16.mxu0 0
    %2129 = vmatpush2.bf16.msra.mxu0 0
    %2130 = vmatprep.subr.bf16.mxu0 0
    %2131 = vmatpush2.bf16.msra.mxu0 0
    %2132 = vmatprep.subr.bf16.mxu0 0
    %2133 = vmatpush2.bf16.msra.mxu0 0
    %2134 = vmatprep.mubr.bf16.mxu0 0
    %2135 = vmatmul.mubr.bf16.gmra.mxu0 %v2100
    %v2136 = vpop.f32.mrf.mxu0
    %v2137 = vadd.f32 0.0, %v2136
    %v2138 = vpop.f32.mrf.mxu0
    %v2139 = vpop.f32.mrf.mxu0
    %v2140 = vadd.f32 0.0, %v2139
    %v2141 = vpop.f32.mrf.mxu0
    %2142 = vdwg.mxu0
    %v2143 = vpack.c.bf16 %v2140, %v2137
    %v2145 = vunpack.c.l.b16 %v2143
    %v2146 = vunpack.c.h.b16 %v2143
    %v2147 = vpack.c.b16 %v2145, %v2145
    %v2148 = vpack.c.b16 %v2146, %v2146
    %2149 = vrot.lane.b32.xlu0 %v2147, 64
    %v2150 = vpop.permute.xlu0 %2149
    %2151 = vrot.lane.b32.xlu0 %v2148, 64
    %v2152 = vpop.permute.xlu0 %2151
    %2155 = vst.msk [vmem:[#allocation3] sm:$0xf] %vm858, %v2150
    %2156 = vst.msk [vmem:[#allocation3 + $0x4] sm:$0xf] %vm858, %v2152
    %v2157 = vld [vmem:[#allocation2 + $0x18] sm:$0xf]
    %v2158 = vld [vmem:[#allocation2 + $0x24] sm:$0xf]
    %v2159 = vld [vmem:[#allocation2 + $0x1c] sm:$0xf]
    %v2160 = vld [vmem:[#allocation2 + $0x28] sm:$0xf]
    %v2161 = vld [vmem:[#allocation2 + $0x20] sm:$0xf]
    %v2162 = vld [vmem:[#allocation2 + $0x2c] sm:$0xf]
    %v2165 = vunpack.c.l.b16 %v2157
    %v2166 = vunpack.c.l.b16 %v2158
    %v2167 = vpack.c.b16 %v2166, %v2165
    %v2170 = vunpack.c.l.b16 %v2159
    %v2171 = vunpack.c.l.b16 %v2160
    %v2172 = vpack.c.b16 %v2171, %v2170
    %v2174 = vsel %vm571, %v2167, 0
    %v2177 = vsel %vm571, %v2172, 0
    %2179 = vmatprep.subr.bf16.mxu0 0
    %2180 = vmatpush1.bf16.xpose.msra.mxu0 0
    %2181 = vmatprep.subr.bf16.mxu0 0
    %2182 = vmatpush1.bf16.xpose.msra.mxu0 0
    %2183 = vmatprep.subr.bf16.mxu0 0
    %2184 = vmatpush1.bf16.xpose.msra.mxu0 0
    %2185 = vmatprep.subr.bf16.mxu0 0
    %2186 = vmatpush1.bf16.xpose.msra.mxu0 0
    %2187 = vmatprep.subr.bf16.mxu0 0
    %2188 = vmatpush1.bf16.xpose.msra.mxu0 0
    %2189 = vmatprep.subr.bf16.mxu0 0
    %2190 = vmatpush1.bf16.xpose.msra.mxu0 0
    %2191 = vmatprep.subr.bf16.mxu0 0
    %2192 = vmatpush1.bf16.xpose.msra.mxu0 0
    %2193 = vmatprep.subr.bf16.mxu0 0
    %2194 = vmatpush1.bf16.xpose.msra.mxu0 %v2177
    %2195 = vmatprep.subr.bf16.mxu0 0
    %2196 = vmatpush2.bf16.xpose.msra.mxu0 0
    %2197 = vmatprep.subr.bf16.mxu0 0
    %2198 = vmatpush2.bf16.xpose.msra.mxu0 0
    %2199 = vmatprep.subr.bf16.mxu0 0
    %2200 = vmatpush2.bf16.xpose.msra.mxu0 0
    %2201 = vmatprep.subr.bf16.mxu0 0
    %2202 = vmatpush2.bf16.xpose.msra.mxu0 0
    %2203 = vmatprep.subr.bf16.mxu0 0
    %2204 = vmatpush2.bf16.xpose.msra.mxu0 0
    %2205 = vmatprep.subr.bf16.mxu0 0
    %2206 = vmatpush2.bf16.xpose.msra.mxu0 0
    %2207 = vmatprep.subr.bf16.mxu0 0
    %2208 = vmatpush2.bf16.xpose.msra.mxu0 0
    %2209 = vmatprep.subr.bf16.mxu0 0
    %2210 = vmatpush2.bf16.xpose.msra.mxu0 0
    %2211 = vmatprep.mubr.bf16.mxu0 0
    %2212 = vmatmul.mubr.bf16.gmra.mxu0 %v2174
    %v2213 = vpop.f32.mrf.mxu0
    %v2214 = vadd.f32 0.0, %v2213
    %v2215 = vpop.f32.mrf.mxu0
    %v2216 = vpop.f32.mrf.mxu0
    %v2217 = vadd.f32 0.0, %v2216
    %v2218 = vpop.f32.mrf.mxu0
    %2219 = vdwg.mxu0
    %v2220 = vsel %vm619, %v2214, -inf
    %2221 = vmax.xlane.f32.xlu0 %v2220
    %v2222 = vpop.xlane.xlu0 %2221
    %v2223 = vsel %vm619, %v2217, -inf
    %2224 = vmax.xlane.f32.xlu0 %v2223
    %v2225 = vpop.xlane.xlu0 %2224
    %v2226 = vsub.f32 %v2214, %v2222
    %v2227 = vsub.f32 %v2217, %v2225
    %v2228 = vmul.f32 %v2226, 1.442695
    %v2229 = vpow.pop %v2228
    %v2230 = vmul.f32 %v2227, 1.442695
    %v2231 = vpow.pop %v2230
    %v2232 = vsel %vm619, %v2229, 0.0
    %2233 = vadd.xlane.f32.xlu0 %v2232
    %v2234 = vpop.xlane.xlu0 %2233
    %v2235 = vsel %vm619, %v2231, 0.0
    %2236 = vadd.xlane.f32.xlu0 %v2235
    %v2237 = vpop.xlane.xlu0 %2236
    %v2238 = vrcp.pop %v2234
    %v2239 = vrcp.pop %v2237
    %v2240 = vmul.f32 %v2229, %v2238
    %v2241 = vmul.f32 %v2231, %v2239
    %v2242 = vpack.c.bf16 %v2241, %v2240
    %v2245 = vunpack.c.l.b16 %v2161
    %v2246 = vunpack.c.l.b16 %v2162
    %v2247 = vpack.c.b16 %v2246, %v2245
    %v2250 = vsel %vm619, %v2242, 0
    %2252 = vmatprep.subr.bf16.mxu0 0
    %2253 = vmatpush1.bf16.msra.mxu0 0
    %2254 = vmatprep.subr.bf16.mxu0 0
    %2255 = vmatpush1.bf16.msra.mxu0 0
    %2256 = vmatprep.subr.bf16.mxu0 0
    %2257 = vmatpush1.bf16.msra.mxu0 0
    %2258 = vmatprep.subr.bf16.mxu0 0
    %2259 = vmatpush1.bf16.msra.mxu0 0
    %2260 = vmatprep.subr.bf16.mxu0 0
    %2261 = vmatpush1.bf16.msra.mxu0 0
    %2262 = vmatprep.subr.bf16.mxu0 0
    %2263 = vmatpush1.bf16.msra.mxu0 0
    %2264 = vmatprep.subr.bf16.mxu0 0
    %2265 = vmatpush1.bf16.msra.mxu0 0
    %2266 = vmatprep.subr.bf16.mxu0 0
    %2267 = vmatpush1.bf16.msra.mxu0 %v2247
    %2268 = vmatprep.subr.bf16.mxu0 0
    %2269 = vmatpush2.bf16.msra.mxu0 0
    %2270 = vmatprep.subr.bf16.mxu0 0
    %2271 = vmatpush2.bf16.msra.mxu0 0
    %2272 = vmatprep.subr.bf16.mxu0 0
    %2273 = vmatpush2.bf16.msra.mxu0 0
    %2274 = vmatprep.subr.bf16.mxu0 0
    %2275 = vmatpush2.bf16.msra.mxu0 0
    %2276 = vmatprep.subr.bf16.mxu0 0
    %2277 = vmatpush2.bf16.msra.mxu0 0
    %2278 = vmatprep.subr.bf16.mxu0 0
    %2279 = vmatpush2.bf16.msra.mxu0 0
    %2280 = vmatprep.subr.bf16.mxu0 0
    %2281 = vmatpush2.bf16.msra.mxu0 0
    %2282 = vmatprep.subr.bf16.mxu0 0
    %2283 = vmatpush2.bf16.msra.mxu0 0
    %2284 = vmatprep.mubr.bf16.mxu0 0
    %2285 = vmatmul.mubr.bf16.gmra.mxu0 %v2250
    %v2286 = vpop.f32.mrf.mxu0
    %v2287 = vadd.f32 0.0, %v2286
    %v2288 = vpop.f32.mrf.mxu0
    %v2289 = vpop.f32.mrf.mxu0
    %v2290 = vadd.f32 0.0, %v2289
    %v2291 = vpop.f32.mrf.mxu0
    %2292 = vdwg.mxu0
    %v2293 = vpack.c.bf16 %v2290, %v2287
    %v2295 = vunpack.c.l.b16 %v2293
    %v2296 = vunpack.c.h.b16 %v2293
    %v2297 = vpack.c.b16 %v2295, %v2295
    %v2298 = vpack.c.b16 %v2296, %v2296
    %2301 = vst.msk [vmem:[#allocation3 + $0x8] sm:$0xf] %vm701, %v2297
    %2302 = vst.msk [vmem:[#allocation3 + $0xc] sm:$0xf] %vm701, %v2298
    %v2303 = vld [vmem:[#allocation2 + $0x18] sm:$0xf]
    %v2304 = vld [vmem:[#allocation2 + $0x24] sm:$0xf]
    %v2305 = vld [vmem:[#allocation2 + $0x1c] sm:$0xf]
    %v2306 = vld [vmem:[#allocation2 + $0x28] sm:$0xf]
    %v2307 = vld [vmem:[#allocation2 + $0x20] sm:$0xf]
    %v2308 = vld [vmem:[#allocation2 + $0x2c] sm:$0xf]
    %v2311 = vunpack.c.l.b16 %v2303
    %v2312 = vunpack.c.l.b16 %v2304
    %v2313 = vpack.c.b16 %v2312, %v2311
    %2314 = vrot.lane.b32.xlu0 %v2313, 64
    %v2315 = vpop.permute.xlu0 %2314
    %v2318 = vunpack.c.l.b16 %v2305
    %v2319 = vunpack.c.l.b16 %v2306
    %v2320 = vpack.c.b16 %v2319, %v2318
    %2321 = vrot.lane.b32.xlu0 %v2320, 64
    %v2322 = vpop.permute.xlu0 %2321
    %v2324 = vsel %vm571, %v2315, 0
    %v2327 = vsel %vm571, %v2322, 0
    %2329 = vmatprep.subr.bf16.mxu0 0
    %2330 = vmatpush1.bf16.xpose.msra.mxu0 0
    %2331 = vmatprep.subr.bf16.mxu0 0
    %2332 = vmatpush1.bf16.xpose.msra.mxu0 0
    %2333 = vmatprep.subr.bf16.mxu0 0
    %2334 = vmatpush1.bf16.xpose.msra.mxu0 0
    %2335 = vmatprep.subr.bf16.mxu0 0
    %2336 = vmatpush1.bf16.xpose.msra.mxu0 0
    %2337 = vmatprep.subr.bf16.mxu0 0
    %2338 = vmatpush1.bf16.xpose.msra.mxu0 0
    %2339 = vmatprep.subr.bf16.mxu0 0
    %2340 = vmatpush1.bf16.xpose.msra.mxu0 0
    %2341 = vmatprep.subr.bf16.mxu0 0
    %2342 = vmatpush1.bf16.xpose.msra.mxu0 0
    %2343 = vmatprep.subr.bf16.mxu0 0
    %2344 = vmatpush1.bf16.xpose.msra.mxu0 %v2327
    %2345 = vmatprep.subr.bf16.mxu0 0
    %2346 = vmatpush2.bf16.xpose.msra.mxu0 0
    %2347 = vmatprep.subr.bf16.mxu0 0
    %2348 = vmatpush2.bf16.xpose.msra.mxu0 0
    %2349 = vmatprep.subr.bf16.mxu0 0
    %2350 = vmatpush2.bf16.xpose.msra.mxu0 0
    %2351 = vmatprep.subr.bf16.mxu0 0
    %2352 = vmatpush2.bf16.xpose.msra.mxu0 0
    %2353 = vmatprep.subr.bf16.mxu0 0
    %2354 = vmatpush2.bf16.xpose.msra.mxu0 0
    %2355 = vmatprep.subr.bf16.mxu0 0
    %2356 = vmatpush2.bf16.xpose.msra.mxu0 0
    %2357 = vmatprep.subr.bf16.mxu0 0
    %2358 = vmatpush2.bf16.xpose.msra.mxu0 0
    %2359 = vmatprep.subr.bf16.mxu0 0
    %2360 = vmatpush2.bf16.xpose.msra.mxu0 0
    %2361 = vmatprep.mubr.bf16.mxu0 0
    %2362 = vmatmul.mubr.bf16.gmra.mxu0 %v2324
    %v2363 = vpop.f32.mrf.mxu0
    %v2364 = vadd.f32 0.0, %v2363
    %v2365 = vpop.f32.mrf.mxu0
    %v2366 = vpop.f32.mrf.mxu0
    %v2367 = vadd.f32 0.0, %v2366
    %v2368 = vpop.f32.mrf.mxu0
    %2369 = vdwg.mxu0
    %v2370 = vsel %vm619, %v2364, -inf
    %2371 = vmax.xlane.f32.xlu0 %v2370
    %v2372 = vpop.xlane.xlu0 %2371
    %v2373 = vsel %vm619, %v2367, -inf
    %2374 = vmax.xlane.f32.xlu0 %v2373
    %v2375 = vpop.xlane.xlu0 %2374
    %v2376 = vsub.f32 %v2364, %v2372
    %v2377 = vsub.f32 %v2367, %v2375
    %v2378 = vmul.f32 %v2376, 1.442695
    %v2379 = vpow.pop %v2378
    %v2380 = vmul.f32 %v2377, 1.442695
    %v2381 = vpow.pop %v2380
    %v2382 = vsel %vm619, %v2379, 0.0
    %2383 = vadd.xlane.f32.xlu0 %v2382
    %v2384 = vpop.xlane.xlu0 %2383
    %v2385 = vsel %vm619, %v2381, 0.0
    %2386 = vadd.xlane.f32.xlu0 %v2385
    %v2387 = vpop.xlane.xlu0 %2386
    %v2388 = vrcp.pop %v2384
    %v2389 = vrcp.pop %v2387
    %v2390 = vmul.f32 %v2379, %v2388
    %v2391 = vmul.f32 %v2381, %v2389
    %v2392 = vpack.c.bf16 %v2391, %v2390
    %v2395 = vunpack.c.l.b16 %v2307
    %v2396 = vunpack.c.l.b16 %v2308
    %v2397 = vpack.c.b16 %v2396, %v2395
    %2398 = vrot.lane.b32.xlu0 %v2397, 64
    %v2399 = vpop.permute.xlu0 %2398
    %v2402 = vsel %vm619, %v2392, 0
    %2404 = vmatprep.subr.bf16.mxu0 0
    %2405 = vmatpush1.bf16.msra.mxu0 0
    %2406 = vmatprep.subr.bf16.mxu0 0
    %2407 = vmatpush1.bf16.msra.mxu0 0
    %2408 = vmatprep.subr.bf16.mxu0 0
    %2409 = vmatpush1.bf16.msra.mxu0 0
    %2410 = vmatprep.subr.bf16.mxu0 0
    %2411 = vmatpush1.bf16.msra.mxu0 0
    %2412 = vmatprep.subr.bf16.mxu0 0
    %2413 = vmatpush1.bf16.msra.mxu0 0
    %2414 = vmatprep.subr.bf16.mxu0 0
    %2415 = vmatpush1.bf16.msra.mxu0 0
    %2416 = vmatprep.subr.bf16.mxu0 0
    %2417 = vmatpush1.bf16.msra.mxu0 0
    %2418 = vmatprep.subr.bf16.mxu0 0
    %2419 = vmatpush1.bf16.msra.mxu0 %v2399
    %2420 = vmatprep.subr.bf16.mxu0 0
    %2421 = vmatpush2.bf16.msra.mxu0 0
    %2422 = vmatprep.subr.bf16.mxu0 0
    %2423 = vmatpush2.bf16.msra.mxu0 0
    %2424 = vmatprep.subr.bf16.mxu0 0
    %2425 = vmatpush2.bf16.msra.mxu0 0
    %2426 = vmatprep.subr.bf16.mxu0 0
    %2427 = vmatpush2.bf16.msra.mxu0 0
    %2428 = vmatprep.subr.bf16.mxu0 0
    %2429 = vmatpush2.bf16.msra.mxu0 0
    %2430 = vmatprep.subr.bf16.mxu0 0
    %2431 = vmatpush2.bf16.msra.mxu0 0
    %2432 = vmatprep.subr.bf16.mxu0 0
    %2433 = vmatpush2.bf16.msra.mxu0 0
    %2434 = vmatprep.subr.bf16.mxu0 0
    %2435 = vmatpush2.bf16.msra.mxu0 0
    %2436 = vmatprep.mubr.bf16.mxu0 0
    %2437 = vmatmul.mubr.bf16.gmra.mxu0 %v2402
    %v2438 = vpop.f32.mrf.mxu0
    %v2439 = vadd.f32 0.0, %v2438
    %v2440 = vpop.f32.mrf.mxu0
    %v2441 = vpop.f32.mrf.mxu0
    %v2442 = vadd.f32 0.0, %v2441
    %v2443 = vpop.f32.mrf.mxu0
    %2444 = vdwg.mxu0
    %v2445 = vpack.c.bf16 %v2442, %v2439
    %v2447 = vunpack.c.l.b16 %v2445
    %v2448 = vunpack.c.h.b16 %v2445
    %v2449 = vpack.c.b16 %v2447, %v2447
    %v2450 = vpack.c.b16 %v2448, %v2448
    %2451 = vrot.lane.b32.xlu0 %v2449, 64
    %v2452 = vpop.permute.xlu0 %2451
    %2453 = vrot.lane.b32.xlu0 %v2450, 64
    %v2454 = vpop.permute.xlu0 %2453
    %2457 = vst.msk [vmem:[#allocation3 + $0x8] sm:$0xf] %vm858, %v2452
    %2458 = vst.msk [vmem:[#allocation3 + $0xc] sm:$0xf] %vm858, %v2454
    %v2459 = vld [vmem:[#allocation3] sm:$0xf]
    %v2460 = vld [vmem:[#allocation3 + $0x4] sm:$0xf]
    %v2461 = vld [vmem:[#allocation3 + $0x8] sm:$0xf]
    %v2462 = vld [vmem:[#allocation3 + $0xc] sm:$0xf]
    %v2463 = vld [vmem:[#allocation15] sm:$0xf]
    %v2464 = vld [vmem:[#allocation15 + $0x4] sm:$0xf]
    %v2465 = vld [vmem:[#allocation15 + $0x8] sm:$0xf]
    %v2466 = vld [vmem:[#allocation15 + $0xc] sm:$0xf]
    %v2467 = vld [vmem:[#allocation15 + $0x10] sm:$0xf]
    %v2468 = vld [vmem:[#allocation15 + $0x14] sm:$0xf]
    %v2469 = vld [vmem:[#allocation15 + $0x18] sm:$0xf]
    %v2470 = vld [vmem:[#allocation15 + $0x1c] sm:$0xf]
    %v2471 = vld [vmem:[#allocation15 + $0x20] sm:$0xf]
    %v2472 = vld [vmem:[#allocation15 + $0x24] sm:$0xf]
    %v2473 = vld [vmem:[#allocation15 + $0x28] sm:$0xf]
    %v2474 = vld [vmem:[#allocation15 + $0x2c] sm:$0xf]
    %v2475 = vld [vmem:[#allocation15 + $0x30] sm:$0xf]
    %v2476 = vld [vmem:[#allocation15 + $0x34] sm:$0xf]
    %v2477 = vld [vmem:[#allocation15 + $0x38] sm:$0xf]
    %v2478 = vld [vmem:[#allocation15 + $0x3c] sm:$0xf]
    %v2479 = vlaneseq
    %v2480 = vshrl.u32 %v2479, 7
    %v2481 = vsub.s32 6, %v2480
    %v2482 = vrot.slane %v136, %v2481
    %v2487 = vunpack.c.l.b16 %v2459
    %v2488 = vunpack.c.l.b16 %v2460
    %v2489 = vunpack.c.l.b16 %v2461
    %v2490 = vunpack.c.l.b16 %v2462
    %v2491 = vpack.c.b16 %v2488, %v2487
    %v2492 = vpack.c.b16 %v2490, %v2489
    %v2511 = vunpack.c.l.b16 %v2463
    %v2512 = vunpack.c.l.b16 %v2464
    %v2513 = vunpack.c.l.b16 %v2465
    %v2514 = vunpack.c.l.b16 %v2466
    %v2515 = vunpack.c.l.b16 %v2467
    %v2516 = vunpack.c.l.b16 %v2468
    %v2517 = vunpack.c.l.b16 %v2469
    %v2518 = vunpack.c.l.b16 %v2470
    %v2519 = vunpack.c.l.b16 %v2471
    %v2520 = vunpack.c.l.b16 %v2472
    %v2521 = vunpack.c.l.b16 %v2473
    %v2522 = vunpack.c.l.b16 %v2474
    %v2523 = vunpack.c.l.b16 %v2475
    %v2524 = vunpack.c.l.b16 %v2476
    %v2525 = vunpack.c.l.b16 %v2477
    %v2526 = vunpack.c.l.b16 %v2478
    %v2527 = vpack.c.b16 %v2512, %v2511
    %v2528 = vpack.c.b16 %v2514, %v2513
    %v2529 = vpack.c.b16 %v2516, %v2515
    %v2530 = vpack.c.b16 %v2518, %v2517
    %v2531 = vpack.c.b16 %v2520, %v2519
    %v2532 = vpack.c.b16 %v2522, %v2521
    %v2533 = vpack.c.b16 %v2524, %v2523
    %v2534 = vpack.c.b16 %v2526, %v2525
    %2543 = vmatprep.subr.bf16.mxu0 0
    %2544 = vmatpush1.bf16.msra.mxu0 %v2534
    %2545 = vmatprep.subr.bf16.mxu0 0
    %2546 = vmatpush1.bf16.msra.mxu0 %v2533
    %2547 = vmatprep.subr.bf16.mxu0 0
    %2548 = vmatpush1.bf16.msra.mxu0 %v2532
    %2549 = vmatprep.subr.bf16.mxu0 0
    %2550 = vmatpush1.bf16.msra.mxu0 %v2531
    %2551 = vmatprep.subr.bf16.mxu0 0
    %2552 = vmatpush1.bf16.msra.mxu0 %v2530
    %2553 = vmatprep.subr.bf16.mxu0 0
    %2554 = vmatpush1.bf16.msra.mxu0 %v2529
    %2555 = vmatprep.subr.bf16.mxu0 0
    %2556 = vmatpush1.bf16.msra.mxu0 %v2528
    %2557 = vmatprep.subr.bf16.mxu0 0
    %2558 = vmatpush1.bf16.msra.mxu0 %v2527
    %2559 = vmatprep.subr.bf16.mxu0 0
    %2560 = vmatpush2.bf16.msra.mxu0 0
    %2561 = vmatprep.subr.bf16.mxu0 0
    %2562 = vmatpush2.bf16.msra.mxu0 0
    %2563 = vmatprep.subr.bf16.mxu0 0
    %2564 = vmatpush2.bf16.msra.mxu0 0
    %2565 = vmatprep.subr.bf16.mxu0 0
    %2566 = vmatpush2.bf16.msra.mxu0 0
    %2567 = vmatprep.subr.bf16.mxu0 0
    %2568 = vmatpush2.bf16.msra.mxu0 0
    %2569 = vmatprep.subr.bf16.mxu0 0
    %2570 = vmatpush2.bf16.msra.mxu0 0
    %2571 = vmatprep.subr.bf16.mxu0 0
    %2572 = vmatpush2.bf16.msra.mxu0 0
    %2573 = vmatprep.subr.bf16.mxu0 0
    %2574 = vmatpush2.bf16.msra.mxu0 0
    %2575 = vmatprep.mubr.bf16.mxu0 0
    %2576 = vmatmul.mubr.bf16.gmra.mxu0 %v2491
    %v2577 = vpop.f32.mrf.mxu0
    %v2578 = vadd.f32 %v2482, %v2577
    %v2579 = vpop.f32.mrf.mxu0
    %v2580 = vpop.f32.mrf.mxu0
    %v2581 = vadd.f32 %v2482, %v2580
    %v2582 = vpop.f32.mrf.mxu0
    %2583 = vmatprep.mubr.bf16.mxu0 0
    %2584 = vmatmul.mubr.bf16.gmra.mxu0 %v2492
    %v2585 = vpop.f32.mrf.mxu0
    %v2586 = vadd.f32 %v2482, %v2585
    %v2587 = vpop.f32.mrf.mxu0
    %v2588 = vpop.f32.mrf.mxu0
    %v2589 = vadd.f32 %v2482, %v2588
    %v2590 = vpop.f32.mrf.mxu0
    %2591 = vdwg.mxu0
    %v2592 = vadd.f32 %v132, %v2578
    %v2593 = vadd.f32 %v133, %v2581
    %v2594 = vadd.f32 %v134, %v2586
    %v2595 = vadd.f32 %v135, %v2589
    %2596 = vst [vmem:[#allocation16] sm:$0xff] %v2592
    %2597 = vst [vmem:[#allocation16 + $0x8] sm:$0xff] %v2593
    %2598 = vst [vmem:[#allocation16 + $0x10] sm:$0xff] %v2594
    %2599 = vst [vmem:[#allocation16 + $0x18] sm:$0xff] %v2595
    // Predicated region
    $region70: #{tpu_custom_call.1} parent=1 // pred_check
      _
    $region71: #{tpu_custom_call.1} parent=1 // pred_check_branch
      %2601 = sbr.rel (0) target = $region73
    $region72: #{tpu_custom_call.1} parent=1 // pred_region
      %s2603 = ssub.s32 512, 512
      %2604 = vsyncadd [#allocation6], %s2603
      %s2605 = sshll.u32 [#allocation16], 4
      %s2606 = int_to_ptr.vmem [resolvable:$true] %s2605
      %2611 = dma.vmem_to_hbm [thread:$0]  %s2606, 512, %s10, [#allocation6], 128, 128, 8
    $region73: #{tpu_custom_call.1} parent=1 // pred_fallthru
      _
    // Predicated region
    $region74: #{tpu_custom_call.1} parent=1 // pred_check
      _
    $region75: #{tpu_custom_call.1} parent=1 // pred_check_branch
      %2613 = sbr.rel (0) target = $region77
    $region76: #{tpu_custom_call.1} parent=1 // pred_region
      %2614 = dma.done [#allocation6], 512
    $region77: #{tpu_custom_call.1} parent=1 // pred_fallthru
      _
    %2615 = vsyncpa [#allocation5], 1
    %2616 = vsyncpa [#allocation8], 1
    %2617 = vsyncpa [#allocation11], 1
    %2618 = vsyncpa [#allocation14], 1
    %2619 = vsyncpa [#allocation6], 1

</llo_original>
